<compile_context>
chip_gen: v7x
topology: tpu7x:2x2x1
jax: 0.10.0
libtpu: 0.0.40
codegen_flags: <defaults>
</compile_context>

<pallas_src>
import jax
import jax.numpy as jnp
from jax import lax
from jax.experimental import pallas as pl
from jax.experimental.pallas import tpu as pltpu


# ----------------------------------------------------------------------------- kernel


def _make_vq_kernel(use_argmin: bool):
    """Build the VQ kernel body.

    Block layout per grid step:
      z_ref   : (1, C, TS) f32   encoder-output tile (channels-first)
      ed_ref  : (K, C)     bf16  2*codebook (distance operand; x2 folded in, exact)
      esq_ref : (K, 1)     f32   precomputed ||e_k||^2
      etp_ref : (3, C, K)  bf16  exact 3-plane (hi/mid/lo) split of codebook^T
      zq_ref  : (1, C, TS) f32   quantized output tile
    """

    def kernel(z_ref, ed_ref, esq_ref, etp_ref, zq_ref):
        z = z_ref[0]                                               # (C, TS)

        # distance argmin is invariant to the per-column ||z||^2 term -> dropped.
        # the factor 2 and the bf16 cast live in ed_ref (prepared once in the wrapper).
        dots = jnp.dot(ed_ref[...], z.astype(ed_ref.dtype),
                       preferred_element_type=jnp.float32)         # (K, TS)
        dist = esq_ref[...] - dots                                  # (K, TS)

        k, ts = dist.shape
        row_ids = lax.broadcasted_iota(jnp.int32, (k, ts), 0)       # (K, TS)

        if use_argmin:
            # fused sublane arg-reduce; first-occurrence ties (matches torch.argmin)
            idx = jnp.argmin(dist, axis=0)                          # (TS,)
        else:
            # fallback: min -> masked iota -> min (first match), known to lower cleanly
            min_val = jnp.min(dist, axis=0, keepdims=True)          # (1, TS)
            idx = jnp.min(jnp.where(dist == min_val, row_ids, k), axis=0)

        # One-hot gather on the MXU. onehot is exactly 0/1 so bf16 costs nothing in
        # accuracy; e^T = p0 + p1 + p2 exactly (3 bf16 planes), and each one-hot column
        # selects a single row per matmul, so the f32-accumulated sum reconstructs the
        # f32 codebook row bit-exactly while every matmul stays on the fast bf16 path.
        onehot = (row_ids == idx[None, :]).astype(jnp.bfloat16)     # (K, TS)
        zq = jnp.dot(etp_ref[0], onehot, preferred_element_type=jnp.float32)
        zq += jnp.dot(etp_ref[1], onehot, preferred_element_type=jnp.float32)
        zq += jnp.dot(etp_ref[2], onehot, preferred_element_type=jnp.float32)
        zq_ref[0] = zq.astype(zq_ref.dtype)

    return kernel


# ----------------------------------------------------------------- one-time argmin probe


_ARGMIN_LOWERS = None


def _argmin_lowering_ok() -> bool:
    """One-time cached probe: does Mosaic lower an axis-0 jnp.argmin inside pallas_call?"""
    global _ARGMIN_LOWERS
    if _ARGMIN_LOWERS is None:
        def probe_kernel(x_ref, o_ref):
            o_ref[...] = jnp.argmin(x_ref[...], axis=0).astype(jnp.int32)[None, :]

        try:
            probe = pl.pallas_call(
                probe_kernel,
                out_shape=jax.ShapeDtypeStruct((1, 128), jnp.int32))
            jax.block_until_ready(probe(jnp.zeros((512, 128), jnp.float32)))
            _ARGMIN_LOWERS = True
        except Exception:
            # tiny one-time probe only; the real pallas_call below runs unguarded
            _ARGMIN_LOWERS = False
    return _ARGMIN_LOWERS


# ------------------------------------------------------------------------- tiling helpers


def _tile_target(batch: int, s_pad: int) -> int:
    """Per-generation spatial-tile target (lane width of the z / z_q blocks)."""
    try:
        kind = jax.devices()[0].device_kind.lower()
    except Exception:
        kind = ""
    if "v6" in kind:
        return 2048            # 128 MiB VMEM: big tiles amortize per-step overhead
    if "v7" in kind:
        # 64 MiB VMEM/TC and 2 TCs share the grid: only take the big tile when the
        # grid still has enough steps to feed both cores and keep the pipeline busy.
        return 2048 if batch * pl.cdiv(s_pad, 2048) >= 8 else 1024
    return 1024                # v5e / v5p / unknown (CPU mock): ~10-12 MiB/step, overhead-amortizing


def _pick_tile(s_pad: int, target: int) -> int:
    """Largest multiple of 128 that divides s_pad and does not exceed target."""
    n = s_pad // 128
    d = min(n, max(target // 128, 1))
    while n % d:
        d -= 1
    return 128 * d


def _split_bf16_planes(x_f32):
    """Exact 3-plane bf16 decomposition: x == p0 + p1 + p2 (24-bit mantissa <= 3 x 8 bits)."""
    p0 = x_f32.astype(jnp.bfloat16)
    r1 = x_f32 - p0.astype(jnp.float32)
    p1 = r1.astype(jnp.bfloat16)
    r2 = r1 - p1.astype(jnp.float32)
    p2 = r2.astype(jnp.bfloat16)          # residual fits in 8 mantissa bits -> exact
    return jnp.stack([p0, p1, p2])        # (3, ...)


# --------------------------------------------------------------------------------- wrapper


def vector_quantize(z_e, embedding, *, tile_s=None, bf16_dist=True):
    """VQ-VAE nearest-codebook lookup. z_e: (B, C, H, W) f32, embedding: (K, C) -> (B, C, H, W)."""
    B, C, H, W = z_e.shape
    K, Ce = embedding.shape
    assert Ce == C, "embedding_dim must equal input channel count"
    S = H * W

    # Pad the spatial axis to a multiple of 128 so every output store is an unmasked,
    # lane-dense vst (padding columns are computed and sliced off afterwards).
    s_pad = ((S + 127) // 128) * 128
    if tile_s is None:
        tile_s = _pick_tile(s_pad, _tile_target(B, s_pad))
    assert tile_s % 128 == 0 and s_pad % tile_s == 0, \
        "spatial tile must be a multiple of 128 dividing the padded H*W"

    z3 = z_e.reshape(B, C, S)                       # free channels-first reshape
    if s_pad != S:
        z3 = jnp.pad(z3, ((0, 0), (0, 0), (0, s_pad - S)))

    emb32 = embedding.astype(jnp.float32)
    # distance operand: x2 folded in (exponent-only shift -> exact), pre-cast once.
    e_dist = (2.0 * emb32).astype(jnp.bfloat16 if bf16_dist else jnp.float32)    # (K, C)
    e_sq = jnp.sum(emb32 * emb32, axis=1, keepdims=True)                          # (K, 1)
    # gather operand: exact 3-plane bf16 split of codebook^T.
    et_planes = _split_bf16_planes(emb32.T)                                       # (3, C, K)

    cost = pl.CostEstimate(
        flops=8 * B * s_pad * K * C,                 # 1 distance matmul + 3 gather matmuls
        transcendentals=0,
        bytes_accessed=(2 * B * s_pad * C * 4) + (K * C * 2) + (K * 4) + (3 * C * K * 2),
    )

    zq3 = pl.pallas_call(
        _make_vq_kernel(_argmin_lowering_ok()),
        out_shape=jax.ShapeDtypeStruct((B, C, s_pad), z_e.dtype),
        grid_spec=pltpu.PrefetchScalarGridSpec(
            num_scalar_prefetch=0,
            grid=(B, s_pad // tile_s),
            in_specs=[
                pl.BlockSpec((1, C, tile_s), lambda b, s: (b, 0, s)),   # z tile
                # Constant-index codebook operands: the pipeline's revisit optimization
                # skips re-DMA; double-buffered copies cost well under 1 MiB of VMEM.
                pl.BlockSpec((K, C), lambda b, s: (0, 0)),              # 2*e (bf16)
                pl.BlockSpec((K, 1), lambda b, s: (0, 0)),              # ||e||^2
                pl.BlockSpec((3, C, K), lambda b, s: (0, 0, 0)),        # e^T hi/mid/lo planes
            ],
            out_specs=pl.BlockSpec((1, C, tile_s), lambda b, s: (b, 0, s)),
        ),
        compiler_params=pltpu.CompilerParams(
            dimension_semantics=("parallel", "parallel"),
            vmem_limit_bytes=48 * 1024 * 1024),      # ~20 MiB used at TS=2048; safe on 64 MiB v7x
        cost_estimate=cost,
    )(z3, e_dist, e_sq, et_planes)

    if s_pad != S:
        zq3 = zq3[:, :, :S]
    return zq3.reshape(B, C, H, W)


def vector_quantize_ref(z_e, embedding):
    """Pure-JAX reference matching the PyTorch forward (exact f32 distances)."""
    B, C, H, W = z_e.shape
    z_flat = jnp.transpose(z_e, (0, 2, 3, 1)).reshape(-1, C)
    dist = jnp.linalg.norm(z_flat[:, None, :] - embedding[None, :, :], axis=-1)
    idx = jnp.argmin(dist, axis=1)
    zq = embedding[idx]
    return jnp.transpose(zq.reshape(B, H, W, C), (0, 3, 1, 2))


if __name__ == "__main__":
    # Module hyper-parameters from the PyTorch spec (EMA buffers are training-only state).
    num_embeddings = 512
    embedding_dim = 128

    key = jax.random.PRNGKey(0)
    k_emb, k_in = jax.random.split(key)
    embedding = jax.random.normal(k_emb, (num_embeddings, embedding_dim), dtype=jnp.float32)

    B, C, H, W = 2, embedding_dim, 8, 8
    z_e = jax.random.normal(k_in, (B, C, H, W), dtype=jnp.float32)

    z_q = jax.block_until_ready(vector_quantize(z_e, embedding))
    assert z_q.shape == (B, C, H, W)

    # --- correctness checks -----------------------------------------------------------
    # bf16 distances can legitimately flip *near-ties* vs. the f32 reference, so check:
    # (a) every output column is an exact f32 codebook row (gather path is exact),
    # (b) the selected code is (near-)nearest in exact f32 distance,
    # (c) the overwhelming majority of positions match the exact f32 reference bit-for-bit.
    z_q_ref = vector_quantize_ref(z_e, embedding)
    zf = jnp.transpose(z_e, (0, 2, 3, 1)).reshape(-1, C)
    qf = jnp.transpose(z_q, (0, 2, 3, 1)).reshape(-1, C)

    is_code_row = jnp.any(jnp.all(qf[:, None, :] == embedding[None, :, :], axis=-1), axis=-1)
    assert bool(jnp.all(is_code_row)), "output columns are not exact codebook rows"

    d_all = jnp.sum((zf[:, None, :] - embedding[None, :, :]) ** 2, axis=-1)
    d_opt = jnp.min(d_all, axis=-1)
    d_sel = jnp.sum((zf - qf) ** 2, axis=-1)
    assert bool(jnp.all(d_sel <= d_opt + 1e-2 * (1.0 + d_opt))), "selected code is not (near-)nearest"

    match_frac = float(jnp.mean(jnp.all(z_q == z_q_ref, axis=1).astype(jnp.float32)))
    assert match_frac >= 0.9, f"only {match_frac:.3f} of positions match the f32 reference"

    print("KERNEL_OK")
</pallas_src>

<mosaic_0001>
module attributes {stable_mosaic.version = 11 : i64} {
  func.func @probe_kernel(%arg0: memref<512x128xf32, #tpu.memory_space<vmem>>, %arg1: memref<1x128xi32, #tpu.memory_space<vmem>>) attributes {dimension_semantics = [], scalar_prefetch = 0 : i64, scratch_operands = 0 : i64, tpu.core_type = #tpu.core_type<tc>} {
    %c0 = arith.constant 0 : index
    %c0_0 = arith.constant 0 : index
    %0 = vector.load %arg0[%c0, %c0_0] : memref<512x128xf32, #tpu.memory_space<vmem>>, vector<512x128xf32>
    %1 = tpu.reduce_index %0 {axis = 0 : i32, kind = #tpu.reduction_kind<arg_min>} : vector<512x128xf32> -> vector<128xi32>
    %2 = vector.shape_cast %1 : vector<128xi32> to vector<1x128xi32>
    %c0_1 = arith.constant 0 : index
    %c0_2 = arith.constant 0 : index
    %3 = vector.load %arg1[%c0_1, %c0_2] : memref<1x128xi32, #tpu.memory_space<vmem>>, vector<1x128xi32>
    tpu.vector_store %arg1[%c0_1, %c0_2], %2 {strides = array<i32>} : memref<1x128xi32, #tpu.memory_space<vmem>>, vector<1x128xi32>,
    return
  }
}

module attributes {stable_mosaic.version = 11 : i64} {
  func.func @kernel(%arg0: i32, %arg1: i32, %arg2: memref<1x128x128xf32, #tpu.memory_space<vmem>>, %arg3: memref<512x128xbf16, #tpu.memory_space<vmem>>, %arg4: memref<512x1xf32, #tpu.memory_space<vmem>>, %arg5: memref<3x128x512xbf16, #tpu.memory_space<vmem>>, %arg6: memref<1x128x128xf32, #tpu.memory_space<vmem>>) attributes {dimension_semantics = [#tpu.dimension_semantics<parallel>, #tpu.dimension_semantics<parallel>], iteration_bounds = array<i64: 2, 1>, scalar_prefetch = 0 : i64, scratch_operands = 0 : i64, tpu.core_type = #tpu.core_type<tc>, window_params = [{transform_indices = @transform_0, window_bounds = array<i64: 1, 128, 128>}, {pipeline_mode = #tpu.pipeline_mode<synchronous>, transform_indices = @transform_1, window_bounds = array<i64: 512, 128>}, {pipeline_mode = #tpu.pipeline_mode<synchronous>, transform_indices = @transform_2, window_bounds = array<i64: 512, 1>}, {pipeline_mode = #tpu.pipeline_mode<synchronous>, transform_indices = @transform_3, window_bounds = array<i64: 3, 128, 512>}, {transform_indices = @transform_4, window_bounds = array<i64: 1, 128, 128>}]} {
    %c0 = arith.constant 0 : index
    %c0_0 = arith.constant 0 : index
    %c0_1 = arith.constant 0 : index
    %0 = vector.load %arg2[%c0, %c0_0, %c0_1] : memref<1x128x128xf32, #tpu.memory_space<vmem>>, vector<1x128x128xf32>
    %1 = vector.shape_cast %0 : vector<1x128x128xf32> to vector<128x128xf32>
    %c0_2 = arith.constant 0 : index
    %c0_3 = arith.constant 0 : index
    %2 = vector.load %arg3[%c0_2, %c0_3] : memref<512x128xbf16, #tpu.memory_space<vmem>>, vector<512x128xbf16>
    %3 = arith.truncf %1 : vector<128x128xf32> to vector<128x128xbf16>
    %cst = arith.constant dense<0.000000e+00> : vector<512x128xf32>
    %4 = tpu.matmul %2, %3, %cst {dimension_numbers = #tpu.dot_dimension_numbers<[1], [0], [0], [1], [0, 0, 1, 1], [], []>} : vector<512x128xbf16>, vector<128x128xbf16>, vector<512x128xf32> -> vector<512x128xf32>
    %c0_4 = arith.constant 0 : index
    %c0_5 = arith.constant 0 : index
    %5 = vector.load %arg4[%c0_4, %c0_5] : memref<512x1xf32, #tpu.memory_space<vmem>>, vector<512x1xf32>
    %6 = vector.broadcast %5 : vector<512x1xf32> to vector<512x128xf32>
    %7 = arith.subf %6, %4 : vector<512x128xf32>
    %8 = tpu.iota {dimensions = array<i32: 0>} : vector<512x128xi32>
    %cst_6 = arith.constant dense<0x7F800000> : vector<128xf32>
    %9 = vector.multi_reduction <minimumf>, %7, %cst_6 [0] : vector<512x128xf32> to vector<128xf32>
    %10 = vector.shape_cast %9 : vector<128xf32> to vector<1x128xf32>
    %11 = vector.broadcast %10 : vector<1x128xf32> to vector<512x128xf32>
    %12 = arith.cmpf oeq, %7, %11 : vector<512x128xf32>
    %c512_i32 = arith.constant 512 : i32
    %13 = vector.broadcast %c512_i32 : i32 to vector<512x128xi32>
    %14 = arith.select %12, %8, %13 : vector<512x128xi1>, vector<512x128xi32>
    %cst_7 = arith.constant dense<2147483647> : vector<128xi32>
    %15 = vector.multi_reduction <minsi>, %14, %cst_7 [0] : vector<512x128xi32> to vector<128xi32>
    %16 = vector.shape_cast %15 : vector<128xi32> to vector<1x128xi32>
    %17 = vector.broadcast %16 : vector<1x128xi32> to vector<512x128xi32>
    %18 = arith.cmpi eq, %8, %17 : vector<512x128xi32>
    %19 = arith.extui %18 : vector<512x128xi1> to vector<512x128xi32>
    %20 = arith.sitofp %19 : vector<512x128xi32> to vector<512x128xf32>
    %21 = arith.truncf %20 : vector<512x128xf32> to vector<512x128xbf16>
    %c0_8 = arith.constant 0 : index
    %c0_9 = arith.constant 0 : index
    %c0_10 = arith.constant 0 : index
    %22 = vector.load %arg5[%c0_8, %c0_9, %c0_10] : memref<3x128x512xbf16, #tpu.memory_space<vmem>>, vector<1x128x512xbf16>
    %23 = vector.shape_cast %22 : vector<1x128x512xbf16> to vector<128x512xbf16>
    %cst_11 = arith.constant dense<0.000000e+00> : vector<128x128xf32>
    %24 = tpu.matmul %23, %21, %cst_11 {dimension_numbers = #tpu.dot_dimension_numbers<[1], [0], [0], [1], [0, 0, 1, 1], [], []>} : vector<128x512xbf16>, vector<512x128xbf16>, vector<128x128xf32> -> vector<128x128xf32>
    %c1 = arith.constant 1 : index
    %c0_12 = arith.constant 0 : index
    %c0_13 = arith.constant 0 : index
    %25 = vector.load %arg5[%c1, %c0_12, %c0_13] : memref<3x128x512xbf16, #tpu.memory_space<vmem>>, vector<1x128x512xbf16>
    %26 = vector.shape_cast %25 : vector<1x128x512xbf16> to vector<128x512xbf16>
    %cst_14 = arith.constant dense<0.000000e+00> : vector<128x128xf32>
    %27 = tpu.matmul %26, %21, %cst_14 {dimension_numbers = #tpu.dot_dimension_numbers<[1], [0], [0], [1], [0, 0, 1, 1], [], []>} : vector<128x512xbf16>, vector<512x128xbf16>, vector<128x128xf32> -> vector<128x128xf32>
    %28 = arith.addf %24, %27 : vector<128x128xf32>
    %c2 = arith.constant 2 : index
    %c0_15 = arith.constant 0 : index
    %c0_16 = arith.constant 0 : index
    %29 = vector.load %arg5[%c2, %c0_15, %c0_16] : memref<3x128x512xbf16, #tpu.memory_space<vmem>>, vector<1x128x512xbf16>
    %30 = vector.shape_cast %29 : vector<1x128x512xbf16> to vector<128x512xbf16>
    %cst_17 = arith.constant dense<0.000000e+00> : vector<128x128xf32>
    %31 = tpu.matmul %30, %21, %cst_17 {dimension_numbers = #tpu.dot_dimension_numbers<[1], [0], [0], [1], [0, 0, 1, 1], [], []>} : vector<128x512xbf16>, vector<512x128xbf16>, vector<128x128xf32> -> vector<128x128xf32>
    %32 = arith.addf %28, %31 : vector<128x128xf32>
    %c0_18 = arith.constant 0 : index
    %c0_19 = arith.constant 0 : index
    %c0_20 = arith.constant 0 : index
    %33 = vector.load %arg6[%c0_18, %c0_19, %c0_20] : memref<1x128x128xf32, #tpu.memory_space<vmem>>, vector<1x128x128xf32>
    %34 = vector.shape_cast %33 : vector<1x128x128xf32> to vector<128x128xf32>
    %35 = vector.shape_cast %32 : vector<128x128xf32> to vector<1x128x128xf32>
    tpu.vector_store %arg6[%c0_18, %c0_19, %c0_20], %35 {strides = array<i32>} : memref<1x128x128xf32, #tpu.memory_space<vmem>>, vector<1x128x128xf32>,
    return
  }
  func.func @transform_0(%arg0: i32, %arg1: i32) -> (i32, i32, i32) {
    %c0_i32 = arith.constant 0 : i32
    %c0_i32_0 = arith.constant 0 : i32
    return %arg0, %c0_i32, %arg1 : i32, i32, i32
  }
  func.func @transform_1(%arg0: i32, %arg1: i32) -> (i32, i32) {
    %c0_i32 = arith.constant 0 : i32
    %c0_i32_0 = arith.constant 0 : i32
    %c0_i32_1 = arith.constant 0 : i32
    return %c0_i32, %c0_i32_0 : i32, i32
  }
  func.func @transform_2(%arg0: i32, %arg1: i32) -> (i32, i32) {
    %c0_i32 = arith.constant 0 : i32
    %c0_i32_0 = arith.constant 0 : i32
    %c0_i32_1 = arith.constant 0 : i32
    return %c0_i32, %c0_i32_0 : i32, i32
  }
  func.func @transform_3(%arg0: i32, %arg1: i32) -> (i32, i32, i32) {
    %c0_i32 = arith.constant 0 : i32
    %c0_i32_0 = arith.constant 0 : i32
    %c0_i32_1 = arith.constant 0 : i32
    %c0_i32_2 = arith.constant 0 : i32
    return %c0_i32, %c0_i32_0, %c0_i32_1 : i32, i32, i32
  }
  func.func @transform_4(%arg0: i32, %arg1: i32) -> (i32, i32, i32) {
    %c0_i32 = arith.constant 0 : i32
    %c0_i32_0 = arith.constant 0 : i32
    return %arg0, %c0_i32, %arg1 : i32, i32, i32
  }
}

</mosaic_0001>

<llo_original>
// kernel: tpu_custom_call.1
$region0: #{tpu_custom_call.1}
  #allocation0 [shape = 'u32[]', space=smem, size = 0x4, offset = 0x4, fixed_abs, tag = 'smem constant byte address 0x4 - core index']
  #allocation1 [shape = 'u32[144,128]{1,0:T(1,128)}', space=vmem, size = 0x12000, scoped, tag = 'internal scratch']
  %s0 = inlined_call_operand.hbm [shape: f32[512,128], index: 0, kind: input, shape index: {}]
  %s1 = inlined_call_operand.hbm [shape: s32[1,128], index: 1, kind: output, shape index: {}]
  %s2 = sld [smem:[#allocation0]]
  $region18: #{tpu_custom_call.1} parent=0
    _
  %s4 = ssub.s32 1, %s2
  %s5 = scalar_select 0, %s4, %s2
  $region1: #{tpu_custom_call.1} parent=0
    #allocation2 [shape = 'u8[262144]{0}', space=vmem, size = 0x40000, scoped, tag = 'input window, operand 0, single buffered']
    #allocation3 [shape = 's32[1]{0}', space=sflag, size = 0x4, scoped, tag = 'scoped memory for tpu_custom_call.1']
    #allocation4 [shape = 's32[1]{0}', space=sflag, size = 0x4, scoped, tag = 'scoped memory for tpu_custom_call.1']
    #allocation5 [shape = 'u8[512]{0}', space=vmem, size = 0x400, scoped, tag = 'output window, operand 0, single buffered']
    %6 = vsyncpa [#allocation3], 0
    %7 = vsyncpa [#allocation4], 0
    // Predicated region
    $region2: #{tpu_custom_call.1} parent=1 // pred_check
      _
    $region3: #{tpu_custom_call.1} parent=1 // pred_check_branch
      %9 = sbr.rel (0) target = $region5
    $region4: #{tpu_custom_call.1} parent=1 // pred_region
      %s11 = ssub.s32 8192, 8192
      %12 = vsyncadd [#allocation3], %s11
      %s13 = sshll.u32 [#allocation2], 4
      %s14 = int_to_ptr.vmem [resolvable:$true] %s13
      %19 = dma.hbm_to_vmem [thread:$0]  %s0, 8192, %s14, [#allocation3], 128, 128, 8
    $region5: #{tpu_custom_call.1} parent=1 // pred_fallthru
      _
    // Predicated region
    $region6: #{tpu_custom_call.1} parent=1 // pred_check
      _
    $region7: #{tpu_custom_call.1} parent=1 // pred_check_branch
      %21 = sbr.rel (0) target = $region9
    $region8: #{tpu_custom_call.1} parent=1 // pred_region
      %22 = dma.done [#allocation3], 8192
    $region9: #{tpu_custom_call.1} parent=1 // pred_fallthru
      _
    %v23 = vld [vmem:[#allocation2] sm:$0xff]
    %v24 = vld [vmem:[#allocation2 + $0x8] sm:$0xff]
    %v25 = vld [vmem:[#allocation2 + $0x10] sm:$0xff]
    %v26 = vld [vmem:[#allocation2 + $0x18] sm:$0xff]
    %v27 = vld [vmem:[#allocation2 + $0x20] sm:$0xff]
    %v28 = vld [vmem:[#allocation2 + $0x28] sm:$0xff]
    %v29 = vld [vmem:[#allocation2 + $0x30] sm:$0xff]
    %v30 = vld [vmem:[#allocation2 + $0x38] sm:$0xff]
    %v31 = vld [vmem:[#allocation2 + $0x40] sm:$0xff]
    %v32 = vld [vmem:[#allocation2 + $0x48] sm:$0xff]
    %v33 = vld [vmem:[#allocation2 + $0x50] sm:$0xff]
    %v34 = vld [vmem:[#allocation2 + $0x58] sm:$0xff]
    %v35 = vld [vmem:[#allocation2 + $0x60] sm:$0xff]
    %v36 = vld [vmem:[#allocation2 + $0x68] sm:$0xff]
    %v37 = vld [vmem:[#allocation2 + $0x70] sm:$0xff]
    %v38 = vld [vmem:[#allocation2 + $0x78] sm:$0xff]
    %v39 = vld [vmem:[#allocation2 + $0x80] sm:$0xff]
    %v40 = vld [vmem:[#allocation2 + $0x88] sm:$0xff]
    %v41 = vld [vmem:[#allocation2 + $0x90] sm:$0xff]
    %v42 = vld [vmem:[#allocation2 + $0x98] sm:$0xff]
    %v43 = vld [vmem:[#allocation2 + $0xa0] sm:$0xff]
    %v44 = vld [vmem:[#allocation2 + $0xa8] sm:$0xff]
    %v45 = vld [vmem:[#allocation2 + $0xb0] sm:$0xff]
    %v46 = vld [vmem:[#allocation2 + $0xb8] sm:$0xff]
    %v47 = vld [vmem:[#allocation2 + $0xc0] sm:$0xff]
    %v48 = vld [vmem:[#allocation2 + $0xc8] sm:$0xff]
    %v49 = vld [vmem:[#allocation2 + $0xd0] sm:$0xff]
    %v50 = vld [vmem:[#allocation2 + $0xd8] sm:$0xff]
    %v51 = vld [vmem:[#allocation2 + $0xe0] sm:$0xff]
    %v52 = vld [vmem:[#allocation2 + $0xe8] sm:$0xff]
    %v53 = vld [vmem:[#allocation2 + $0xf0] sm:$0xff]
    %v54 = vld [vmem:[#allocation2 + $0xf8] sm:$0xff]
    %v55 = vld [vmem:[#allocation2 + $0x100] sm:$0xff]
    %v56 = vld [vmem:[#allocation2 + $0x108] sm:$0xff]
    %v57 = vld [vmem:[#allocation2 + $0x110] sm:$0xff]
    %v58 = vld [vmem:[#allocation2 + $0x118] sm:$0xff]
    %v59 = vld [vmem:[#allocation2 + $0x120] sm:$0xff]
    %v60 = vld [vmem:[#allocation2 + $0x128] sm:$0xff]
    %v61 = vld [vmem:[#allocation2 + $0x130] sm:$0xff]
    %v62 = vld [vmem:[#allocation2 + $0x138] sm:$0xff]
    %v63 = vld [vmem:[#allocation2 + $0x140] sm:$0xff]
    %v64 = vld [vmem:[#allocation2 + $0x148] sm:$0xff]
    %v65 = vld [vmem:[#allocation2 + $0x150] sm:$0xff]
    %v66 = vld [vmem:[#allocation2 + $0x158] sm:$0xff]
    %v67 = vld [vmem:[#allocation2 + $0x160] sm:$0xff]
    %v68 = vld [vmem:[#allocation2 + $0x168] sm:$0xff]
    %v69 = vld [vmem:[#allocation2 + $0x170] sm:$0xff]
    %v70 = vld [vmem:[#allocation2 + $0x178] sm:$0xff]
    %v71 = vld [vmem:[#allocation2 + $0x180] sm:$0xff]
    %v72 = vld [vmem:[#allocation2 + $0x188] sm:$0xff]
    %v73 = vld [vmem:[#allocation2 + $0x190] sm:$0xff]
    %v74 = vld [vmem:[#allocation2 + $0x198] sm:$0xff]
    %v75 = vld [vmem:[#allocation2 + $0x1a0] sm:$0xff]
    %v76 = vld [vmem:[#allocation2 + $0x1a8] sm:$0xff]
    %v77 = vld [vmem:[#allocation2 + $0x1b0] sm:$0xff]
    %v78 = vld [vmem:[#allocation2 + $0x1b8] sm:$0xff]
    %v79 = vld [vmem:[#allocation2 + $0x1c0] sm:$0xff]
    %v80 = vld [vmem:[#allocation2 + $0x1c8] sm:$0xff]
    %v81 = vld [vmem:[#allocation2 + $0x1d0] sm:$0xff]
    %v82 = vld [vmem:[#allocation2 + $0x1d8] sm:$0xff]
    %v83 = vld [vmem:[#allocation2 + $0x1e0] sm:$0xff]
    %v84 = vld [vmem:[#allocation2 + $0x1e8] sm:$0xff]
    %v85 = vld [vmem:[#allocation2 + $0x1f0] sm:$0xff]
    %v86 = vld [vmem:[#allocation2 + $0x1f8] sm:$0xff]
    %v87 = vlaneseq
    %v88 = vshrl.u32 %v87, 7
    %v89 = vadd.s32 %v88, 8
    %vm90 = vcmp.le.f32.partialorder %v23, %v24
    %v91 = vsel %vm90, %v23, %v24
    %v92 = vsel %vm90, %v88, %v89
    %v93 = vadd.s32 %v88, 16
    %vm94 = vcmp.le.f32.partialorder %v91, %v25
    %v95 = vsel %vm94, %v91, %v25
    %v96 = vsel %vm94, %v92, %v93
    %v97 = vadd.s32 %v88, 24
    %vm98 = vcmp.le.f32.partialorder %v95, %v26
    %v99 = vsel %vm98, %v95, %v26
    %v100 = vsel %vm98, %v96, %v97
    %v101 = vadd.s32 %v88, 32
    %vm102 = vcmp.le.f32.partialorder %v99, %v27
    %v103 = vsel %vm102, %v99, %v27
    %v104 = vsel %vm102, %v100, %v101
    %v105 = vadd.s32 %v88, 40
    %vm106 = vcmp.le.f32.partialorder %v103, %v28
    %v107 = vsel %vm106, %v103, %v28
    %v108 = vsel %vm106, %v104, %v105
    %v109 = vadd.s32 %v88, 48
    %vm110 = vcmp.le.f32.partialorder %v107, %v29
    %v111 = vsel %vm110, %v107, %v29
    %v112 = vsel %vm110, %v108, %v109
    %v113 = vadd.s32 %v88, 56
    %vm114 = vcmp.le.f32.partialorder %v111, %v30
    %v115 = vsel %vm114, %v111, %v30
    %v116 = vsel %vm114, %v112, %v113
    %v117 = vadd.s32 %v88, 64
    %vm118 = vcmp.le.f32.partialorder %v115, %v31
    %v119 = vsel %vm118, %v115, %v31
    %v120 = vsel %vm118, %v116, %v117
    %v121 = vadd.s32 %v88, 72
    %vm122 = vcmp.le.f32.partialorder %v119, %v32
    %v123 = vsel %vm122, %v119, %v32
    %v124 = vsel %vm122, %v120, %v121
    %v125 = vadd.s32 %v88, 80
    %vm126 = vcmp.le.f32.partialorder %v123, %v33
    %v127 = vsel %vm126, %v123, %v33
    %v128 = vsel %vm126, %v124, %v125
    %v129 = vadd.s32 %v88, 88
    %vm130 = vcmp.le.f32.partialorder %v127, %v34
    %v131 = vsel %vm130, %v127, %v34
    %v132 = vsel %vm130, %v128, %v129
    %v133 = vadd.s32 %v88, 96
    %vm134 = vcmp.le.f32.partialorder %v131, %v35
    %v135 = vsel %vm134, %v131, %v35
    %v136 = vsel %vm134, %v132, %v133
    %v137 = vadd.s32 %v88, 104
    %vm138 = vcmp.le.f32.partialorder %v135, %v36
    %v139 = vsel %vm138, %v135, %v36
    %v140 = vsel %vm138, %v136, %v137
    %v141 = vadd.s32 %v88, 112
    %vm142 = vcmp.le.f32.partialorder %v139, %v37
    %v143 = vsel %vm142, %v139, %v37
    %v144 = vsel %vm142, %v140, %v141
    %v145 = vadd.s32 %v88, 120
    %vm146 = vcmp.le.f32.partialorder %v143, %v38
    %v147 = vsel %vm146, %v143, %v38
    %v148 = vsel %vm146, %v144, %v145
    %v149 = vadd.s32 %v88, 128
    %vm150 = vcmp.le.f32.partialorder %v147, %v39
    %v151 = vsel %vm150, %v147, %v39
    %v152 = vsel %vm150, %v148, %v149
    %v153 = vadd.s32 %v88, 136
    %vm154 = vcmp.le.f32.partialorder %v151, %v40
    %v155 = vsel %vm154, %v151, %v40
    %v156 = vsel %vm154, %v152, %v153
    %v157 = vadd.s32 %v88, 144
    %vm158 = vcmp.le.f32.partialorder %v155, %v41
    %v159 = vsel %vm158, %v155, %v41
    %v160 = vsel %vm158, %v156, %v157
    %v161 = vadd.s32 %v88, 152
    %vm162 = vcmp.le.f32.partialorder %v159, %v42
    %v163 = vsel %vm162, %v159, %v42
    %v164 = vsel %vm162, %v160, %v161
    %v165 = vadd.s32 %v88, 160
    %vm166 = vcmp.le.f32.partialorder %v163, %v43
    %v167 = vsel %vm166, %v163, %v43
    %v168 = vsel %vm166, %v164, %v165
    %v169 = vadd.s32 %v88, 168
    %vm170 = vcmp.le.f32.partialorder %v167, %v44
    %v171 = vsel %vm170, %v167, %v44
    %v172 = vsel %vm170, %v168, %v169
    %v173 = vadd.s32 %v88, 176
    %vm174 = vcmp.le.f32.partialorder %v171, %v45
    %v175 = vsel %vm174, %v171, %v45
    %v176 = vsel %vm174, %v172, %v173
    %v177 = vadd.s32 %v88, 184
    %vm178 = vcmp.le.f32.partialorder %v175, %v46
    %v179 = vsel %vm178, %v175, %v46
    %v180 = vsel %vm178, %v176, %v177
    %v181 = vadd.s32 %v88, 192
    %vm182 = vcmp.le.f32.partialorder %v179, %v47
    %v183 = vsel %vm182, %v179, %v47
    %v184 = vsel %vm182, %v180, %v181
    %v185 = vadd.s32 %v88, 200
    %vm186 = vcmp.le.f32.partialorder %v183, %v48
    %v187 = vsel %vm186, %v183, %v48
    %v188 = vsel %vm186, %v184, %v185
    %v189 = vadd.s32 %v88, 208
    %vm190 = vcmp.le.f32.partialorder %v187, %v49
    %v191 = vsel %vm190, %v187, %v49
    %v192 = vsel %vm190, %v188, %v189
    %v193 = vadd.s32 %v88, 216
    %vm194 = vcmp.le.f32.partialorder %v191, %v50
    %v195 = vsel %vm194, %v191, %v50
    %v196 = vsel %vm194, %v192, %v193
    %v197 = vadd.s32 %v88, 224
    %vm198 = vcmp.le.f32.partialorder %v195, %v51
    %v199 = vsel %vm198, %v195, %v51
    %v200 = vsel %vm198, %v196, %v197
    %v201 = vadd.s32 %v88, 232
    %vm202 = vcmp.le.f32.partialorder %v199, %v52
    %v203 = vsel %vm202, %v199, %v52
    %v204 = vsel %vm202, %v200, %v201
    %v205 = vadd.s32 %v88, 240
    %vm206 = vcmp.le.f32.partialorder %v203, %v53
    %v207 = vsel %vm206, %v203, %v53
    %v208 = vsel %vm206, %v204, %v205
    %v209 = vadd.s32 %v88, 248
    %vm210 = vcmp.le.f32.partialorder %v207, %v54
    %v211 = vsel %vm210, %v207, %v54
    %v212 = vsel %vm210, %v208, %v209
    %v213 = vadd.s32 %v88, 256
    %vm214 = vcmp.le.f32.partialorder %v211, %v55
    %v215 = vsel %vm214, %v211, %v55
    %v216 = vsel %vm214, %v212, %v213
    %v217 = vadd.s32 %v88, 264
    %vm218 = vcmp.le.f32.partialorder %v215, %v56
    %v219 = vsel %vm218, %v215, %v56
    %v220 = vsel %vm218, %v216, %v217
    %v221 = vadd.s32 %v88, 272
    %vm222 = vcmp.le.f32.partialorder %v219, %v57
    %v223 = vsel %vm222, %v219, %v57
    %v224 = vsel %vm222, %v220, %v221
    %v225 = vadd.s32 %v88, 280
    %vm226 = vcmp.le.f32.partialorder %v223, %v58
    %v227 = vsel %vm226, %v223, %v58
    %v228 = vsel %vm226, %v224, %v225
    %v229 = vadd.s32 %v88, 288
    %vm230 = vcmp.le.f32.partialorder %v227, %v59
    %v231 = vsel %vm230, %v227, %v59
    %v232 = vsel %vm230, %v228, %v229
    %v233 = vadd.s32 %v88, 296
    %vm234 = vcmp.le.f32.partialorder %v231, %v60
    %v235 = vsel %vm234, %v231, %v60
    %v236 = vsel %vm234, %v232, %v233
    %v237 = vadd.s32 %v88, 304
    %vm238 = vcmp.le.f32.partialorder %v235, %v61
    %v239 = vsel %vm238, %v235, %v61
    %v240 = vsel %vm238, %v236, %v237
    %v241 = vadd.s32 %v88, 312
    %vm242 = vcmp.le.f32.partialorder %v239, %v62
    %v243 = vsel %vm242, %v239, %v62
    %v244 = vsel %vm242, %v240, %v241
    %v245 = vadd.s32 %v88, 320
    %vm246 = vcmp.le.f32.partialorder %v243, %v63
    %v247 = vsel %vm246, %v243, %v63
    %v248 = vsel %vm246, %v244, %v245
    %v249 = vadd.s32 %v88, 328
    %vm250 = vcmp.le.f32.partialorder %v247, %v64
    %v251 = vsel %vm250, %v247, %v64
    %v252 = vsel %vm250, %v248, %v249
    %v253 = vadd.s32 %v88, 336
    %vm254 = vcmp.le.f32.partialorder %v251, %v65
    %v255 = vsel %vm254, %v251, %v65
    %v256 = vsel %vm254, %v252, %v253
    %v257 = vadd.s32 %v88, 344
    %vm258 = vcmp.le.f32.partialorder %v255, %v66
    %v259 = vsel %vm258, %v255, %v66
    %v260 = vsel %vm258, %v256, %v257
    %v261 = vadd.s32 %v88, 352
    %vm262 = vcmp.le.f32.partialorder %v259, %v67
    %v263 = vsel %vm262, %v259, %v67
    %v264 = vsel %vm262, %v260, %v261
    %v265 = vadd.s32 %v88, 360
    %vm266 = vcmp.le.f32.partialorder %v263, %v68
    %v267 = vsel %vm266, %v263, %v68
    %v268 = vsel %vm266, %v264, %v265
    %v269 = vadd.s32 %v88, 368
    %vm270 = vcmp.le.f32.partialorder %v267, %v69
    %v271 = vsel %vm270, %v267, %v69
    %v272 = vsel %vm270, %v268, %v269
    %v273 = vadd.s32 %v88, 376
    %vm274 = vcmp.le.f32.partialorder %v271, %v70
    %v275 = vsel %vm274, %v271, %v70
    %v276 = vsel %vm274, %v272, %v273
    %v277 = vadd.s32 %v88, 384
    %vm278 = vcmp.le.f32.partialorder %v275, %v71
    %v279 = vsel %vm278, %v275, %v71
    %v280 = vsel %vm278, %v276, %v277
    %v281 = vadd.s32 %v88, 392
    %vm282 = vcmp.le.f32.partialorder %v279, %v72
    %v283 = vsel %vm282, %v279, %v72
    %v284 = vsel %vm282, %v280, %v281
    %v285 = vadd.s32 %v88, 400
    %vm286 = vcmp.le.f32.partialorder %v283, %v73
    %v287 = vsel %vm286, %v283, %v73
    %v288 = vsel %vm286, %v284, %v285
    %v289 = vadd.s32 %v88, 408
    %vm290 = vcmp.le.f32.partialorder %v287, %v74
    %v291 = vsel %vm290, %v287, %v74
    %v292 = vsel %vm290, %v288, %v289
    %v293 = vadd.s32 %v88, 416
    %vm294 = vcmp.le.f32.partialorder %v291, %v75
    %v295 = vsel %vm294, %v291, %v75
    %v296 = vsel %vm294, %v292, %v293
    %v297 = vadd.s32 %v88, 424
    %vm298 = vcmp.le.f32.partialorder %v295, %v76
    %v299 = vsel %vm298, %v295, %v76
    %v300 = vsel %vm298, %v296, %v297
    %v301 = vadd.s32 %v88, 432
    %vm302 = vcmp.le.f32.partialorder %v299, %v77
    %v303 = vsel %vm302, %v299, %v77
    %v304 = vsel %vm302, %v300, %v301
    %v305 = vadd.s32 %v88, 440
    %vm306 = vcmp.le.f32.partialorder %v303, %v78
    %v307 = vsel %vm306, %v303, %v78
    %v308 = vsel %vm306, %v304, %v305
    %v309 = vadd.s32 %v88, 448
    %vm310 = vcmp.le.f32.partialorder %v307, %v79
    %v311 = vsel %vm310, %v307, %v79
    %v312 = vsel %vm310, %v308, %v309
    %v313 = vadd.s32 %v88, 456
    %vm314 = vcmp.le.f32.partialorder %v311, %v80
    %v315 = vsel %vm314, %v311, %v80
    %v316 = vsel %vm314, %v312, %v313
    %v317 = vadd.s32 %v88, 464
    %vm318 = vcmp.le.f32.partialorder %v315, %v81
    %v319 = vsel %vm318, %v315, %v81
    %v320 = vsel %vm318, %v316, %v317
    %v321 = vadd.s32 %v88, 472
    %vm322 = vcmp.le.f32.partialorder %v319, %v82
    %v323 = vsel %vm322, %v319, %v82
    %v324 = vsel %vm322, %v320, %v321
    %v325 = vadd.s32 %v88, 480
    %vm326 = vcmp.le.f32.partialorder %v323, %v83
    %v327 = vsel %vm326, %v323, %v83
    %v328 = vsel %vm326, %v324, %v325
    %v329 = vadd.s32 %v88, 488
    %vm330 = vcmp.le.f32.partialorder %v327, %v84
    %v331 = vsel %vm330, %v327, %v84
    %v332 = vsel %vm330, %v328, %v329
    %v333 = vadd.s32 %v88, 496
    %vm334 = vcmp.le.f32.partialorder %v331, %v85
    %v335 = vsel %vm334, %v331, %v85
    %v336 = vsel %vm334, %v332, %v333
    %v337 = vadd.s32 %v88, 504
    %vm338 = vcmp.le.f32.partialorder %v335, %v86
    %v339 = vsel %vm338, %v335, %v86
    %v340 = vsel %vm338, %v336, %v337
    %v341 = vrot.slane %v339, 4
    %v342 = vrot.slane %v340, 4
    %vm343 = vcmp.le.f32.partialorder %v339, %v341
    %v344 = vsel %vm343, %v339, %v341
    %v345 = vsel %vm343, %v340, %v342
    %v346 = vrot.slane %v344, 6
    %v347 = vrot.slane %v345, 6
    %vm348 = vcmp.le.f32.partialorder %v344, %v346
    %v349 = vsel %vm348, %v344, %v346
    %v350 = vsel %vm348, %v345, %v347
    %v351 = vrot.slane %v349, 7
    %v352 = vrot.slane %v350, 7
    %vm353 = vcmp.le.f32.partialorder %v349, %v351
    %v354 = vsel %vm353, %v350, %v352
    %355 = vst [vmem:[#allocation5] sm:$0x1] %v354
    // Predicated region
    $region10: #{tpu_custom_call.1} parent=1 // pred_check
      _
    $region11: #{tpu_custom_call.1} parent=1 // pred_check_branch
      %357 = sbr.rel (0) target = $region13
    $region12: #{tpu_custom_call.1} parent=1 // pred_region
      %s359 = ssub.s32 16, 16
      %360 = vsyncadd [#allocation4], %s359
      %s362 = sshll.u32 [#allocation5], 4
      %s363 = int_to_ptr.vmem [resolvable:$true] %s362
      %365 = dma.vmem_to_hbm [thread:$0]  %s363, 16, %s1, [#allocation4]
    $region13: #{tpu_custom_call.1} parent=1 // pred_fallthru
      _
    // Predicated region
    $region14: #{tpu_custom_call.1} parent=1 // pred_check
      _
    $region15: #{tpu_custom_call.1} parent=1 // pred_check_branch
      %367 = sbr.rel (0) target = $region17
    $region16: #{tpu_custom_call.1} parent=1 // pred_region
      %368 = dma.done [#allocation4], 16
    $region17: #{tpu_custom_call.1} parent=1 // pred_fallthru
      _
    %369 = vsyncpa [#allocation3], 1
    %370 = vsyncpa [#allocation4], 1

// kernel: tpu_custom_call.1
$region0: #{tpu_custom_call.1}
  #allocation0 [shape = 'u32[]', space=smem, size = 0x4, offset = 0x4, fixed_abs, tag = 'smem constant byte address 0x4 - core index']
  #allocation1 [shape = 'u32[144,128]{1,0:T(1,128)}', space=vmem, size = 0x12000, scoped, tag = 'internal scratch']
  %s0 = inlined_call_operand.vmem [shape: f32[2,128,128], index: 0, kind: input, shape index: {}]
  %s1 = inlined_call_operand.vmem [shape: bf16[512,128], index: 1, kind: input, shape index: {}]
  %s2 = inlined_call_operand.vmem [shape: f32[512,1], index: 2, kind: input, shape index: {}]
  %s3 = inlined_call_operand.hbm [shape: bf16[3,128,512], index: 3, kind: input, shape index: {}]
  %s4 = inlined_call_operand.hbm [shape: f32[2,128,128], index: 4, kind: output, shape index: {}]
  %s5 = sld [smem:[#allocation0]]
  $region53: #{tpu_custom_call.1} parent=0
    _
  %s7 = ssub.s32 1, %s5
  %s8 = scalar_select 0, %s7, %s5
  $region1: #{tpu_custom_call.1} parent=0
    #allocation2 [shape = 'u8[393216]{0}', space=vmem, size = 0x60000, scoped, tag = 'input window, operand 3, single buffered']
    #allocation3 [shape = 's32[2]{0}', space=sflag, size = 0x8, scoped, tag = 'scoped memory for tpu_custom_call.1']
    #allocation4 [shape = 's32[2]{0}', space=sflag, size = 0x8, scoped, tag = 'scoped memory for tpu_custom_call.1']
    #allocation5 [shape = 'u8[131072]{0}', space=vmem, size = 0x20000, scoped, tag = 'output window, operand 0']
    %9 = vsyncpa [#allocation3], 0
    %10 = vsyncpa [#allocation4], 0
    %s11 = scalar_lea.sflag [#allocation4], 1
    %12 = vsyncpa %s11, 0
    loop: start=0, step=1, limit=4
    $region2: #{tpu_custom_call.1} parent=1 // loop_pre_header
      _
    $region3: #{tpu_custom_call.1} parent=1 // loop_header
      %s14 = sphi 0, %s18
      %p15 = scmp.ge.s32.totalorder %s14, 4
      %s21 = sphi 0, %s33
      %s22 = sphi 0, %s29
      %s23 = sphi 0, %s21
      %s24 = sphi 0, %s22
      %s25 = sphi 0, %s23
      %s26 = sphi 0, %s24
      %s38 = sphi 0, %s40
      %s41 = sphi 0, %s38
      %s42 = sphi 0, %s41
      %s58 = sphi 0, %s42
      %s62 = sphi 0, %s62
      %s64 = sphi 0, %s62
      %s65 = sphi 0, %s64
      %s79 = sphi 0, %s65
      %s83 = sphi 0, %s83
      %s85 = sphi 0, %s83
      %s86 = sphi 0, %s85
      %s100 = sphi 0, %s86
      %s104 = sphi 0, %s104
      %s106 = sphi 0, %s104
      %s107 = sphi 0, %s106
      %s121 = sphi 0, %s107
      %s129 = sphi 0, %s131
      %s132 = sphi 0, %s129
      %s133 = sphi 0, %s132
      %s149 = sphi 0, %s133
    $region4: #{tpu_custom_call.1} parent=1 // loop_header_branch
      %17 = sbr.rel (%p15) target = $region8
    $region5: #{tpu_custom_call.1} parent=1 // loop_body
      %s19 = ssub.s32 %s14, 1
      %s20 = ssub.s32 %s14, 2
      %s27 = sadd.s32 1, %s22
      %p28 = scmp.ge.s32.totalorder %s27, 1
      %s29 = scalar_select %p28, 0, %s27
      %s30 = sadd.s32 1, %s21
      %s31 = scalar_select %p28, %s30, %s21
      %p32 = scmp.ge.s32.totalorder %s31, 2
      %s33 = scalar_select %p32, 0, %s31
      %s34 = ssub.s32 %s21, %s33
      %s35 = ssub.s32 %s22, %s29
      %s36 = sor.u32 %s34, %s35
      %p37 = scmp.eq.s32.totalorder %s36, 0
      %s39 = sadd.s32 %s38, 1
      %s40 = scalar_select %p37, %s38, %s39
      %p43 = pneg %p37
      %p44 = scmp.eq.s32.totalorder %s14, 1
      %p45 = por %p43, %p44
      %p46 = scmp.ne.s32.totalorder %s38, %s41
      %p47 = scmp.eq.s32.totalorder %s14, 0
      %p48 = por %p46, %p47
      %p49 = scmp.ne.s32.totalorder %s38, %s41
      %p50 = scmp.eq.s32.totalorder %s19, 1
      %p51 = por %p49, %p50
      %p52 = scmp.ne.s32.totalorder %s41, %s42
      %p53 = scmp.eq.s32.totalorder %s19, 0
      %p54 = por %p52, %p53
      %p55 = scmp.ne.s32.totalorder %s41, %s42
      %p56 = scmp.eq.s32.totalorder %s20, 1
      %p57 = por %p55, %p56
      %p59 = scmp.ne.s32.totalorder %s42, %s58
      %p60 = scmp.eq.s32.totalorder %s20, 0
      %p61 = por %p59, %p60
      %s63 = sadd.s32 %s62, 1
      %p66 = scmp.eq.s32.totalorder %s14, 1
      %p67 = scmp.ne.s32.totalorder %s62, %s64
      %p68 = scmp.eq.s32.totalorder %s14, 0
      %p69 = por %p67, %p68
      %p70 = scmp.ne.s32.totalorder %s62, %s64
      %p71 = scmp.eq.s32.totalorder %s19, 1
      %p72 = por %p70, %p71
      %p73 = scmp.ne.s32.totalorder %s64, %s65
      %p74 = scmp.eq.s32.totalorder %s19, 0
      %p75 = por %p73, %p74
      %p76 = scmp.ne.s32.totalorder %s64, %s65
      %p77 = scmp.eq.s32.totalorder %s20, 1
      %p78 = por %p76, %p77
      %p80 = scmp.ne.s32.totalorder %s65, %s79
      %p81 = scmp.eq.s32.totalorder %s20, 0
      %p82 = por %p80, %p81
      %s84 = sadd.s32 %s83, 1
      %p87 = scmp.eq.s32.totalorder %s14, 1
      %p88 = scmp.ne.s32.totalorder %s83, %s85
      %p89 = scmp.eq.s32.totalorder %s14, 0
      %p90 = por %p88, %p89
      %p91 = scmp.ne.s32.totalorder %s83, %s85
      %p92 = scmp.eq.s32.totalorder %s19, 1
      %p93 = por %p91, %p92
      %p94 = scmp.ne.s32.totalorder %s85, %s86
      %p95 = scmp.eq.s32.totalorder %s19, 0
      %p96 = por %p94, %p95
      %p97 = scmp.ne.s32.totalorder %s85, %s86
      %p98 = scmp.eq.s32.totalorder %s20, 1
      %p99 = por %p97, %p98
      %p101 = scmp.ne.s32.totalorder %s86, %s100
      %p102 = scmp.eq.s32.totalorder %s20, 0
      %p103 = por %p101, %p102
      %s105 = sadd.s32 %s104, 1
      %p108 = scmp.eq.s32.totalorder %s14, 1
      %p109 = scmp.ne.s32.totalorder %s104, %s106
      %p110 = scmp.eq.s32.totalorder %s14, 0
      %p111 = por %p109, %p110
      %p112 = scmp.ne.s32.totalorder %s104, %s106
      %p113 = scmp.eq.s32.totalorder %s19, 1
      %p114 = por %p112, %p113
      %p115 = scmp.ne.s32.totalorder %s106, %s107
      %p116 = scmp.eq.s32.totalorder %s19, 0
      %p117 = por %p115, %p116
      %p118 = scmp.ne.s32.totalorder %s106, %s107
      %p119 = scmp.eq.s32.totalorder %s20, 1
      %p120 = por %p118, %p119
      %p122 = scmp.ne.s32.totalorder %s107, %s121
      %p123 = scmp.eq.s32.totalorder %s20, 0
      %p124 = por %p122, %p123
      %s125 = ssub.s32 %s21, %s33
      %s126 = ssub.s32 %s22, %s29
      %s127 = sor.u32 %s125, %s126
      %p128 = scmp.eq.s32.totalorder %s127, 0
      %s130 = sadd.s32 %s129, 1
      %s131 = scalar_select %p128, %s129, %s130
      %p134 = pneg %p128
      %p135 = scmp.eq.s32.totalorder %s14, 1
      %p136 = por %p134, %p135
      %p137 = scmp.ne.s32.totalorder %s129, %s132
      %p138 = scmp.eq.s32.totalorder %s14, 0
      %p139 = por %p137, %p138
      %p140 = scmp.ne.s32.totalorder %s129, %s132
      %p141 = scmp.eq.s32.totalorder %s19, 1
      %p142 = por %p140, %p141
      %p143 = scmp.ne.s32.totalorder %s132, %s133
      %p144 = scmp.eq.s32.totalorder %s19, 0
      %p145 = por %p143, %p144
      %p146 = scmp.ne.s32.totalorder %s132, %s133
      %p147 = scmp.eq.s32.totalorder %s20, 1
      %p148 = por %p146, %p147
      %p150 = scmp.ne.s32.totalorder %s133, %s149
      %p151 = scmp.eq.s32.totalorder %s20, 0
      %p152 = por %p150, %p151
      %p153 = scmp.le.s32.totalorder 1, %s14
      %p154 = scmp.lt.s32.totalorder %s14, 3
      %p155 = pnand %p153, %p154
      %p156 = pneg %p155
      // Predicated region
      $region9: #{tpu_custom_call.1} parent=5 // pred_check
        _
      $region10: #{tpu_custom_call.1} parent=5 // pred_check_branch
        %158 = sbr.rel (%p155) target = $region12
      $region11: #{tpu_custom_call.1} parent=5 // pred_region
        %s159 = ssub.s32 %s14, 1
        // Predicated region
        $region13: #{tpu_custom_call.1} parent=11 // pred_check
          %p160 = pneg %p75
        $region14: #{tpu_custom_call.1} parent=11 // pred_check_branch
          %162 = sbr.rel (%p160) target = $region16
        $region15: #{tpu_custom_call.1} parent=11 // pred_region
          _
        $region16: #{tpu_custom_call.1} parent=11 // pred_fallthru
          _
        // Predicated region
        $region17: #{tpu_custom_call.1} parent=11 // pred_check
          %p163 = pneg %p96
        $region18: #{tpu_custom_call.1} parent=11 // pred_check_branch
          %165 = sbr.rel (%p163) target = $region20
        $region19: #{tpu_custom_call.1} parent=11 // pred_region
          _
        $region20: #{tpu_custom_call.1} parent=11 // pred_fallthru
          _
        // Predicated region
        $region21: #{tpu_custom_call.1} parent=11 // pred_check
          %p166 = pneg %p117
        $region22: #{tpu_custom_call.1} parent=11 // pred_check_branch
          %168 = sbr.rel (%p166) target = $region24
        $region23: #{tpu_custom_call.1} parent=11 // pred_region
          %s170 = ssub.s32 12288, 12288
          %171 = vsyncadd [#allocation3], %s170
          %s172 = sshll.u32 [#allocation2], 4
          %s173 = int_to_ptr.vmem [resolvable:$true] %s172
          %178 = dma.hbm_to_vmem [thread:$0]  %s3, 12288, %s173, [#allocation3], 256, 256, 16
        $region24: #{tpu_custom_call.1} parent=11 // pred_fallthru
          _
      $region12: #{tpu_custom_call.1} parent=5 // pred_fallthru
        _
      %p179 = scmp.lt.s32.totalorder %s14, 2
      // Predicated region
      $region25: #{tpu_custom_call.1} parent=5 // pred_check
        %p180 = pneg %p179
      $region26: #{tpu_custom_call.1} parent=5 // pred_check_branch
        %182 = sbr.rel (%p180) target = $region28
      $region27: #{tpu_custom_call.1} parent=5 // pred_region
        // Predicated region
        $region29: #{tpu_custom_call.1} parent=27 // pred_check
          %p183 = pneg %p48
        $region30: #{tpu_custom_call.1} parent=27 // pred_check_branch
          %185 = sbr.rel (%p183) target = $region32
        $region31: #{tpu_custom_call.1} parent=27 // pred_region
          %p186 = scmp.lt.s32.totalorder %s21, 1
          %s187 = scalar_select %p186, %s21, 1
          %p188 = scmp.lt.s32.totalorder %s22, 0
          %s189 = scalar_select %p188, %s22, 0
          %s190 = smul.addr %s187, 16
          %s191 = sadd.s32 %s189, %s190
          %s192 = smul.addr %s191, 8
          %s193 = scalar_lea.vmem %s0, %s192
        $region32: #{tpu_custom_call.1} parent=27 // pred_fallthru
          _
      $region28: #{tpu_custom_call.1} parent=5 // pred_fallthru
        _
      %p194 = scmp.le.s32.totalorder 1, %s14
      %p195 = scmp.lt.s32.totalorder %s14, 3
      %p196 = pnand %p194, %p195
      %p197 = pneg %p196
      // Predicated region
      $region33: #{tpu_custom_call.1} parent=5 // pred_check
        _
      $region34: #{tpu_custom_call.1} parent=5 // pred_check_branch
        %199 = sbr.rel (%p196) target = $region36
      $region35: #{tpu_custom_call.1} parent=5 // pred_region
        %s200 = ssub.s32 %s14, 1
        // Predicated region
        $region37: #{tpu_custom_call.1} parent=35 // pred_check
          %p201 = pneg %p117
        $region38: #{tpu_custom_call.1} parent=35 // pred_check_branch
          %203 = sbr.rel (%p201) target = $region40
        $region39: #{tpu_custom_call.1} parent=35 // pred_region
          %204 = dma.done [#allocation3], 12288
        $region40: #{tpu_custom_call.1} parent=35 // pred_fallthru
          _
        %p205 = scmp.lt.s32.totalorder %s23, 1
        %s206 = scalar_select %p205, %s23, 1
        %p207 = scmp.lt.s32.totalorder %s24, 0
        %s208 = scalar_select %p207, %s24, 0
        %s209 = smul.addr %s206, 16
        %s210 = sadd.s32 %s208, %s209
        %s211 = smul.addr %s210, 8
        %s212 = scalar_lea.vmem %s0, %s211
        %p213 = pneg %p54
        %p214 = pneg %p51
        %p215 = pneg %p75
        %p216 = pneg %p72
        %p217 = pneg %p96
        %p218 = pneg %p93
        %p219 = pneg %p117
        %p220 = pneg %p114
        %p221 = pneg %p145
        %p222 = pneg %p142
        %s223 = sand.u32 %s132, 1
        %s224 = scalar_lea.sflag [#allocation4], %s223
        %s225 = sand.u32 %s132, 1
        %s226 = smul.addr %s225, 128
        %s227 = scalar_lea.vmem [#allocation5], %s226
        %p228 = scmp.lt.s32.totalorder %s23, 1
        %s229 = scalar_select %p228, %s23, 1
        %p230 = scmp.lt.s32.totalorder %s24, 0
        %s231 = scalar_select %p230, %s24, 0
        %s232 = smul.addr %s229, 16
        %s233 = sadd.s32 %s231, %s232
        %s234 = smul.addr %s233, 8
        %s235 = scalar_lea.vmem %s0, %s234
        %v237 = vld [vmem:[%s235] sm:$0xff]
        %v238 = vld [vmem:[%s235 + $0x8] sm:$0xff]
        %v239 = vld [vmem:[%s235 + $0x10] sm:$0xff]
        %v240 = vld [vmem:[%s235 + $0x18] sm:$0xff]
        %v241 = vld [vmem:[%s235 + $0x20] sm:$0xff]
        %v242 = vld [vmem:[%s235 + $0x28] sm:$0xff]
        %v243 = vld [vmem:[%s235 + $0x30] sm:$0xff]
        %v244 = vld [vmem:[%s235 + $0x38] sm:$0xff]
        %v245 = vld [vmem:[%s235 + $0x40] sm:$0xff]
        %v246 = vld [vmem:[%s235 + $0x48] sm:$0xff]
        %v247 = vld [vmem:[%s235 + $0x50] sm:$0xff]
        %v248 = vld [vmem:[%s235 + $0x58] sm:$0xff]
        %v249 = vld [vmem:[%s235 + $0x60] sm:$0xff]
        %v250 = vld [vmem:[%s235 + $0x68] sm:$0xff]
        %v251 = vld [vmem:[%s235 + $0x70] sm:$0xff]
        %v252 = vld [vmem:[%s235 + $0x78] sm:$0xff]
        %v253 = vld [vmem:[%s1] sm:$0xf]
        %v254 = vld [vmem:[%s1 + $0x4] sm:$0xf]
        %v255 = vld [vmem:[%s1 + $0x8] sm:$0xf]
        %v256 = vld [vmem:[%s1 + $0xc] sm:$0xf]
        %v257 = vld [vmem:[%s1 + $0x10] sm:$0xf]
        %v258 = vld [vmem:[%s1 + $0x14] sm:$0xf]
        %v259 = vld [vmem:[%s1 + $0x18] sm:$0xf]
        %v260 = vld [vmem:[%s1 + $0x1c] sm:$0xf]
        %v261 = vld [vmem:[%s1 + $0x20] sm:$0xf]
        %v262 = vld [vmem:[%s1 + $0x24] sm:$0xf]
        %v263 = vld [vmem:[%s1 + $0x28] sm:$0xf]
        %v264 = vld [vmem:[%s1 + $0x2c] sm:$0xf]
        %v265 = vld [vmem:[%s1 + $0x30] sm:$0xf]
        %v266 = vld [vmem:[%s1 + $0x34] sm:$0xf]
        %v267 = vld [vmem:[%s1 + $0x38] sm:$0xf]
        %v268 = vld [vmem:[%s1 + $0x3c] sm:$0xf]
        %v269 = vld [vmem:[%s1 + $0x40] sm:$0xf]
        %v270 = vld [vmem:[%s1 + $0x44] sm:$0xf]
        %v271 = vld [vmem:[%s1 + $0x48] sm:$0xf]
        %v272 = vld [vmem:[%s1 + $0x4c] sm:$0xf]
        %v273 = vld [vmem:[%s1 + $0x50] sm:$0xf]
        %v274 = vld [vmem:[%s1 + $0x54] sm:$0xf]
        %v275 = vld [vmem:[%s1 + $0x58] sm:$0xf]
        %v276 = vld [vmem:[%s1 + $0x5c] sm:$0xf]
        %v277 = vld [vmem:[%s1 + $0x60] sm:$0xf]
        %v278 = vld [vmem:[%s1 + $0x64] sm:$0xf]
        %v279 = vld [vmem:[%s1 + $0x68] sm:$0xf]
        %v280 = vld [vmem:[%s1 + $0x6c] sm:$0xf]
        %v281 = vld [vmem:[%s1 + $0x70] sm:$0xf]
        %v282 = vld [vmem:[%s1 + $0x74] sm:$0xf]
        %v283 = vld [vmem:[%s1 + $0x78] sm:$0xf]
        %v284 = vld [vmem:[%s1 + $0x7c] sm:$0xf]
        %v285 = vld [vmem:[%s1 + $0x80] sm:$0xf]
        %v286 = vld [vmem:[%s1 + $0x84] sm:$0xf]
        %v287 = vld [vmem:[%s1 + $0x88] sm:$0xf]
        %v288 = vld [vmem:[%s1 + $0x8c] sm:$0xf]
        %v289 = vld [vmem:[%s1 + $0x90] sm:$0xf]
        %v290 = vld [vmem:[%s1 + $0x94] sm:$0xf]
        %v291 = vld [vmem:[%s1 + $0x98] sm:$0xf]
        %v292 = vld [vmem:[%s1 + $0x9c] sm:$0xf]
        %v293 = vld [vmem:[%s1 + $0xa0] sm:$0xf]
        %v294 = vld [vmem:[%s1 + $0xa4] sm:$0xf]
        %v295 = vld [vmem:[%s1 + $0xa8] sm:$0xf]
        %v296 = vld [vmem:[%s1 + $0xac] sm:$0xf]
        %v297 = vld [vmem:[%s1 + $0xb0] sm:$0xf]
        %v298 = vld [vmem:[%s1 + $0xb4] sm:$0xf]
        %v299 = vld [vmem:[%s1 + $0xb8] sm:$0xf]
        %v300 = vld [vmem:[%s1 + $0xbc] sm:$0xf]
        %v301 = vld [vmem:[%s1 + $0xc0] sm:$0xf]
        %v302 = vld [vmem:[%s1 + $0xc4] sm:$0xf]
        %v303 = vld [vmem:[%s1 + $0xc8] sm:$0xf]
        %v304 = vld [vmem:[%s1 + $0xcc] sm:$0xf]
        %v305 = vld [vmem:[%s1 + $0xd0] sm:$0xf]
        %v306 = vld [vmem:[%s1 + $0xd4] sm:$0xf]
        %v307 = vld [vmem:[%s1 + $0xd8] sm:$0xf]
        %v308 = vld [vmem:[%s1 + $0xdc] sm:$0xf]
        %v309 = vld [vmem:[%s1 + $0xe0] sm:$0xf]
        %v310 = vld [vmem:[%s1 + $0xe4] sm:$0xf]
        %v311 = vld [vmem:[%s1 + $0xe8] sm:$0xf]
        %v312 = vld [vmem:[%s1 + $0xec] sm:$0xf]
        %v313 = vld [vmem:[%s1 + $0xf0] sm:$0xf]
        %v314 = vld [vmem:[%s1 + $0xf4] sm:$0xf]
        %v315 = vld [vmem:[%s1 + $0xf8] sm:$0xf]
        %v316 = vld [vmem:[%s1 + $0xfc] sm:$0xf]
        %v317 = vpack.c.bf16 %v238, %v237
        %v318 = vpack.c.bf16 %v240, %v239
        %v319 = vpack.c.bf16 %v242, %v241
        %v320 = vpack.c.bf16 %v244, %v243
        %v321 = vpack.c.bf16 %v246, %v245
        %v322 = vpack.c.bf16 %v248, %v247
        %v323 = vpack.c.bf16 %v250, %v249
        %v324 = vpack.c.bf16 %v252, %v251
        %v389 = vunpack.c.l.b16 %v253
        %v390 = vunpack.c.l.b16 %v254
        %v391 = vunpack.c.l.b16 %v255
        %v392 = vunpack.c.l.b16 %v256
        %v393 = vunpack.c.l.b16 %v257
        %v394 = vunpack.c.l.b16 %v258
        %v395 = vunpack.c.l.b16 %v259
        %v396 = vunpack.c.l.b16 %v260
        %v397 = vunpack.c.l.b16 %v261
        %v398 = vunpack.c.l.b16 %v262
        %v399 = vunpack.c.l.b16 %v263
        %v400 = vunpack.c.l.b16 %v264
        %v401 = vunpack.c.l.b16 %v265
        %v402 = vunpack.c.l.b16 %v266
        %v403 = vunpack.c.l.b16 %v267
        %v404 = vunpack.c.l.b16 %v268
        %v405 = vunpack.c.l.b16 %v269
        %v406 = vunpack.c.l.b16 %v270
        %v407 = vunpack.c.l.b16 %v271
        %v408 = vunpack.c.l.b16 %v272
        %v409 = vunpack.c.l.b16 %v273
        %v410 = vunpack.c.l.b16 %v274
        %v411 = vunpack.c.l.b16 %v275
        %v412 = vunpack.c.l.b16 %v276
        %v413 = vunpack.c.l.b16 %v277
        %v414 = vunpack.c.l.b16 %v278
        %v415 = vunpack.c.l.b16 %v279
        %v416 = vunpack.c.l.b16 %v280
        %v417 = vunpack.c.l.b16 %v281
        %v418 = vunpack.c.l.b16 %v282
        %v419 = vunpack.c.l.b16 %v283
        %v420 = vunpack.c.l.b16 %v284
        %v421 = vunpack.c.l.b16 %v285
        %v422 = vunpack.c.l.b16 %v286
        %v423 = vunpack.c.l.b16 %v287
        %v424 = vunpack.c.l.b16 %v288
        %v425 = vunpack.c.l.b16 %v289
        %v426 = vunpack.c.l.b16 %v290
        %v427 = vunpack.c.l.b16 %v291
        %v428 = vunpack.c.l.b16 %v292
        %v429 = vunpack.c.l.b16 %v293
        %v430 = vunpack.c.l.b16 %v294
        %v431 = vunpack.c.l.b16 %v295
        %v432 = vunpack.c.l.b16 %v296
        %v433 = vunpack.c.l.b16 %v297
        %v434 = vunpack.c.l.b16 %v298
        %v435 = vunpack.c.l.b16 %v299
        %v436 = vunpack.c.l.b16 %v300
        %v437 = vunpack.c.l.b16 %v301
        %v438 = vunpack.c.l.b16 %v302
        %v439 = vunpack.c.l.b16 %v303
        %v440 = vunpack.c.l.b16 %v304
        %v441 = vunpack.c.l.b16 %v305
        %v442 = vunpack.c.l.b16 %v306
        %v443 = vunpack.c.l.b16 %v307
        %v444 = vunpack.c.l.b16 %v308
        %v445 = vunpack.c.l.b16 %v309
        %v446 = vunpack.c.l.b16 %v310
        %v447 = vunpack.c.l.b16 %v311
        %v448 = vunpack.c.l.b16 %v312
        %v449 = vunpack.c.l.b16 %v313
        %v450 = vunpack.c.l.b16 %v314
        %v451 = vunpack.c.l.b16 %v315
        %v452 = vunpack.c.l.b16 %v316
        %v453 = vpack.c.b16 %v390, %v389
        %v454 = vpack.c.b16 %v392, %v391
        %v455 = vpack.c.b16 %v394, %v393
        %v456 = vpack.c.b16 %v396, %v395
        %v457 = vpack.c.b16 %v398, %v397
        %v458 = vpack.c.b16 %v400, %v399
        %v459 = vpack.c.b16 %v402, %v401
        %v460 = vpack.c.b16 %v404, %v403
        %v461 = vpack.c.b16 %v406, %v405
        %v462 = vpack.c.b16 %v408, %v407
        %v463 = vpack.c.b16 %v410, %v409
        %v464 = vpack.c.b16 %v412, %v411
        %v465 = vpack.c.b16 %v414, %v413
        %v466 = vpack.c.b16 %v416, %v415
        %v467 = vpack.c.b16 %v418, %v417
        %v468 = vpack.c.b16 %v420, %v419
        %v469 = vpack.c.b16 %v422, %v421
        %v470 = vpack.c.b16 %v424, %v423
        %v471 = vpack.c.b16 %v426, %v425
        %v472 = vpack.c.b16 %v428, %v427
        %v473 = vpack.c.b16 %v430, %v429
        %v474 = vpack.c.b16 %v432, %v431
        %v475 = vpack.c.b16 %v434, %v433
        %v476 = vpack.c.b16 %v436, %v435
        %v477 = vpack.c.b16 %v438, %v437
        %v478 = vpack.c.b16 %v440, %v439
        %v479 = vpack.c.b16 %v442, %v441
        %v480 = vpack.c.b16 %v444, %v443
        %v481 = vpack.c.b16 %v446, %v445
        %v482 = vpack.c.b16 %v448, %v447
        %v483 = vpack.c.b16 %v450, %v449
        %v484 = vpack.c.b16 %v452, %v451
        %517 = vmatprep.subr.bf16.mxu0 0
        %518 = vmatpush1.bf16.msra.mxu0 %v317
        %519 = vmatprep.subr.bf16.mxu0 0
        %520 = vmatpush1.bf16.msra.mxu0 %v318
        %521 = vmatprep.subr.bf16.mxu0 0
        %522 = vmatpush1.bf16.msra.mxu0 %v319
        %523 = vmatprep.subr.bf16.mxu0 0
        %524 = vmatpush1.bf16.msra.mxu0 %v320
        %525 = vmatprep.subr.bf16.mxu0 0
        %526 = vmatpush1.bf16.msra.mxu0 %v321
        %527 = vmatprep.subr.bf16.mxu0 0
        %528 = vmatpush1.bf16.msra.mxu0 %v322
        %529 = vmatprep.subr.bf16.mxu0 0
        %530 = vmatpush1.bf16.msra.mxu0 %v323
        %531 = vmatprep.subr.bf16.mxu0 0
        %532 = vmatpush1.bf16.msra.mxu0 %v324
        %533 = vmatprep.subr.bf16.mxu0 0
        %534 = vmatpush1.bf16.msra.mxu0 0
        %535 = vmatprep.subr.bf16.mxu0 0
        %536 = vmatpush1.bf16.msra.mxu0 0
        %537 = vmatprep.subr.bf16.mxu0 0
        %538 = vmatpush1.bf16.msra.mxu0 0
        %539 = vmatprep.subr.bf16.mxu0 0
        %540 = vmatpush1.bf16.msra.mxu0 0
        %541 = vmatprep.subr.bf16.mxu0 0
        %542 = vmatpush1.bf16.msra.mxu0 0
        %543 = vmatprep.subr.bf16.mxu0 0
        %544 = vmatpush1.bf16.msra.mxu0 0
        %545 = vmatprep.subr.bf16.mxu0 0
        %546 = vmatpush1.bf16.msra.mxu0 0
        %547 = vmatprep.subr.bf16.mxu0 0
        %548 = vmatpush1.bf16.msra.mxu0 0
        %549 = vmatprep.mubr.bf16.mxu0 0
        %550 = vmatmul.mubr.bf16.gmra.mrb[0].mxu0 %v453
        %v551 = vpop.f32.mrb[0].mxu0
        %v552 = vadd.f32 0.0, %v551
        %v553 = vpop.f32.mrb[0].mxu0
        %v554 = vpop.f32.mrb[0].mxu0
        %v555 = vadd.f32 0.0, %v554
        %v556 = vpop.f32.mrb[0].mxu0
        %557 = vmatprep.mubr.bf16.mxu0 0
        %558 = vmatmul.mubr.bf16.gmra.mrb[0].mxu0 %v454
        %v559 = vpop.f32.mrb[0].mxu0
        %v560 = vadd.f32 0.0, %v559
        %v561 = vpop.f32.mrb[0].mxu0
        %v562 = vpop.f32.mrb[0].mxu0
        %v563 = vadd.f32 0.0, %v562
        %v564 = vpop.f32.mrb[0].mxu0
        %565 = vmatprep.mubr.bf16.mxu0 0
        %566 = vmatmul.mubr.bf16.gmra.mrb[0].mxu0 %v455
        %v567 = vpop.f32.mrb[0].mxu0
        %v568 = vadd.f32 0.0, %v567
        %v569 = vpop.f32.mrb[0].mxu0
        %v570 = vpop.f32.mrb[0].mxu0
        %v571 = vadd.f32 0.0, %v570
        %v572 = vpop.f32.mrb[0].mxu0
        %573 = vmatprep.mubr.bf16.mxu0 0
        %574 = vmatmul.mubr.bf16.gmra.mrb[0].mxu0 %v456
        %v575 = vpop.f32.mrb[0].mxu0
        %v576 = vadd.f32 0.0, %v575
        %v577 = vpop.f32.mrb[0].mxu0
        %v578 = vpop.f32.mrb[0].mxu0
        %v579 = vadd.f32 0.0, %v578
        %v580 = vpop.f32.mrb[0].mxu0
        %581 = vmatprep.mubr.bf16.mxu0 0
        %582 = vmatmul.mubr.bf16.gmra.mrb[0].mxu0 %v457
        %v583 = vpop.f32.mrb[0].mxu0
        %v584 = vadd.f32 0.0, %v583
        %v585 = vpop.f32.mrb[0].mxu0
        %v586 = vpop.f32.mrb[0].mxu0
        %v587 = vadd.f32 0.0, %v586
        %v588 = vpop.f32.mrb[0].mxu0
        %589 = vmatprep.mubr.bf16.mxu0 0
        %590 = vmatmul.mubr.bf16.gmra.mrb[0].mxu0 %v458
        %v591 = vpop.f32.mrb[0].mxu0
        %v592 = vadd.f32 0.0, %v591
        %v593 = vpop.f32.mrb[0].mxu0
        %v594 = vpop.f32.mrb[0].mxu0
        %v595 = vadd.f32 0.0, %v594
        %v596 = vpop.f32.mrb[0].mxu0
        %597 = vmatprep.mubr.bf16.mxu0 0
        %598 = vmatmul.mubr.bf16.gmra.mrb[0].mxu0 %v459
        %v599 = vpop.f32.mrb[0].mxu0
        %v600 = vadd.f32 0.0, %v599
        %v601 = vpop.f32.mrb[0].mxu0
        %v602 = vpop.f32.mrb[0].mxu0
        %v603 = vadd.f32 0.0, %v602
        %v604 = vpop.f32.mrb[0].mxu0
        %605 = vmatprep.mubr.bf16.mxu0 0
        %606 = vmatmul.mubr.bf16.gmra.mrb[0].mxu0 %v460
        %v607 = vpop.f32.mrb[0].mxu0
        %v608 = vadd.f32 0.0, %v607
        %v609 = vpop.f32.mrb[0].mxu0
        %v610 = vpop.f32.mrb[0].mxu0
        %v611 = vadd.f32 0.0, %v610
        %v612 = vpop.f32.mrb[0].mxu0
        %613 = vmatprep.mubr.bf16.mxu0 0
        %614 = vmatmul.mubr.bf16.gmra.mrb[0].mxu0 %v461
        %v615 = vpop.f32.mrb[0].mxu0
        %v616 = vadd.f32 0.0, %v615
        %v617 = vpop.f32.mrb[0].mxu0
        %v618 = vpop.f32.mrb[0].mxu0
        %v619 = vadd.f32 0.0, %v618
        %v620 = vpop.f32.mrb[0].mxu0
        %621 = vmatprep.mubr.bf16.mxu0 0
        %622 = vmatmul.mubr.bf16.gmra.mrb[0].mxu0 %v462
        %v623 = vpop.f32.mrb[0].mxu0
        %v624 = vadd.f32 0.0, %v623
        %v625 = vpop.f32.mrb[0].mxu0
        %v626 = vpop.f32.mrb[0].mxu0
        %v627 = vadd.f32 0.0, %v626
        %v628 = vpop.f32.mrb[0].mxu0
        %629 = vmatprep.mubr.bf16.mxu0 0
        %630 = vmatmul.mubr.bf16.gmra.mrb[0].mxu0 %v463
        %v631 = vpop.f32.mrb[0].mxu0
        %v632 = vadd.f32 0.0, %v631
        %v633 = vpop.f32.mrb[0].mxu0
        %v634 = vpop.f32.mrb[0].mxu0
        %v635 = vadd.f32 0.0, %v634
        %v636 = vpop.f32.mrb[0].mxu0
        %637 = vmatprep.mubr.bf16.mxu0 0
        %638 = vmatmul.mubr.bf16.gmra.mrb[0].mxu0 %v464
        %v639 = vpop.f32.mrb[0].mxu0
        %v640 = vadd.f32 0.0, %v639
        %v641 = vpop.f32.mrb[0].mxu0
        %v642 = vpop.f32.mrb[0].mxu0
        %v643 = vadd.f32 0.0, %v642
        %v644 = vpop.f32.mrb[0].mxu0
        %645 = vmatprep.mubr.bf16.mxu0 0
        %646 = vmatmul.mubr.bf16.gmra.mrb[0].mxu0 %v465
        %v647 = vpop.f32.mrb[0].mxu0
        %v648 = vadd.f32 0.0, %v647
        %v649 = vpop.f32.mrb[0].mxu0
        %v650 = vpop.f32.mrb[0].mxu0
        %v651 = vadd.f32 0.0, %v650
        %v652 = vpop.f32.mrb[0].mxu0
        %653 = vmatprep.mubr.bf16.mxu0 0
        %654 = vmatmul.mubr.bf16.gmra.mrb[0].mxu0 %v466
        %v655 = vpop.f32.mrb[0].mxu0
        %v656 = vadd.f32 0.0, %v655
        %v657 = vpop.f32.mrb[0].mxu0
        %v658 = vpop.f32.mrb[0].mxu0
        %v659 = vadd.f32 0.0, %v658
        %v660 = vpop.f32.mrb[0].mxu0
        %661 = vmatprep.mubr.bf16.mxu0 0
        %662 = vmatmul.mubr.bf16.gmra.mrb[0].mxu0 %v467
        %v663 = vpop.f32.mrb[0].mxu0
        %v664 = vadd.f32 0.0, %v663
        %v665 = vpop.f32.mrb[0].mxu0
        %v666 = vpop.f32.mrb[0].mxu0
        %v667 = vadd.f32 0.0, %v666
        %v668 = vpop.f32.mrb[0].mxu0
        %669 = vmatprep.mubr.bf16.mxu0 0
        %670 = vmatmul.mubr.bf16.gmra.mrb[0].mxu0 %v468
        %v671 = vpop.f32.mrb[0].mxu0
        %v672 = vadd.f32 0.0, %v671
        %v673 = vpop.f32.mrb[0].mxu0
        %v674 = vpop.f32.mrb[0].mxu0
        %v675 = vadd.f32 0.0, %v674
        %v676 = vpop.f32.mrb[0].mxu0
        %677 = vmatprep.mubr.bf16.mxu0 0
        %678 = vmatmul.mubr.bf16.gmra.mrb[0].mxu0 %v469
        %v679 = vpop.f32.mrb[0].mxu0
        %v680 = vadd.f32 0.0, %v679
        %v681 = vpop.f32.mrb[0].mxu0
        %v682 = vpop.f32.mrb[0].mxu0
        %v683 = vadd.f32 0.0, %v682
        %v684 = vpop.f32.mrb[0].mxu0
        %685 = vmatprep.mubr.bf16.mxu0 0
        %686 = vmatmul.mubr.bf16.gmra.mrb[0].mxu0 %v470
        %v687 = vpop.f32.mrb[0].mxu0
        %v688 = vadd.f32 0.0, %v687
        %v689 = vpop.f32.mrb[0].mxu0
        %v690 = vpop.f32.mrb[0].mxu0
        %v691 = vadd.f32 0.0, %v690
        %v692 = vpop.f32.mrb[0].mxu0
        %693 = vmatprep.mubr.bf16.mxu0 0
        %694 = vmatmul.mubr.bf16.gmra.mrb[0].mxu0 %v471
        %v695 = vpop.f32.mrb[0].mxu0
        %v696 = vadd.f32 0.0, %v695
        %v697 = vpop.f32.mrb[0].mxu0
        %v698 = vpop.f32.mrb[0].mxu0
        %v699 = vadd.f32 0.0, %v698
        %v700 = vpop.f32.mrb[0].mxu0
        %701 = vmatprep.mubr.bf16.mxu0 0
        %702 = vmatmul.mubr.bf16.gmra.mrb[0].mxu0 %v472
        %v703 = vpop.f32.mrb[0].mxu0
        %v704 = vadd.f32 0.0, %v703
        %v705 = vpop.f32.mrb[0].mxu0
        %v706 = vpop.f32.mrb[0].mxu0
        %v707 = vadd.f32 0.0, %v706
        %v708 = vpop.f32.mrb[0].mxu0
        %709 = vmatprep.mubr.bf16.mxu0 0
        %710 = vmatmul.mubr.bf16.gmra.mrb[0].mxu0 %v473
        %v711 = vpop.f32.mrb[0].mxu0
        %v712 = vadd.f32 0.0, %v711
        %v713 = vpop.f32.mrb[0].mxu0
        %v714 = vpop.f32.mrb[0].mxu0
        %v715 = vadd.f32 0.0, %v714
        %v716 = vpop.f32.mrb[0].mxu0
        %717 = vmatprep.mubr.bf16.mxu0 0
        %718 = vmatmul.mubr.bf16.gmra.mrb[0].mxu0 %v474
        %v719 = vpop.f32.mrb[0].mxu0
        %v720 = vadd.f32 0.0, %v719
        %v721 = vpop.f32.mrb[0].mxu0
        %v722 = vpop.f32.mrb[0].mxu0
        %v723 = vadd.f32 0.0, %v722
        %v724 = vpop.f32.mrb[0].mxu0
        %725 = vmatprep.mubr.bf16.mxu0 0
        %726 = vmatmul.mubr.bf16.gmra.mrb[0].mxu0 %v475
        %v727 = vpop.f32.mrb[0].mxu0
        %v728 = vadd.f32 0.0, %v727
        %v729 = vpop.f32.mrb[0].mxu0
        %v730 = vpop.f32.mrb[0].mxu0
        %v731 = vadd.f32 0.0, %v730
        %v732 = vpop.f32.mrb[0].mxu0
        %733 = vmatprep.mubr.bf16.mxu0 0
        %734 = vmatmul.mubr.bf16.gmra.mrb[0].mxu0 %v476
        %v735 = vpop.f32.mrb[0].mxu0
        %v736 = vadd.f32 0.0, %v735
        %v737 = vpop.f32.mrb[0].mxu0
        %v738 = vpop.f32.mrb[0].mxu0
        %v739 = vadd.f32 0.0, %v738
        %v740 = vpop.f32.mrb[0].mxu0
        %741 = vmatprep.mubr.bf16.mxu0 0
        %742 = vmatmul.mubr.bf16.gmra.mrb[0].mxu0 %v477
        %v743 = vpop.f32.mrb[0].mxu0
        %v744 = vadd.f32 0.0, %v743
        %v745 = vpop.f32.mrb[0].mxu0
        %v746 = vpop.f32.mrb[0].mxu0
        %v747 = vadd.f32 0.0, %v746
        %v748 = vpop.f32.mrb[0].mxu0
        %749 = vmatprep.mubr.bf16.mxu0 0
        %750 = vmatmul.mubr.bf16.gmra.mrb[0].mxu0 %v478
        %v751 = vpop.f32.mrb[0].mxu0
        %v752 = vadd.f32 0.0, %v751
        %v753 = vpop.f32.mrb[0].mxu0
        %v754 = vpop.f32.mrb[0].mxu0
        %v755 = vadd.f32 0.0, %v754
        %v756 = vpop.f32.mrb[0].mxu0
        %757 = vmatprep.mubr.bf16.mxu0 0
        %758 = vmatmul.mubr.bf16.gmra.mrb[0].mxu0 %v479
        %v759 = vpop.f32.mrb[0].mxu0
        %v760 = vadd.f32 0.0, %v759
        %v761 = vpop.f32.mrb[0].mxu0
        %v762 = vpop.f32.mrb[0].mxu0
        %v763 = vadd.f32 0.0, %v762
        %v764 = vpop.f32.mrb[0].mxu0
        %765 = vmatprep.mubr.bf16.mxu0 0
        %766 = vmatmul.mubr.bf16.gmra.mrb[0].mxu0 %v480
        %v767 = vpop.f32.mrb[0].mxu0
        %v768 = vadd.f32 0.0, %v767
        %v769 = vpop.f32.mrb[0].mxu0
        %v770 = vpop.f32.mrb[0].mxu0
        %v771 = vadd.f32 0.0, %v770
        %v772 = vpop.f32.mrb[0].mxu0
        %773 = vmatprep.mubr.bf16.mxu0 0
        %774 = vmatmul.mubr.bf16.gmra.mrb[0].mxu0 %v481
        %v775 = vpop.f32.mrb[0].mxu0
        %v776 = vadd.f32 0.0, %v775
        %v777 = vpop.f32.mrb[0].mxu0
        %v778 = vpop.f32.mrb[0].mxu0
        %v779 = vadd.f32 0.0, %v778
        %v780 = vpop.f32.mrb[0].mxu0
        %781 = vmatprep.mubr.bf16.mxu0 0
        %782 = vmatmul.mubr.bf16.gmra.mrb[0].mxu0 %v482
        %v783 = vpop.f32.mrb[0].mxu0
        %v784 = vadd.f32 0.0, %v783
        %v785 = vpop.f32.mrb[0].mxu0
        %v786 = vpop.f32.mrb[0].mxu0
        %v787 = vadd.f32 0.0, %v786
        %v788 = vpop.f32.mrb[0].mxu0
        %789 = vmatprep.mubr.bf16.mxu0 0
        %790 = vmatmul.mubr.bf16.gmra.mrb[0].mxu0 %v483
        %v791 = vpop.f32.mrb[0].mxu0
        %v792 = vadd.f32 0.0, %v791
        %v793 = vpop.f32.mrb[0].mxu0
        %v794 = vpop.f32.mrb[0].mxu0
        %v795 = vadd.f32 0.0, %v794
        %v796 = vpop.f32.mrb[0].mxu0
        %797 = vmatprep.mubr.bf16.mxu0 0
        %798 = vmatmul.mubr.bf16.gmra.mrb[0].mxu0 %v484
        %v799 = vpop.f32.mrb[0].mxu0
        %v800 = vadd.f32 0.0, %v799
        %v801 = vpop.f32.mrb[0].mxu0
        %v802 = vpop.f32.mrb[0].mxu0
        %v803 = vadd.f32 0.0, %v802
        %v804 = vpop.f32.mrb[0].mxu0
        %805 = vdwg.mxu0
        %v806 = vld [vmem:[%s2] sm:$0xff]
        %v807 = vld [vmem:[%s2 + $0x8] sm:$0xff]
        %v808 = vld [vmem:[%s2 + $0x10] sm:$0xff]
        %v809 = vld [vmem:[%s2 + $0x18] sm:$0xff]
        %v810 = vld [vmem:[%s2 + $0x20] sm:$0xff]
        %v811 = vld [vmem:[%s2 + $0x28] sm:$0xff]
        %v812 = vld [vmem:[%s2 + $0x30] sm:$0xff]
        %v813 = vld [vmem:[%s2 + $0x38] sm:$0xff]
        %v814 = vld [vmem:[%s2 + $0x40] sm:$0xff]
        %v815 = vld [vmem:[%s2 + $0x48] sm:$0xff]
        %v816 = vld [vmem:[%s2 + $0x50] sm:$0xff]
        %v817 = vld [vmem:[%s2 + $0x58] sm:$0xff]
        %v818 = vld [vmem:[%s2 + $0x60] sm:$0xff]
        %v819 = vld [vmem:[%s2 + $0x68] sm:$0xff]
        %v820 = vld [vmem:[%s2 + $0x70] sm:$0xff]
        %v821 = vld [vmem:[%s2 + $0x78] sm:$0xff]
        %v822 = vld [vmem:[%s2 + $0x80] sm:$0xff]
        %v823 = vld [vmem:[%s2 + $0x88] sm:$0xff]
        %v824 = vld [vmem:[%s2 + $0x90] sm:$0xff]
        %v825 = vld [vmem:[%s2 + $0x98] sm:$0xff]
        %v826 = vld [vmem:[%s2 + $0xa0] sm:$0xff]
        %v827 = vld [vmem:[%s2 + $0xa8] sm:$0xff]
        %v828 = vld [vmem:[%s2 + $0xb0] sm:$0xff]
        %v829 = vld [vmem:[%s2 + $0xb8] sm:$0xff]
        %v830 = vld [vmem:[%s2 + $0xc0] sm:$0xff]
        %v831 = vld [vmem:[%s2 + $0xc8] sm:$0xff]
        %v832 = vld [vmem:[%s2 + $0xd0] sm:$0xff]
        %v833 = vld [vmem:[%s2 + $0xd8] sm:$0xff]
        %v834 = vld [vmem:[%s2 + $0xe0] sm:$0xff]
        %v835 = vld [vmem:[%s2 + $0xe8] sm:$0xff]
        %v836 = vld [vmem:[%s2 + $0xf0] sm:$0xff]
        %v837 = vld [vmem:[%s2 + $0xf8] sm:$0xff]
        %v838 = vld [vmem:[%s2 + $0x100] sm:$0xff]
        %v839 = vld [vmem:[%s2 + $0x108] sm:$0xff]
        %v840 = vld [vmem:[%s2 + $0x110] sm:$0xff]
        %v841 = vld [vmem:[%s2 + $0x118] sm:$0xff]
        %v842 = vld [vmem:[%s2 + $0x120] sm:$0xff]
        %v843 = vld [vmem:[%s2 + $0x128] sm:$0xff]
        %v844 = vld [vmem:[%s2 + $0x130] sm:$0xff]
        %v845 = vld [vmem:[%s2 + $0x138] sm:$0xff]
        %v846 = vld [vmem:[%s2 + $0x140] sm:$0xff]
        %v847 = vld [vmem:[%s2 + $0x148] sm:$0xff]
        %v848 = vld [vmem:[%s2 + $0x150] sm:$0xff]
        %v849 = vld [vmem:[%s2 + $0x158] sm:$0xff]
        %v850 = vld [vmem:[%s2 + $0x160] sm:$0xff]
        %v851 = vld [vmem:[%s2 + $0x168] sm:$0xff]
        %v852 = vld [vmem:[%s2 + $0x170] sm:$0xff]
        %v853 = vld [vmem:[%s2 + $0x178] sm:$0xff]
        %v854 = vld [vmem:[%s2 + $0x180] sm:$0xff]
        %v855 = vld [vmem:[%s2 + $0x188] sm:$0xff]
        %v856 = vld [vmem:[%s2 + $0x190] sm:$0xff]
        %v857 = vld [vmem:[%s2 + $0x198] sm:$0xff]
        %v858 = vld [vmem:[%s2 + $0x1a0] sm:$0xff]
        %v859 = vld [vmem:[%s2 + $0x1a8] sm:$0xff]
        %v860 = vld [vmem:[%s2 + $0x1b0] sm:$0xff]
        %v861 = vld [vmem:[%s2 + $0x1b8] sm:$0xff]
        %v862 = vld [vmem:[%s2 + $0x1c0] sm:$0xff]
        %v863 = vld [vmem:[%s2 + $0x1c8] sm:$0xff]
        %v864 = vld [vmem:[%s2 + $0x1d0] sm:$0xff]
        %v865 = vld [vmem:[%s2 + $0x1d8] sm:$0xff]
        %v866 = vld [vmem:[%s2 + $0x1e0] sm:$0xff]
        %v867 = vld [vmem:[%s2 + $0x1e8] sm:$0xff]
        %v868 = vld [vmem:[%s2 + $0x1f0] sm:$0xff]
        %v869 = vld [vmem:[%s2 + $0x1f8] sm:$0xff]
        %871 = vset.pattern.permute.xlu0 0
        %872 = vperm.xlu0 %871, %v806
        %v873 = vpop.permute.xlu0 %872
        %876 = vset.pattern.permute.xlu0 0
        %877 = vperm.xlu0 %876, %v807
        %v878 = vpop.permute.xlu0 %877
        %881 = vset.pattern.permute.xlu0 0
        %882 = vperm.xlu0 %881, %v808
        %v883 = vpop.permute.xlu0 %882
        %886 = vset.pattern.permute.xlu0 0
        %887 = vperm.xlu0 %886, %v809
        %v888 = vpop.permute.xlu0 %887
        %891 = vset.pattern.permute.xlu0 0
        %892 = vperm.xlu0 %891, %v810
        %v893 = vpop.permute.xlu0 %892
        %896 = vset.pattern.permute.xlu0 0
        %897 = vperm.xlu0 %896, %v811
        %v898 = vpop.permute.xlu0 %897
        %901 = vset.pattern.permute.xlu0 0
        %902 = vperm.xlu0 %901, %v812
        %v903 = vpop.permute.xlu0 %902
        %906 = vset.pattern.permute.xlu0 0
        %907 = vperm.xlu0 %906, %v813
        %v908 = vpop.permute.xlu0 %907
        %911 = vset.pattern.permute.xlu0 0
        %912 = vperm.xlu0 %911, %v814
        %v913 = vpop.permute.xlu0 %912
        %916 = vset.pattern.permute.xlu0 0
        %917 = vperm.xlu0 %916, %v815
        %v918 = vpop.permute.xlu0 %917
        %921 = vset.pattern.permute.xlu0 0
        %922 = vperm.xlu0 %921, %v816
        %v923 = vpop.permute.xlu0 %922
        %926 = vset.pattern.permute.xlu0 0
        %927 = vperm.xlu0 %926, %v817
        %v928 = vpop.permute.xlu0 %927
        %931 = vset.pattern.permute.xlu0 0
        %932 = vperm.xlu0 %931, %v818
        %v933 = vpop.permute.xlu0 %932
        %936 = vset.pattern.permute.xlu0 0
        %937 = vperm.xlu0 %936, %v819
        %v938 = vpop.permute.xlu0 %937
        %941 = vset.pattern.permute.xlu0 0
        %942 = vperm.xlu0 %941, %v820
        %v943 = vpop.permute.xlu0 %942
        %946 = vset.pattern.permute.xlu0 0
        %947 = vperm.xlu0 %946, %v821
        %v948 = vpop.permute.xlu0 %947
        %951 = vset.pattern.permute.xlu0 0
        %952 = vperm.xlu0 %951, %v822
        %v953 = vpop.permute.xlu0 %952
        %956 = vset.pattern.permute.xlu0 0
        %957 = vperm.xlu0 %956, %v823
        %v958 = vpop.permute.xlu0 %957
        %961 = vset.pattern.permute.xlu0 0
        %962 = vperm.xlu0 %961, %v824
        %v963 = vpop.permute.xlu0 %962
        %966 = vset.pattern.permute.xlu0 0
        %967 = vperm.xlu0 %966, %v825
        %v968 = vpop.permute.xlu0 %967
        %971 = vset.pattern.permute.xlu0 0
        %972 = vperm.xlu0 %971, %v826
        %v973 = vpop.permute.xlu0 %972
        %976 = vset.pattern.permute.xlu0 0
        %977 = vperm.xlu0 %976, %v827
        %v978 = vpop.permute.xlu0 %977
        %981 = vset.pattern.permute.xlu0 0
        %982 = vperm.xlu0 %981, %v828
        %v983 = vpop.permute.xlu0 %982
        %986 = vset.pattern.permute.xlu0 0
        %987 = vperm.xlu0 %986, %v829
        %v988 = vpop.permute.xlu0 %987
        %991 = vset.pattern.permute.xlu0 0
        %992 = vperm.xlu0 %991, %v830
        %v993 = vpop.permute.xlu0 %992
        %996 = vset.pattern.permute.xlu0 0
        %997 = vperm.xlu0 %996, %v831
        %v998 = vpop.permute.xlu0 %997
        %1001 = vset.pattern.permute.xlu0 0
        %1002 = vperm.xlu0 %1001, %v832
        %v1003 = vpop.permute.xlu0 %1002
        %1006 = vset.pattern.permute.xlu0 0
        %1007 = vperm.xlu0 %1006, %v833
        %v1008 = vpop.permute.xlu0 %1007
        %1011 = vset.pattern.permute.xlu0 0
        %1012 = vperm.xlu0 %1011, %v834
        %v1013 = vpop.permute.xlu0 %1012
        %1016 = vset.pattern.permute.xlu0 0
        %1017 = vperm.xlu0 %1016, %v835
        %v1018 = vpop.permute.xlu0 %1017
        %1021 = vset.pattern.permute.xlu0 0
        %1022 = vperm.xlu0 %1021, %v836
        %v1023 = vpop.permute.xlu0 %1022
        %1026 = vset.pattern.permute.xlu0 0
        %1027 = vperm.xlu0 %1026, %v837
        %v1028 = vpop.permute.xlu0 %1027
        %1031 = vset.pattern.permute.xlu0 0
        %1032 = vperm.xlu0 %1031, %v838
        %v1033 = vpop.permute.xlu0 %1032
        %1036 = vset.pattern.permute.xlu0 0
        %1037 = vperm.xlu0 %1036, %v839
        %v1038 = vpop.permute.xlu0 %1037
        %1041 = vset.pattern.permute.xlu0 0
        %1042 = vperm.xlu0 %1041, %v840
        %v1043 = vpop.permute.xlu0 %1042
        %1046 = vset.pattern.permute.xlu0 0
        %1047 = vperm.xlu0 %1046, %v841
        %v1048 = vpop.permute.xlu0 %1047
        %1051 = vset.pattern.permute.xlu0 0
        %1052 = vperm.xlu0 %1051, %v842
        %v1053 = vpop.permute.xlu0 %1052
        %1056 = vset.pattern.permute.xlu0 0
        %1057 = vperm.xlu0 %1056, %v843
        %v1058 = vpop.permute.xlu0 %1057
        %1061 = vset.pattern.permute.xlu0 0
        %1062 = vperm.xlu0 %1061, %v844
        %v1063 = vpop.permute.xlu0 %1062
        %1066 = vset.pattern.permute.xlu0 0
        %1067 = vperm.xlu0 %1066, %v845
        %v1068 = vpop.permute.xlu0 %1067
        %1071 = vset.pattern.permute.xlu0 0
        %1072 = vperm.xlu0 %1071, %v846
        %v1073 = vpop.permute.xlu0 %1072
        %1076 = vset.pattern.permute.xlu0 0
        %1077 = vperm.xlu0 %1076, %v847
        %v1078 = vpop.permute.xlu0 %1077
        %1081 = vset.pattern.permute.xlu0 0
        %1082 = vperm.xlu0 %1081, %v848
        %v1083 = vpop.permute.xlu0 %1082
        %1086 = vset.pattern.permute.xlu0 0
        %1087 = vperm.xlu0 %1086, %v849
        %v1088 = vpop.permute.xlu0 %1087
        %1091 = vset.pattern.permute.xlu0 0
        %1092 = vperm.xlu0 %1091, %v850
        %v1093 = vpop.permute.xlu0 %1092
        %1096 = vset.pattern.permute.xlu0 0
        %1097 = vperm.xlu0 %1096, %v851
        %v1098 = vpop.permute.xlu0 %1097
        %1101 = vset.pattern.permute.xlu0 0
        %1102 = vperm.xlu0 %1101, %v852
        %v1103 = vpop.permute.xlu0 %1102
        %1106 = vset.pattern.permute.xlu0 0
        %1107 = vperm.xlu0 %1106, %v853
        %v1108 = vpop.permute.xlu0 %1107
        %1111 = vset.pattern.permute.xlu0 0
        %1112 = vperm.xlu0 %1111, %v854
        %v1113 = vpop.permute.xlu0 %1112
        %1116 = vset.pattern.permute.xlu0 0
        %1117 = vperm.xlu0 %1116, %v855
        %v1118 = vpop.permute.xlu0 %1117
        %1121 = vset.pattern.permute.xlu0 0
        %1122 = vperm.xlu0 %1121, %v856
        %v1123 = vpop.permute.xlu0 %1122
        %1126 = vset.pattern.permute.xlu0 0
        %1127 = vperm.xlu0 %1126, %v857
        %v1128 = vpop.permute.xlu0 %1127
        %1131 = vset.pattern.permute.xlu0 0
        %1132 = vperm.xlu0 %1131, %v858
        %v1133 = vpop.permute.xlu0 %1132
        %1136 = vset.pattern.permute.xlu0 0
        %1137 = vperm.xlu0 %1136, %v859
        %v1138 = vpop.permute.xlu0 %1137
        %1141 = vset.pattern.permute.xlu0 0
        %1142 = vperm.xlu0 %1141, %v860
        %v1143 = vpop.permute.xlu0 %1142
        %1146 = vset.pattern.permute.xlu0 0
        %1147 = vperm.xlu0 %1146, %v861
        %v1148 = vpop.permute.xlu0 %1147
        %1151 = vset.pattern.permute.xlu0 0
        %1152 = vperm.xlu0 %1151, %v862
        %v1153 = vpop.permute.xlu0 %1152
        %1156 = vset.pattern.permute.xlu0 0
        %1157 = vperm.xlu0 %1156, %v863
        %v1158 = vpop.permute.xlu0 %1157
        %1161 = vset.pattern.permute.xlu0 0
        %1162 = vperm.xlu0 %1161, %v864
        %v1163 = vpop.permute.xlu0 %1162
        %1166 = vset.pattern.permute.xlu0 0
        %1167 = vperm.xlu0 %1166, %v865
        %v1168 = vpop.permute.xlu0 %1167
        %1171 = vset.pattern.permute.xlu0 0
        %1172 = vperm.xlu0 %1171, %v866
        %v1173 = vpop.permute.xlu0 %1172
        %1176 = vset.pattern.permute.xlu0 0
        %1177 = vperm.xlu0 %1176, %v867
        %v1178 = vpop.permute.xlu0 %1177
        %1181 = vset.pattern.permute.xlu0 0
        %1182 = vperm.xlu0 %1181, %v868
        %v1183 = vpop.permute.xlu0 %1182
        %1186 = vset.pattern.permute.xlu0 0
        %1187 = vperm.xlu0 %1186, %v869
        %v1188 = vpop.permute.xlu0 %1187
        %v1190 = vsub.f32 %v873, %v552
        %v1191 = vsub.f32 %v878, %v555
        %v1192 = vsub.f32 %v883, %v560
        %v1193 = vsub.f32 %v888, %v563
        %v1194 = vsub.f32 %v893, %v568
        %v1195 = vsub.f32 %v898, %v571
        %v1196 = vsub.f32 %v903, %v576
        %v1197 = vsub.f32 %v908, %v579
        %v1198 = vsub.f32 %v913, %v584
        %v1199 = vsub.f32 %v918, %v587
        %v1200 = vsub.f32 %v923, %v592
        %v1201 = vsub.f32 %v928, %v595
        %v1202 = vsub.f32 %v933, %v600
        %v1203 = vsub.f32 %v938, %v603
        %v1204 = vsub.f32 %v943, %v608
        %v1205 = vsub.f32 %v948, %v611
        %v1206 = vsub.f32 %v953, %v616
        %v1207 = vsub.f32 %v958, %v619
        %v1208 = vsub.f32 %v963, %v624
        %v1209 = vsub.f32 %v968, %v627
        %v1210 = vsub.f32 %v973, %v632
        %v1211 = vsub.f32 %v978, %v635
        %v1212 = vsub.f32 %v983, %v640
        %v1213 = vsub.f32 %v988, %v643
        %v1214 = vsub.f32 %v993, %v648
        %v1215 = vsub.f32 %v998, %v651
        %v1216 = vsub.f32 %v1003, %v656
        %v1217 = vsub.f32 %v1008, %v659
        %v1218 = vsub.f32 %v1013, %v664
        %v1219 = vsub.f32 %v1018, %v667
        %v1220 = vsub.f32 %v1023, %v672
        %v1221 = vsub.f32 %v1028, %v675
        %v1222 = vsub.f32 %v1033, %v680
        %v1223 = vsub.f32 %v1038, %v683
        %v1224 = vsub.f32 %v1043, %v688
        %v1225 = vsub.f32 %v1048, %v691
        %v1226 = vsub.f32 %v1053, %v696
        %v1227 = vsub.f32 %v1058, %v699
        %v1228 = vsub.f32 %v1063, %v704
        %v1229 = vsub.f32 %v1068, %v707
        %v1230 = vsub.f32 %v1073, %v712
        %v1231 = vsub.f32 %v1078, %v715
        %v1232 = vsub.f32 %v1083, %v720
        %v1233 = vsub.f32 %v1088, %v723
        %v1234 = vsub.f32 %v1093, %v728
        %v1235 = vsub.f32 %v1098, %v731
        %v1236 = vsub.f32 %v1103, %v736
        %v1237 = vsub.f32 %v1108, %v739
        %v1238 = vsub.f32 %v1113, %v744
        %v1239 = vsub.f32 %v1118, %v747
        %v1240 = vsub.f32 %v1123, %v752
        %v1241 = vsub.f32 %v1128, %v755
        %v1242 = vsub.f32 %v1133, %v760
        %v1243 = vsub.f32 %v1138, %v763
        %v1244 = vsub.f32 %v1143, %v768
        %v1245 = vsub.f32 %v1148, %v771
        %v1246 = vsub.f32 %v1153, %v776
        %v1247 = vsub.f32 %v1158, %v779
        %v1248 = vsub.f32 %v1163, %v784
        %v1249 = vsub.f32 %v1168, %v787
        %v1250 = vsub.f32 %v1173, %v792
        %v1251 = vsub.f32 %v1178, %v795
        %v1252 = vsub.f32 %v1183, %v800
        %v1253 = vsub.f32 %v1188, %v803
        %v1254 = vlaneseq
        %v1255 = vshrl.u32 %v1254, 7
        %v1256 = vadd.s32 %v1255, 8
        %v1257 = vadd.s32 %v1255, 16
        %v1258 = vadd.s32 %v1255, 24
        %v1259 = vadd.s32 %v1255, 32
        %v1260 = vadd.s32 %v1255, 40
        %v1261 = vadd.s32 %v1255, 48
        %v1262 = vadd.s32 %v1255, 56
        %v1263 = vadd.s32 %v1255, 64
        %v1264 = vadd.s32 %v1255, 72
        %v1265 = vadd.s32 %v1255, 80
        %v1266 = vadd.s32 %v1255, 88
        %v1267 = vadd.s32 %v1255, 96
        %v1268 = vadd.s32 %v1255, 104
        %v1269 = vadd.s32 %v1255, 112
        %v1270 = vadd.s32 %v1255, 120
        %v1271 = vadd.s32 %v1255, 128
        %v1272 = vadd.s32 %v1255, 136
        %v1273 = vadd.s32 %v1255, 144
        %v1274 = vadd.s32 %v1255, 152
        %v1275 = vadd.s32 %v1255, 160
        %v1276 = vadd.s32 %v1255, 168
        %v1277 = vadd.s32 %v1255, 176
        %v1278 = vadd.s32 %v1255, 184
        %v1279 = vadd.s32 %v1255, 192
        %v1280 = vadd.s32 %v1255, 200
        %v1281 = vadd.s32 %v1255, 208
        %v1282 = vadd.s32 %v1255, 216
        %v1283 = vadd.s32 %v1255, 224
        %v1284 = vadd.s32 %v1255, 232
        %v1285 = vadd.s32 %v1255, 240
        %v1286 = vadd.s32 %v1255, 248
        %v1287 = vadd.s32 %v1255, 256
        %v1288 = vadd.s32 %v1255, 264
        %v1289 = vadd.s32 %v1255, 272
        %v1290 = vadd.s32 %v1255, 280
        %v1291 = vadd.s32 %v1255, 288
        %v1292 = vadd.s32 %v1255, 296
        %v1293 = vadd.s32 %v1255, 304
        %v1294 = vadd.s32 %v1255, 312
        %v1295 = vadd.s32 %v1255, 320
        %v1296 = vadd.s32 %v1255, 328
        %v1297 = vadd.s32 %v1255, 336
        %v1298 = vadd.s32 %v1255, 344
        %v1299 = vadd.s32 %v1255, 352
        %v1300 = vadd.s32 %v1255, 360
        %v1301 = vadd.s32 %v1255, 368
        %v1302 = vadd.s32 %v1255, 376
        %v1303 = vadd.s32 %v1255, 384
        %v1304 = vadd.s32 %v1255, 392
        %v1305 = vadd.s32 %v1255, 400
        %v1306 = vadd.s32 %v1255, 408
        %v1307 = vadd.s32 %v1255, 416
        %v1308 = vadd.s32 %v1255, 424
        %v1309 = vadd.s32 %v1255, 432
        %v1310 = vadd.s32 %v1255, 440
        %v1311 = vadd.s32 %v1255, 448
        %v1312 = vadd.s32 %v1255, 456
        %v1313 = vadd.s32 %v1255, 464
        %v1314 = vadd.s32 %v1255, 472
        %v1315 = vadd.s32 %v1255, 480
        %v1316 = vadd.s32 %v1255, 488
        %v1317 = vadd.s32 %v1255, 496
        %v1318 = vadd.s32 %v1255, 504
        %v1319 = vmin.f32 %v1190, %v1194
        %v1320 = vmin.f32 %v1191, %v1195
        %v1321 = vmin.f32 %v1192, %v1196
        %v1322 = vmin.f32 %v1193, %v1197
        %v1323 = vmin.f32 %v1319, %v1198
        %v1324 = vmin.f32 %v1320, %v1199
        %v1325 = vmin.f32 %v1321, %v1200
        %v1326 = vmin.f32 %v1322, %v1201
        %v1327 = vmin.f32 %v1323, %v1202
        %v1328 = vmin.f32 %v1324, %v1203
        %v1329 = vmin.f32 %v1325, %v1204
        %v1330 = vmin.f32 %v1326, %v1205
        %v1331 = vmin.f32 %v1327, %v1206
        %v1332 = vmin.f32 %v1328, %v1207
        %v1333 = vmin.f32 %v1329, %v1208
        %v1334 = vmin.f32 %v1330, %v1209
        %v1335 = vmin.f32 %v1331, %v1210
        %v1336 = vmin.f32 %v1332, %v1211
        %v1337 = vmin.f32 %v1333, %v1212
        %v1338 = vmin.f32 %v1334, %v1213
        %v1339 = vmin.f32 %v1335, %v1214
        %v1340 = vmin.f32 %v1336, %v1215
        %v1341 = vmin.f32 %v1337, %v1216
        %v1342 = vmin.f32 %v1338, %v1217
        %v1343 = vmin.f32 %v1339, %v1218
        %v1344 = vmin.f32 %v1340, %v1219
        %v1345 = vmin.f32 %v1341, %v1220
        %v1346 = vmin.f32 %v1342, %v1221
        %v1347 = vmin.f32 %v1343, %v1222
        %v1348 = vmin.f32 %v1344, %v1223
        %v1349 = vmin.f32 %v1345, %v1224
        %v1350 = vmin.f32 %v1346, %v1225
        %v1351 = vmin.f32 %v1347, %v1226
        %v1352 = vmin.f32 %v1348, %v1227
        %v1353 = vmin.f32 %v1349, %v1228
        %v1354 = vmin.f32 %v1350, %v1229
        %v1355 = vmin.f32 %v1351, %v1230
        %v1356 = vmin.f32 %v1352, %v1231
        %v1357 = vmin.f32 %v1353, %v1232
        %v1358 = vmin.f32 %v1354, %v1233
        %v1359 = vmin.f32 %v1355, %v1234
        %v1360 = vmin.f32 %v1356, %v1235
        %v1361 = vmin.f32 %v1357, %v1236
        %v1362 = vmin.f32 %v1358, %v1237
        %v1363 = vmin.f32 %v1359, %v1238
        %v1364 = vmin.f32 %v1360, %v1239
        %v1365 = vmin.f32 %v1361, %v1240
        %v1366 = vmin.f32 %v1362, %v1241
        %v1367 = vmin.f32 %v1363, %v1242
        %v1368 = vmin.f32 %v1364, %v1243
        %v1369 = vmin.f32 %v1365, %v1244
        %v1370 = vmin.f32 %v1366, %v1245
        %v1371 = vmin.f32 %v1367, %v1246
        %v1372 = vmin.f32 %v1368, %v1247
        %v1373 = vmin.f32 %v1369, %v1248
        %v1374 = vmin.f32 %v1370, %v1249
        %v1375 = vmin.f32 %v1371, %v1250
        %v1376 = vmin.f32 %v1372, %v1251
        %v1377 = vmin.f32 %v1373, %v1252
        %v1378 = vmin.f32 %v1374, %v1253
        %v1379 = vmin.f32 %v1375, %v1376
        %v1380 = vmin.f32 %v1377, %v1378
        %v1381 = vmin.f32 %v1379, %v1380
        %v1382 = vrot.slane %v1381, 4
        %v1383 = vmin.f32 %v1381, %v1382
        %v1384 = vrot.slane %v1383, 2
        %v1385 = vmin.f32 %v1383, %v1384
        %v1386 = vrot.slane %v1385, 1
        %v1387 = vmin.f32 %v1385, %v1386
        %vm1388 = vcmp.eq.f32.partialorder %v1190, %v1387
        %vm1389 = vcmp.eq.f32.partialorder %v1191, %v1387
        %vm1390 = vcmp.eq.f32.partialorder %v1192, %v1387
        %vm1391 = vcmp.eq.f32.partialorder %v1193, %v1387
        %vm1392 = vcmp.eq.f32.partialorder %v1194, %v1387
        %vm1393 = vcmp.eq.f32.partialorder %v1195, %v1387
        %vm1394 = vcmp.eq.f32.partialorder %v1196, %v1387
        %vm1395 = vcmp.eq.f32.partialorder %v1197, %v1387
        %vm1396 = vcmp.eq.f32.partialorder %v1198, %v1387
        %vm1397 = vcmp.eq.f32.partialorder %v1199, %v1387
        %vm1398 = vcmp.eq.f32.partialorder %v1200, %v1387
        %vm1399 = vcmp.eq.f32.partialorder %v1201, %v1387
        %vm1400 = vcmp.eq.f32.partialorder %v1202, %v1387
        %vm1401 = vcmp.eq.f32.partialorder %v1203, %v1387
        %vm1402 = vcmp.eq.f32.partialorder %v1204, %v1387
        %vm1403 = vcmp.eq.f32.partialorder %v1205, %v1387
        %vm1404 = vcmp.eq.f32.partialorder %v1206, %v1387
        %vm1405 = vcmp.eq.f32.partialorder %v1207, %v1387
        %vm1406 = vcmp.eq.f32.partialorder %v1208, %v1387
        %vm1407 = vcmp.eq.f32.partialorder %v1209, %v1387
        %vm1408 = vcmp.eq.f32.partialorder %v1210, %v1387
        %vm1409 = vcmp.eq.f32.partialorder %v1211, %v1387
        %vm1410 = vcmp.eq.f32.partialorder %v1212, %v1387
        %vm1411 = vcmp.eq.f32.partialorder %v1213, %v1387
        %vm1412 = vcmp.eq.f32.partialorder %v1214, %v1387
        %vm1413 = vcmp.eq.f32.partialorder %v1215, %v1387
        %vm1414 = vcmp.eq.f32.partialorder %v1216, %v1387
        %vm1415 = vcmp.eq.f32.partialorder %v1217, %v1387
        %vm1416 = vcmp.eq.f32.partialorder %v1218, %v1387
        %vm1417 = vcmp.eq.f32.partialorder %v1219, %v1387
        %vm1418 = vcmp.eq.f32.partialorder %v1220, %v1387
        %vm1419 = vcmp.eq.f32.partialorder %v1221, %v1387
        %vm1420 = vcmp.eq.f32.partialorder %v1222, %v1387
        %vm1421 = vcmp.eq.f32.partialorder %v1223, %v1387
        %vm1422 = vcmp.eq.f32.partialorder %v1224, %v1387
        %vm1423 = vcmp.eq.f32.partialorder %v1225, %v1387
        %vm1424 = vcmp.eq.f32.partialorder %v1226, %v1387
        %vm1425 = vcmp.eq.f32.partialorder %v1227, %v1387
        %vm1426 = vcmp.eq.f32.partialorder %v1228, %v1387
        %vm1427 = vcmp.eq.f32.partialorder %v1229, %v1387
        %vm1428 = vcmp.eq.f32.partialorder %v1230, %v1387
        %vm1429 = vcmp.eq.f32.partialorder %v1231, %v1387
        %vm1430 = vcmp.eq.f32.partialorder %v1232, %v1387
        %vm1431 = vcmp.eq.f32.partialorder %v1233, %v1387
        %vm1432 = vcmp.eq.f32.partialorder %v1234, %v1387
        %vm1433 = vcmp.eq.f32.partialorder %v1235, %v1387
        %vm1434 = vcmp.eq.f32.partialorder %v1236, %v1387
        %vm1435 = vcmp.eq.f32.partialorder %v1237, %v1387
        %vm1436 = vcmp.eq.f32.partialorder %v1238, %v1387
        %vm1437 = vcmp.eq.f32.partialorder %v1239, %v1387
        %vm1438 = vcmp.eq.f32.partialorder %v1240, %v1387
        %vm1439 = vcmp.eq.f32.partialorder %v1241, %v1387
        %vm1440 = vcmp.eq.f32.partialorder %v1242, %v1387
        %vm1441 = vcmp.eq.f32.partialorder %v1243, %v1387
        %vm1442 = vcmp.eq.f32.partialorder %v1244, %v1387
        %vm1443 = vcmp.eq.f32.partialorder %v1245, %v1387
        %vm1444 = vcmp.eq.f32.partialorder %v1246, %v1387
        %vm1445 = vcmp.eq.f32.partialorder %v1247, %v1387
        %vm1446 = vcmp.eq.f32.partialorder %v1248, %v1387
        %vm1447 = vcmp.eq.f32.partialorder %v1249, %v1387
        %vm1448 = vcmp.eq.f32.partialorder %v1250, %v1387
        %vm1449 = vcmp.eq.f32.partialorder %v1251, %v1387
        %vm1450 = vcmp.eq.f32.partialorder %v1252, %v1387
        %vm1451 = vcmp.eq.f32.partialorder %v1253, %v1387
        %v1452 = vsel %vm1388, %v1255, 512
        %v1453 = vsel %vm1389, %v1256, 512
        %v1454 = vsel %vm1390, %v1257, 512
        %v1455 = vsel %vm1391, %v1258, 512
        %v1456 = vsel %vm1392, %v1259, 512
        %v1457 = vsel %vm1393, %v1260, 512
        %v1458 = vsel %vm1394, %v1261, 512
        %v1459 = vsel %vm1395, %v1262, 512
        %v1460 = vsel %vm1396, %v1263, 512
        %v1461 = vsel %vm1397, %v1264, 512
        %v1462 = vsel %vm1398, %v1265, 512
        %v1463 = vsel %vm1399, %v1266, 512
        %v1464 = vsel %vm1400, %v1267, 512
        %v1465 = vsel %vm1401, %v1268, 512
        %v1466 = vsel %vm1402, %v1269, 512
        %v1467 = vsel %vm1403, %v1270, 512
        %v1468 = vsel %vm1404, %v1271, 512
        %v1469 = vsel %vm1405, %v1272, 512
        %v1470 = vsel %vm1406, %v1273, 512
        %v1471 = vsel %vm1407, %v1274, 512
        %v1472 = vsel %vm1408, %v1275, 512
        %v1473 = vsel %vm1409, %v1276, 512
        %v1474 = vsel %vm1410, %v1277, 512
        %v1475 = vsel %vm1411, %v1278, 512
        %v1476 = vsel %vm1412, %v1279, 512
        %v1477 = vsel %vm1413, %v1280, 512
        %v1478 = vsel %vm1414, %v1281, 512
        %v1479 = vsel %vm1415, %v1282, 512
        %v1480 = vsel %vm1416, %v1283, 512
        %v1481 = vsel %vm1417, %v1284, 512
        %v1482 = vsel %vm1418, %v1285, 512
        %v1483 = vsel %vm1419, %v1286, 512
        %v1484 = vsel %vm1420, %v1287, 512
        %v1485 = vsel %vm1421, %v1288, 512
        %v1486 = vsel %vm1422, %v1289, 512
        %v1487 = vsel %vm1423, %v1290, 512
        %v1488 = vsel %vm1424, %v1291, 512
        %v1489 = vsel %vm1425, %v1292, 512
        %v1490 = vsel %vm1426, %v1293, 512
        %v1491 = vsel %vm1427, %v1294, 512
        %v1492 = vsel %vm1428, %v1295, 512
        %v1493 = vsel %vm1429, %v1296, 512
        %v1494 = vsel %vm1430, %v1297, 512
        %v1495 = vsel %vm1431, %v1298, 512
        %v1496 = vsel %vm1432, %v1299, 512
        %v1497 = vsel %vm1433, %v1300, 512
        %v1498 = vsel %vm1434, %v1301, 512
        %v1499 = vsel %vm1435, %v1302, 512
        %v1500 = vsel %vm1436, %v1303, 512
        %v1501 = vsel %vm1437, %v1304, 512
        %v1502 = vsel %vm1438, %v1305, 512
        %v1503 = vsel %vm1439, %v1306, 512
        %v1504 = vsel %vm1440, %v1307, 512
        %v1505 = vsel %vm1441, %v1308, 512
        %v1506 = vsel %vm1442, %v1309, 512
        %v1507 = vsel %vm1443, %v1310, 512
        %v1508 = vsel %vm1444, %v1311, 512
        %v1509 = vsel %vm1445, %v1312, 512
        %v1510 = vsel %vm1446, %v1313, 512
        %v1511 = vsel %vm1447, %v1314, 512
        %v1512 = vsel %vm1448, %v1315, 512
        %v1513 = vsel %vm1449, %v1316, 512
        %v1514 = vsel %vm1450, %v1317, 512
        %v1515 = vsel %vm1451, %v1318, 512
        %vm1516 = vcmp.lt.s32.totalorder %v1452, %v1456
        %v1517 = vsel %vm1516, %v1452, %v1456
        %vm1518 = vcmp.lt.s32.totalorder %v1453, %v1457
        %v1519 = vsel %vm1518, %v1453, %v1457
        %vm1520 = vcmp.lt.s32.totalorder %v1454, %v1458
        %v1521 = vsel %vm1520, %v1454, %v1458
        %vm1522 = vcmp.lt.s32.totalorder %v1455, %v1459
        %v1523 = vsel %vm1522, %v1455, %v1459
        %vm1524 = vcmp.lt.s32.totalorder %v1517, %v1460
        %v1525 = vsel %vm1524, %v1517, %v1460
        %vm1526 = vcmp.lt.s32.totalorder %v1519, %v1461
        %v1527 = vsel %vm1526, %v1519, %v1461
        %vm1528 = vcmp.lt.s32.totalorder %v1521, %v1462
        %v1529 = vsel %vm1528, %v1521, %v1462
        %vm1530 = vcmp.lt.s32.totalorder %v1523, %v1463
        %v1531 = vsel %vm1530, %v1523, %v1463
        %vm1532 = vcmp.lt.s32.totalorder %v1525, %v1464
        %v1533 = vsel %vm1532, %v1525, %v1464
        %vm1534 = vcmp.lt.s32.totalorder %v1527, %v1465
        %v1535 = vsel %vm1534, %v1527, %v1465
        %vm1536 = vcmp.lt.s32.totalorder %v1529, %v1466
        %v1537 = vsel %vm1536, %v1529, %v1466
        %vm1538 = vcmp.lt.s32.totalorder %v1531, %v1467
        %v1539 = vsel %vm1538, %v1531, %v1467
        %vm1540 = vcmp.lt.s32.totalorder %v1533, %v1468
        %v1541 = vsel %vm1540, %v1533, %v1468
        %vm1542 = vcmp.lt.s32.totalorder %v1535, %v1469
        %v1543 = vsel %vm1542, %v1535, %v1469
        %vm1544 = vcmp.lt.s32.totalorder %v1537, %v1470
        %v1545 = vsel %vm1544, %v1537, %v1470
        %vm1546 = vcmp.lt.s32.totalorder %v1539, %v1471
        %v1547 = vsel %vm1546, %v1539, %v1471
        %vm1548 = vcmp.lt.s32.totalorder %v1541, %v1472
        %v1549 = vsel %vm1548, %v1541, %v1472
        %vm1550 = vcmp.lt.s32.totalorder %v1543, %v1473
        %v1551 = vsel %vm1550, %v1543, %v1473
        %vm1552 = vcmp.lt.s32.totalorder %v1545, %v1474
        %v1553 = vsel %vm1552, %v1545, %v1474
        %vm1554 = vcmp.lt.s32.totalorder %v1547, %v1475
        %v1555 = vsel %vm1554, %v1547, %v1475
        %vm1556 = vcmp.lt.s32.totalorder %v1549, %v1476
        %v1557 = vsel %vm1556, %v1549, %v1476
        %vm1558 = vcmp.lt.s32.totalorder %v1551, %v1477
        %v1559 = vsel %vm1558, %v1551, %v1477
        %vm1560 = vcmp.lt.s32.totalorder %v1553, %v1478
        %v1561 = vsel %vm1560, %v1553, %v1478
        %vm1562 = vcmp.lt.s32.totalorder %v1555, %v1479
        %v1563 = vsel %vm1562, %v1555, %v1479
        %vm1564 = vcmp.lt.s32.totalorder %v1557, %v1480
        %v1565 = vsel %vm1564, %v1557, %v1480
        %vm1566 = vcmp.lt.s32.totalorder %v1559, %v1481
        %v1567 = vsel %vm1566, %v1559, %v1481
        %vm1568 = vcmp.lt.s32.totalorder %v1561, %v1482
        %v1569 = vsel %vm1568, %v1561, %v1482
        %vm1570 = vcmp.lt.s32.totalorder %v1563, %v1483
        %v1571 = vsel %vm1570, %v1563, %v1483
        %vm1572 = vcmp.lt.s32.totalorder %v1565, %v1484
        %v1573 = vsel %vm1572, %v1565, %v1484
        %vm1574 = vcmp.lt.s32.totalorder %v1567, %v1485
        %v1575 = vsel %vm1574, %v1567, %v1485
        %vm1576 = vcmp.lt.s32.totalorder %v1569, %v1486
        %v1577 = vsel %vm1576, %v1569, %v1486
        %vm1578 = vcmp.lt.s32.totalorder %v1571, %v1487
        %v1579 = vsel %vm1578, %v1571, %v1487
        %vm1580 = vcmp.lt.s32.totalorder %v1573, %v1488
        %v1581 = vsel %vm1580, %v1573, %v1488
        %vm1582 = vcmp.lt.s32.totalorder %v1575, %v1489
        %v1583 = vsel %vm1582, %v1575, %v1489
        %vm1584 = vcmp.lt.s32.totalorder %v1577, %v1490
        %v1585 = vsel %vm1584, %v1577, %v1490
        %vm1586 = vcmp.lt.s32.totalorder %v1579, %v1491
        %v1587 = vsel %vm1586, %v1579, %v1491
        %vm1588 = vcmp.lt.s32.totalorder %v1581, %v1492
        %v1589 = vsel %vm1588, %v1581, %v1492
        %vm1590 = vcmp.lt.s32.totalorder %v1583, %v1493
        %v1591 = vsel %vm1590, %v1583, %v1493
        %vm1592 = vcmp.lt.s32.totalorder %v1585, %v1494
        %v1593 = vsel %vm1592, %v1585, %v1494
        %vm1594 = vcmp.lt.s32.totalorder %v1587, %v1495
        %v1595 = vsel %vm1594, %v1587, %v1495
        %vm1596 = vcmp.lt.s32.totalorder %v1589, %v1496
        %v1597 = vsel %vm1596, %v1589, %v1496
        %vm1598 = vcmp.lt.s32.totalorder %v1591, %v1497
        %v1599 = vsel %vm1598, %v1591, %v1497
        %vm1600 = vcmp.lt.s32.totalorder %v1593, %v1498
        %v1601 = vsel %vm1600, %v1593, %v1498
        %vm1602 = vcmp.lt.s32.totalorder %v1595, %v1499
        %v1603 = vsel %vm1602, %v1595, %v1499
        %vm1604 = vcmp.lt.s32.totalorder %v1597, %v1500
        %v1605 = vsel %vm1604, %v1597, %v1500
        %vm1606 = vcmp.lt.s32.totalorder %v1599, %v1501
        %v1607 = vsel %vm1606, %v1599, %v1501
        %vm1608 = vcmp.lt.s32.totalorder %v1601, %v1502
        %v1609 = vsel %vm1608, %v1601, %v1502
        %vm1610 = vcmp.lt.s32.totalorder %v1603, %v1503
        %v1611 = vsel %vm1610, %v1603, %v1503
        %vm1612 = vcmp.lt.s32.totalorder %v1605, %v1504
        %v1613 = vsel %vm1612, %v1605, %v1504
        %vm1614 = vcmp.lt.s32.totalorder %v1607, %v1505
        %v1615 = vsel %vm1614, %v1607, %v1505
        %vm1616 = vcmp.lt.s32.totalorder %v1609, %v1506
        %v1617 = vsel %vm1616, %v1609, %v1506
        %vm1618 = vcmp.lt.s32.totalorder %v1611, %v1507
        %v1619 = vsel %vm1618, %v1611, %v1507
        %vm1620 = vcmp.lt.s32.totalorder %v1613, %v1508
        %v1621 = vsel %vm1620, %v1613, %v1508
        %vm1622 = vcmp.lt.s32.totalorder %v1615, %v1509
        %v1623 = vsel %vm1622, %v1615, %v1509
        %vm1624 = vcmp.lt.s32.totalorder %v1617, %v1510
        %v1625 = vsel %vm1624, %v1617, %v1510
        %vm1626 = vcmp.lt.s32.totalorder %v1619, %v1511
        %v1627 = vsel %vm1626, %v1619, %v1511
        %vm1628 = vcmp.lt.s32.totalorder %v1621, %v1512
        %v1629 = vsel %vm1628, %v1621, %v1512
        %vm1630 = vcmp.lt.s32.totalorder %v1623, %v1513
        %v1631 = vsel %vm1630, %v1623, %v1513
        %vm1632 = vcmp.lt.s32.totalorder %v1625, %v1514
        %v1633 = vsel %vm1632, %v1625, %v1514
        %vm1634 = vcmp.lt.s32.totalorder %v1627, %v1515
        %v1635 = vsel %vm1634, %v1627, %v1515
        %vm1636 = vcmp.lt.s32.totalorder %v1629, %v1631
        %v1637 = vsel %vm1636, %v1629, %v1631
        %vm1638 = vcmp.lt.s32.totalorder %v1633, %v1635
        %v1639 = vsel %vm1638, %v1633, %v1635
        %vm1640 = vcmp.lt.s32.totalorder %v1637, %v1639
        %v1641 = vsel %vm1640, %v1637, %v1639
        %v1642 = vrot.slane %v1641, 4
        %vm1643 = vcmp.lt.s32.totalorder %v1641, %v1642
        %v1644 = vsel %vm1643, %v1641, %v1642
        %v1645 = vrot.slane %v1644, 2
        %vm1646 = vcmp.lt.s32.totalorder %v1644, %v1645
        %v1647 = vsel %vm1646, %v1644, %v1645
        %v1648 = vrot.slane %v1647, 1
        %vm1649 = vcmp.lt.s32.totalorder %v1647, %v1648
        %v1650 = vsel %vm1649, %v1647, %v1648
        %vm1651 = vcmp.eq.s32.totalorder %v1255, %v1650
        %vm1652 = vcmp.eq.s32.totalorder %v1256, %v1650
        %vm1653 = vcmp.eq.s32.totalorder %v1257, %v1650
        %vm1654 = vcmp.eq.s32.totalorder %v1258, %v1650
        %vm1655 = vcmp.eq.s32.totalorder %v1259, %v1650
        %vm1656 = vcmp.eq.s32.totalorder %v1260, %v1650
        %vm1657 = vcmp.eq.s32.totalorder %v1261, %v1650
        %vm1658 = vcmp.eq.s32.totalorder %v1262, %v1650
        %vm1659 = vcmp.eq.s32.totalorder %v1263, %v1650
        %vm1660 = vcmp.eq.s32.totalorder %v1264, %v1650
        %vm1661 = vcmp.eq.s32.totalorder %v1265, %v1650
        %vm1662 = vcmp.eq.s32.totalorder %v1266, %v1650
        %vm1663 = vcmp.eq.s32.totalorder %v1267, %v1650
        %vm1664 = vcmp.eq.s32.totalorder %v1268, %v1650
        %vm1665 = vcmp.eq.s32.totalorder %v1269, %v1650
        %vm1666 = vcmp.eq.s32.totalorder %v1270, %v1650
        %vm1667 = vcmp.eq.s32.totalorder %v1271, %v1650
        %vm1668 = vcmp.eq.s32.totalorder %v1272, %v1650
        %vm1669 = vcmp.eq.s32.totalorder %v1273, %v1650
        %vm1670 = vcmp.eq.s32.totalorder %v1274, %v1650
        %vm1671 = vcmp.eq.s32.totalorder %v1275, %v1650
        %vm1672 = vcmp.eq.s32.totalorder %v1276, %v1650
        %vm1673 = vcmp.eq.s32.totalorder %v1277, %v1650
        %vm1674 = vcmp.eq.s32.totalorder %v1278, %v1650
        %vm1675 = vcmp.eq.s32.totalorder %v1279, %v1650
        %vm1676 = vcmp.eq.s32.totalorder %v1280, %v1650
        %vm1677 = vcmp.eq.s32.totalorder %v1281, %v1650
        %vm1678 = vcmp.eq.s32.totalorder %v1282, %v1650
        %vm1679 = vcmp.eq.s32.totalorder %v1283, %v1650
        %vm1680 = vcmp.eq.s32.totalorder %v1284, %v1650
        %vm1681 = vcmp.eq.s32.totalorder %v1285, %v1650
        %vm1682 = vcmp.eq.s32.totalorder %v1286, %v1650
        %vm1683 = vcmp.eq.s32.totalorder %v1287, %v1650
        %vm1684 = vcmp.eq.s32.totalorder %v1288, %v1650
        %vm1685 = vcmp.eq.s32.totalorder %v1289, %v1650
        %vm1686 = vcmp.eq.s32.totalorder %v1290, %v1650
        %vm1687 = vcmp.eq.s32.totalorder %v1291, %v1650
        %vm1688 = vcmp.eq.s32.totalorder %v1292, %v1650
        %vm1689 = vcmp.eq.s32.totalorder %v1293, %v1650
        %vm1690 = vcmp.eq.s32.totalorder %v1294, %v1650
        %vm1691 = vcmp.eq.s32.totalorder %v1295, %v1650
        %vm1692 = vcmp.eq.s32.totalorder %v1296, %v1650
        %vm1693 = vcmp.eq.s32.totalorder %v1297, %v1650
        %vm1694 = vcmp.eq.s32.totalorder %v1298, %v1650
        %vm1695 = vcmp.eq.s32.totalorder %v1299, %v1650
        %vm1696 = vcmp.eq.s32.totalorder %v1300, %v1650
        %vm1697 = vcmp.eq.s32.totalorder %v1301, %v1650
        %vm1698 = vcmp.eq.s32.totalorder %v1302, %v1650
        %vm1699 = vcmp.eq.s32.totalorder %v1303, %v1650
        %vm1700 = vcmp.eq.s32.totalorder %v1304, %v1650
        %vm1701 = vcmp.eq.s32.totalorder %v1305, %v1650
        %vm1702 = vcmp.eq.s32.totalorder %v1306, %v1650
        %vm1703 = vcmp.eq.s32.totalorder %v1307, %v1650
        %vm1704 = vcmp.eq.s32.totalorder %v1308, %v1650
        %vm1705 = vcmp.eq.s32.totalorder %v1309, %v1650
        %vm1706 = vcmp.eq.s32.totalorder %v1310, %v1650
        %vm1707 = vcmp.eq.s32.totalorder %v1311, %v1650
        %vm1708 = vcmp.eq.s32.totalorder %v1312, %v1650
        %vm1709 = vcmp.eq.s32.totalorder %v1313, %v1650
        %vm1710 = vcmp.eq.s32.totalorder %v1314, %v1650
        %vm1711 = vcmp.eq.s32.totalorder %v1315, %v1650
        %vm1712 = vcmp.eq.s32.totalorder %v1316, %v1650
        %vm1713 = vcmp.eq.s32.totalorder %v1317, %v1650
        %vm1714 = vcmp.eq.s32.totalorder %v1318, %v1650
        %v1715 = vsel %vm1651, 1, 0
        %v1716 = vsel %vm1652, 1, 0
        %v1717 = vsel %vm1653, 1, 0
        %v1718 = vsel %vm1654, 1, 0
        %v1719 = vsel %vm1655, 1, 0
        %v1720 = vsel %vm1656, 1, 0
        %v1721 = vsel %vm1657, 1, 0
        %v1722 = vsel %vm1658, 1, 0
        %v1723 = vsel %vm1659, 1, 0
        %v1724 = vsel %vm1660, 1, 0
        %v1725 = vsel %vm1661, 1, 0
        %v1726 = vsel %vm1662, 1, 0
        %v1727 = vsel %vm1663, 1, 0
        %v1728 = vsel %vm1664, 1, 0
        %v1729 = vsel %vm1665, 1, 0
        %v1730 = vsel %vm1666, 1, 0
        %v1731 = vsel %vm1667, 1, 0
        %v1732 = vsel %vm1668, 1, 0
        %v1733 = vsel %vm1669, 1, 0
        %v1734 = vsel %vm1670, 1, 0
        %v1735 = vsel %vm1671, 1, 0
        %v1736 = vsel %vm1672, 1, 0
        %v1737 = vsel %vm1673, 1, 0
        %v1738 = vsel %vm1674, 1, 0
        %v1739 = vsel %vm1675, 1, 0
        %v1740 = vsel %vm1676, 1, 0
        %v1741 = vsel %vm1677, 1, 0
        %v1742 = vsel %vm1678, 1, 0
        %v1743 = vsel %vm1679, 1, 0
        %v1744 = vsel %vm1680, 1, 0
        %v1745 = vsel %vm1681, 1, 0
        %v1746 = vsel %vm1682, 1, 0
        %v1747 = vsel %vm1683, 1, 0
        %v1748 = vsel %vm1684, 1, 0
        %v1749 = vsel %vm1685, 1, 0
        %v1750 = vsel %vm1686, 1, 0
        %v1751 = vsel %vm1687, 1, 0
        %v1752 = vsel %vm1688, 1, 0
        %v1753 = vsel %vm1689, 1, 0
        %v1754 = vsel %vm1690, 1, 0
        %v1755 = vsel %vm1691, 1, 0
        %v1756 = vsel %vm1692, 1, 0
        %v1757 = vsel %vm1693, 1, 0
        %v1758 = vsel %vm1694, 1, 0
        %v1759 = vsel %vm1695, 1, 0
        %v1760 = vsel %vm1696, 1, 0
        %v1761 = vsel %vm1697, 1, 0
        %v1762 = vsel %vm1698, 1, 0
        %v1763 = vsel %vm1699, 1, 0
        %v1764 = vsel %vm1700, 1, 0
        %v1765 = vsel %vm1701, 1, 0
        %v1766 = vsel %vm1702, 1, 0
        %v1767 = vsel %vm1703, 1, 0
        %v1768 = vsel %vm1704, 1, 0
        %v1769 = vsel %vm1705, 1, 0
        %v1770 = vsel %vm1706, 1, 0
        %v1771 = vsel %vm1707, 1, 0
        %v1772 = vsel %vm1708, 1, 0
        %v1773 = vsel %vm1709, 1, 0
        %v1774 = vsel %vm1710, 1, 0
        %v1775 = vsel %vm1711, 1, 0
        %v1776 = vsel %vm1712, 1, 0
        %v1777 = vsel %vm1713, 1, 0
        %v1778 = vsel %vm1714, 1, 0
        %v1779 = vcvt.s32.f32 %v1715
        %v1780 = vcvt.s32.f32 %v1716
        %v1781 = vcvt.s32.f32 %v1717
        %v1782 = vcvt.s32.f32 %v1718
        %v1783 = vcvt.s32.f32 %v1719
        %v1784 = vcvt.s32.f32 %v1720
        %v1785 = vcvt.s32.f32 %v1721
        %v1786 = vcvt.s32.f32 %v1722
        %v1787 = vcvt.s32.f32 %v1723
        %v1788 = vcvt.s32.f32 %v1724
        %v1789 = vcvt.s32.f32 %v1725
        %v1790 = vcvt.s32.f32 %v1726
        %v1791 = vcvt.s32.f32 %v1727
        %v1792 = vcvt.s32.f32 %v1728
        %v1793 = vcvt.s32.f32 %v1729
        %v1794 = vcvt.s32.f32 %v1730
        %v1795 = vcvt.s32.f32 %v1731
        %v1796 = vcvt.s32.f32 %v1732
        %v1797 = vcvt.s32.f32 %v1733
        %v1798 = vcvt.s32.f32 %v1734
        %v1799 = vcvt.s32.f32 %v1735
        %v1800 = vcvt.s32.f32 %v1736
        %v1801 = vcvt.s32.f32 %v1737
        %v1802 = vcvt.s32.f32 %v1738
        %v1803 = vcvt.s32.f32 %v1739
        %v1804 = vcvt.s32.f32 %v1740
        %v1805 = vcvt.s32.f32 %v1741
        %v1806 = vcvt.s32.f32 %v1742
        %v1807 = vcvt.s32.f32 %v1743
        %v1808 = vcvt.s32.f32 %v1744
        %v1809 = vcvt.s32.f32 %v1745
        %v1810 = vcvt.s32.f32 %v1746
        %v1811 = vcvt.s32.f32 %v1747
        %v1812 = vcvt.s32.f32 %v1748
        %v1813 = vcvt.s32.f32 %v1749
        %v1814 = vcvt.s32.f32 %v1750
        %v1815 = vcvt.s32.f32 %v1751
        %v1816 = vcvt.s32.f32 %v1752
        %v1817 = vcvt.s32.f32 %v1753
        %v1818 = vcvt.s32.f32 %v1754
        %v1819 = vcvt.s32.f32 %v1755
        %v1820 = vcvt.s32.f32 %v1756
        %v1821 = vcvt.s32.f32 %v1757
        %v1822 = vcvt.s32.f32 %v1758
        %v1823 = vcvt.s32.f32 %v1759
        %v1824 = vcvt.s32.f32 %v1760
        %v1825 = vcvt.s32.f32 %v1761
        %v1826 = vcvt.s32.f32 %v1762
        %v1827 = vcvt.s32.f32 %v1763
        %v1828 = vcvt.s32.f32 %v1764
        %v1829 = vcvt.s32.f32 %v1765
        %v1830 = vcvt.s32.f32 %v1766
        %v1831 = vcvt.s32.f32 %v1767
        %v1832 = vcvt.s32.f32 %v1768
        %v1833 = vcvt.s32.f32 %v1769
        %v1834 = vcvt.s32.f32 %v1770
        %v1835 = vcvt.s32.f32 %v1771
        %v1836 = vcvt.s32.f32 %v1772
        %v1837 = vcvt.s32.f32 %v1773
        %v1838 = vcvt.s32.f32 %v1774
        %v1839 = vcvt.s32.f32 %v1775
        %v1840 = vcvt.s32.f32 %v1776
        %v1841 = vcvt.s32.f32 %v1777
        %v1842 = vcvt.s32.f32 %v1778
        %v1843 = vpack.c.bf16 %v1780, %v1779
        %v1844 = vpack.c.bf16 %v1782, %v1781
        %v1845 = vpack.c.bf16 %v1784, %v1783
        %v1846 = vpack.c.bf16 %v1786, %v1785
        %v1847 = vpack.c.bf16 %v1788, %v1787
        %v1848 = vpack.c.bf16 %v1790, %v1789
        %v1849 = vpack.c.bf16 %v1792, %v1791
        %v1850 = vpack.c.bf16 %v1794, %v1793
        %v1851 = vpack.c.bf16 %v1796, %v1795
        %v1852 = vpack.c.bf16 %v1798, %v1797
        %v1853 = vpack.c.bf16 %v1800, %v1799
        %v1854 = vpack.c.bf16 %v1802, %v1801
        %v1855 = vpack.c.bf16 %v1804, %v1803
        %v1856 = vpack.c.bf16 %v1806, %v1805
        %v1857 = vpack.c.bf16 %v1808, %v1807
        %v1858 = vpack.c.bf16 %v1810, %v1809
        %v1859 = vpack.c.bf16 %v1812, %v1811
        %v1860 = vpack.c.bf16 %v1814, %v1813
        %v1861 = vpack.c.bf16 %v1816, %v1815
        %v1862 = vpack.c.bf16 %v1818, %v1817
        %v1863 = vpack.c.bf16 %v1820, %v1819
        %v1864 = vpack.c.bf16 %v1822, %v1821
        %v1865 = vpack.c.bf16 %v1824, %v1823
        %v1866 = vpack.c.bf16 %v1826, %v1825
        %v1867 = vpack.c.bf16 %v1828, %v1827
        %v1868 = vpack.c.bf16 %v1830, %v1829
        %v1869 = vpack.c.bf16 %v1832, %v1831
        %v1870 = vpack.c.bf16 %v1834, %v1833
        %v1871 = vpack.c.bf16 %v1836, %v1835
        %v1872 = vpack.c.bf16 %v1838, %v1837
        %v1873 = vpack.c.bf16 %v1840, %v1839
        %v1874 = vpack.c.bf16 %v1842, %v1841
        %v1875 = vld [vmem:[#allocation2] sm:$0xff]
        %v1876 = vld [vmem:[#allocation2 + $0x8] sm:$0xff]
        %v1877 = vld [vmem:[#allocation2 + $0x10] sm:$0xff]
        %v1878 = vld [vmem:[#allocation2 + $0x18] sm:$0xff]
        %v1879 = vld [vmem:[#allocation2 + $0x20] sm:$0xff]
        %v1880 = vld [vmem:[#allocation2 + $0x28] sm:$0xff]
        %v1881 = vld [vmem:[#allocation2 + $0x30] sm:$0xff]
        %v1882 = vld [vmem:[#allocation2 + $0x38] sm:$0xff]
        %v1883 = vld [vmem:[#allocation2 + $0x40] sm:$0xff]
        %v1884 = vld [vmem:[#allocation2 + $0x48] sm:$0xff]
        %v1885 = vld [vmem:[#allocation2 + $0x50] sm:$0xff]
        %v1886 = vld [vmem:[#allocation2 + $0x58] sm:$0xff]
        %v1887 = vld [vmem:[#allocation2 + $0x60] sm:$0xff]
        %v1888 = vld [vmem:[#allocation2 + $0x68] sm:$0xff]
        %v1889 = vld [vmem:[#allocation2 + $0x70] sm:$0xff]
        %v1890 = vld [vmem:[#allocation2 + $0x78] sm:$0xff]
        %v1891 = vld [vmem:[#allocation2 + $0x80] sm:$0xff]
        %v1892 = vld [vmem:[#allocation2 + $0x88] sm:$0xff]
        %v1893 = vld [vmem:[#allocation2 + $0x90] sm:$0xff]
        %v1894 = vld [vmem:[#allocation2 + $0x98] sm:$0xff]
        %v1895 = vld [vmem:[#allocation2 + $0xa0] sm:$0xff]
        %v1896 = vld [vmem:[#allocation2 + $0xa8] sm:$0xff]
        %v1897 = vld [vmem:[#allocation2 + $0xb0] sm:$0xff]
        %v1898 = vld [vmem:[#allocation2 + $0xb8] sm:$0xff]
        %v1899 = vld [vmem:[#allocation2 + $0xc0] sm:$0xff]
        %v1900 = vld [vmem:[#allocation2 + $0xc8] sm:$0xff]
        %v1901 = vld [vmem:[#allocation2 + $0xd0] sm:$0xff]
        %v1902 = vld [vmem:[#allocation2 + $0xd8] sm:$0xff]
        %v1903 = vld [vmem:[#allocation2 + $0xe0] sm:$0xff]
        %v1904 = vld [vmem:[#allocation2 + $0xe8] sm:$0xff]
        %v1905 = vld [vmem:[#allocation2 + $0xf0] sm:$0xff]
        %v1906 = vld [vmem:[#allocation2 + $0xf8] sm:$0xff]
        %s1907 = scalar_lea.vmem [#allocation2], 256
        %v1908 = vld [vmem:[%s1907] sm:$0xff]
        %v1909 = vld [vmem:[%s1907 + $0x8] sm:$0xff]
        %v1910 = vld [vmem:[%s1907 + $0x10] sm:$0xff]
        %v1911 = vld [vmem:[%s1907 + $0x18] sm:$0xff]
        %v1912 = vld [vmem:[%s1907 + $0x20] sm:$0xff]
        %v1913 = vld [vmem:[%s1907 + $0x28] sm:$0xff]
        %v1914 = vld [vmem:[%s1907 + $0x30] sm:$0xff]
        %v1915 = vld [vmem:[%s1907 + $0x38] sm:$0xff]
        %v1916 = vld [vmem:[%s1907 + $0x40] sm:$0xff]
        %v1917 = vld [vmem:[%s1907 + $0x48] sm:$0xff]
        %v1918 = vld [vmem:[%s1907 + $0x50] sm:$0xff]
        %v1919 = vld [vmem:[%s1907 + $0x58] sm:$0xff]
        %v1920 = vld [vmem:[%s1907 + $0x60] sm:$0xff]
        %v1921 = vld [vmem:[%s1907 + $0x68] sm:$0xff]
        %v1922 = vld [vmem:[%s1907 + $0x70] sm:$0xff]
        %v1923 = vld [vmem:[%s1907 + $0x78] sm:$0xff]
        %v1924 = vld [vmem:[%s1907 + $0x80] sm:$0xff]
        %v1925 = vld [vmem:[%s1907 + $0x88] sm:$0xff]
        %v1926 = vld [vmem:[%s1907 + $0x90] sm:$0xff]
        %v1927 = vld [vmem:[%s1907 + $0x98] sm:$0xff]
        %v1928 = vld [vmem:[%s1907 + $0xa0] sm:$0xff]
        %v1929 = vld [vmem:[%s1907 + $0xa8] sm:$0xff]
        %v1930 = vld [vmem:[%s1907 + $0xb0] sm:$0xff]
        %v1931 = vld [vmem:[%s1907 + $0xb8] sm:$0xff]
        %v1932 = vld [vmem:[%s1907 + $0xc0] sm:$0xff]
        %v1933 = vld [vmem:[%s1907 + $0xc8] sm:$0xff]
        %v1934 = vld [vmem:[%s1907 + $0xd0] sm:$0xff]
        %v1935 = vld [vmem:[%s1907 + $0xd8] sm:$0xff]
        %v1936 = vld [vmem:[%s1907 + $0xe0] sm:$0xff]
        %v1937 = vld [vmem:[%s1907 + $0xe8] sm:$0xff]
        %v1938 = vld [vmem:[%s1907 + $0xf0] sm:$0xff]
        %v1939 = vld [vmem:[%s1907 + $0xf8] sm:$0xff]
        %v1972 = vunpack.c.l.b16 %v1908
        %v1973 = vunpack.c.h.b16 %v1908
        %v1974 = vunpack.c.l.b16 %v1909
        %v1975 = vunpack.c.h.b16 %v1909
        %v1976 = vunpack.c.l.b16 %v1910
        %v1977 = vunpack.c.h.b16 %v1910
        %v1978 = vunpack.c.l.b16 %v1911
        %v1979 = vunpack.c.h.b16 %v1911
        %v1980 = vunpack.c.l.b16 %v1912
        %v1981 = vunpack.c.h.b16 %v1912
        %v1982 = vunpack.c.l.b16 %v1913
        %v1983 = vunpack.c.h.b16 %v1913
        %v1984 = vunpack.c.l.b16 %v1914
        %v1985 = vunpack.c.h.b16 %v1914
        %v1986 = vunpack.c.l.b16 %v1915
        %v1987 = vunpack.c.h.b16 %v1915
        %v1988 = vunpack.c.l.b16 %v1916
        %v1989 = vunpack.c.h.b16 %v1916
        %v1990 = vunpack.c.l.b16 %v1917
        %v1991 = vunpack.c.h.b16 %v1917
        %v1992 = vunpack.c.l.b16 %v1918
        %v1993 = vunpack.c.h.b16 %v1918
        %v1994 = vunpack.c.l.b16 %v1919
        %v1995 = vunpack.c.h.b16 %v1919
        %v1996 = vunpack.c.l.b16 %v1920
        %v1997 = vunpack.c.h.b16 %v1920
        %v1998 = vunpack.c.l.b16 %v1921
        %v1999 = vunpack.c.h.b16 %v1921
        %v2000 = vunpack.c.l.b16 %v1922
        %v2001 = vunpack.c.h.b16 %v1922
        %v2002 = vunpack.c.l.b16 %v1923
        %v2003 = vunpack.c.h.b16 %v1923
        %v2004 = vunpack.c.l.b16 %v1924
        %v2005 = vunpack.c.h.b16 %v1924
        %v2006 = vunpack.c.l.b16 %v1925
        %v2007 = vunpack.c.h.b16 %v1925
        %v2008 = vunpack.c.l.b16 %v1926
        %v2009 = vunpack.c.h.b16 %v1926
        %v2010 = vunpack.c.l.b16 %v1927
        %v2011 = vunpack.c.h.b16 %v1927
        %v2012 = vunpack.c.l.b16 %v1928
        %v2013 = vunpack.c.h.b16 %v1928
        %v2014 = vunpack.c.l.b16 %v1929
        %v2015 = vunpack.c.h.b16 %v1929
        %v2016 = vunpack.c.l.b16 %v1930
        %v2017 = vunpack.c.h.b16 %v1930
        %v2018 = vunpack.c.l.b16 %v1931
        %v2019 = vunpack.c.h.b16 %v1931
        %v2020 = vunpack.c.l.b16 %v1932
        %v2021 = vunpack.c.h.b16 %v1932
        %v2022 = vunpack.c.l.b16 %v1933
        %v2023 = vunpack.c.h.b16 %v1933
        %v2024 = vunpack.c.l.b16 %v1934
        %v2025 = vunpack.c.h.b16 %v1934
        %v2026 = vunpack.c.l.b16 %v1935
        %v2027 = vunpack.c.h.b16 %v1935
        %v2028 = vunpack.c.l.b16 %v1936
        %v2029 = vunpack.c.h.b16 %v1936
        %v2030 = vunpack.c.l.b16 %v1937
        %v2031 = vunpack.c.h.b16 %v1937
        %v2032 = vunpack.c.l.b16 %v1938
        %v2033 = vunpack.c.h.b16 %v1938
        %v2034 = vunpack.c.l.b16 %v1939
        %v2035 = vunpack.c.h.b16 %v1939
        %v2036 = vpack.c.b16 %v1976, %v1972
        %v2037 = vpack.c.b16 %v1977, %v1973
        %v2038 = vpack.c.b16 %v1978, %v1974
        %v2039 = vpack.c.b16 %v1979, %v1975
        %v2040 = vpack.c.b16 %v1984, %v1980
        %v2041 = vpack.c.b16 %v1985, %v1981
        %v2042 = vpack.c.b16 %v1986, %v1982
        %v2043 = vpack.c.b16 %v1987, %v1983
        %v2044 = vpack.c.b16 %v1992, %v1988
        %v2045 = vpack.c.b16 %v1993, %v1989
        %v2046 = vpack.c.b16 %v1994, %v1990
        %v2047 = vpack.c.b16 %v1995, %v1991
        %v2048 = vpack.c.b16 %v2000, %v1996
        %v2049 = vpack.c.b16 %v2001, %v1997
        %v2050 = vpack.c.b16 %v2002, %v1998
        %v2051 = vpack.c.b16 %v2003, %v1999
        %v2052 = vpack.c.b16 %v2008, %v2004
        %v2053 = vpack.c.b16 %v2009, %v2005
        %v2054 = vpack.c.b16 %v2010, %v2006
        %v2055 = vpack.c.b16 %v2011, %v2007
        %v2056 = vpack.c.b16 %v2016, %v2012
        %v2057 = vpack.c.b16 %v2017, %v2013
        %v2058 = vpack.c.b16 %v2018, %v2014
        %v2059 = vpack.c.b16 %v2019, %v2015
        %v2060 = vpack.c.b16 %v2024, %v2020
        %v2061 = vpack.c.b16 %v2025, %v2021
        %v2062 = vpack.c.b16 %v2026, %v2022
        %v2063 = vpack.c.b16 %v2027, %v2023
        %v2064 = vpack.c.b16 %v2032, %v2028
        %v2065 = vpack.c.b16 %v2033, %v2029
        %v2066 = vpack.c.b16 %v2034, %v2030
        %v2067 = vpack.c.b16 %v2035, %v2031
        %2100 = vmatprep.subr.bf16.mxu0 0
        %2101 = vmatpush1.bf16.msra.mxu0 %v1843
        %2102 = vmatprep.subr.bf16.mxu0 0
        %2103 = vmatpush1.bf16.msra.mxu0 %v1844
        %2104 = vmatprep.subr.bf16.mxu0 0
        %2105 = vmatpush1.bf16.msra.mxu0 %v1845
        %2106 = vmatprep.subr.bf16.mxu0 0
        %2107 = vmatpush1.bf16.msra.mxu0 %v1846
        %2108 = vmatprep.subr.bf16.mxu0 0
        %2109 = vmatpush1.bf16.msra.mxu0 %v1847
        %2110 = vmatprep.subr.bf16.mxu0 0
        %2111 = vmatpush1.bf16.msra.mxu0 %v1848
        %2112 = vmatprep.subr.bf16.mxu0 0
        %2113 = vmatpush1.bf16.msra.mxu0 %v1849
        %2114 = vmatprep.subr.bf16.mxu0 0
        %2115 = vmatpush1.bf16.msra.mxu0 %v1850
        %2116 = vmatprep.subr.bf16.mxu0 0
        %2117 = vmatpush1.bf16.msra.mxu0 %v1851
        %2118 = vmatprep.subr.bf16.mxu0 0
        %2119 = vmatpush1.bf16.msra.mxu0 %v1852
        %2120 = vmatprep.subr.bf16.mxu0 0
        %2121 = vmatpush1.bf16.msra.mxu0 %v1853
        %2122 = vmatprep.subr.bf16.mxu0 0
        %2123 = vmatpush1.bf16.msra.mxu0 %v1854
        %2124 = vmatprep.subr.bf16.mxu0 0
        %2125 = vmatpush1.bf16.msra.mxu0 %v1855
        %2126 = vmatprep.subr.bf16.mxu0 0
        %2127 = vmatpush1.bf16.msra.mxu0 %v1856
        %2128 = vmatprep.subr.bf16.mxu0 0
        %2129 = vmatpush1.bf16.msra.mxu0 %v1857
        %2130 = vmatprep.subr.bf16.mxu0 0
        %2131 = vmatpush1.bf16.msra.mxu0 %v1858
        %2132 = vmatprep.mubr.bf16.mxu0 %v2037
        %2133 = vmatmul.mubr.bf16.gmra.mrb[0].mxu0 %v2036
        %v2134 = vpop.f32.mrb[0].mxu0
        %v2135 = vadd.f32 0.0, %v2134
        %v2136 = vpop.f32.mrb[0].mxu0
        %v2137 = vpop.f32.mrb[0].mxu0
        %v2138 = vadd.f32 0.0, %v2137
        %v2139 = vpop.f32.mrb[0].mxu0
        %2140 = vmatprep.mubr.bf16.mxu0 %v2041
        %2141 = vmatmul.mubr.bf16.gmra.mrb[0].mxu0 %v2040
        %v2142 = vpop.f32.mrb[0].mxu0
        %v2143 = vadd.f32 0.0, %v2142
        %v2144 = vpop.f32.mrb[0].mxu0
        %v2145 = vpop.f32.mrb[0].mxu0
        %v2146 = vadd.f32 0.0, %v2145
        %v2147 = vpop.f32.mrb[0].mxu0
        %2148 = vmatprep.mubr.bf16.mxu0 %v2045
        %2149 = vmatmul.mubr.bf16.gmra.mrb[0].mxu0 %v2044
        %v2150 = vpop.f32.mrb[0].mxu0
        %v2151 = vadd.f32 0.0, %v2150
        %v2152 = vpop.f32.mrb[0].mxu0
        %v2153 = vpop.f32.mrb[0].mxu0
        %v2154 = vadd.f32 0.0, %v2153
        %v2155 = vpop.f32.mrb[0].mxu0
        %2156 = vmatprep.mubr.bf16.mxu0 %v2049
        %2157 = vmatmul.mubr.bf16.gmra.mrb[0].mxu0 %v2048
        %v2158 = vpop.f32.mrb[0].mxu0
        %v2159 = vadd.f32 0.0, %v2158
        %v2160 = vpop.f32.mrb[0].mxu0
        %v2161 = vpop.f32.mrb[0].mxu0
        %v2162 = vadd.f32 0.0, %v2161
        %v2163 = vpop.f32.mrb[0].mxu0
        %2164 = vmatprep.mubr.bf16.mxu0 %v2053
        %2165 = vmatmul.mubr.bf16.gmra.mrb[0].mxu0 %v2052
        %v2166 = vpop.f32.mrb[0].mxu0
        %v2167 = vadd.f32 0.0, %v2166
        %v2168 = vpop.f32.mrb[0].mxu0
        %v2169 = vpop.f32.mrb[0].mxu0
        %v2170 = vadd.f32 0.0, %v2169
        %v2171 = vpop.f32.mrb[0].mxu0
        %2172 = vmatprep.mubr.bf16.mxu0 %v2057
        %2173 = vmatmul.mubr.bf16.gmra.mrb[0].mxu0 %v2056
        %v2174 = vpop.f32.mrb[0].mxu0
        %v2175 = vadd.f32 0.0, %v2174
        %v2176 = vpop.f32.mrb[0].mxu0
        %v2177 = vpop.f32.mrb[0].mxu0
        %v2178 = vadd.f32 0.0, %v2177
        %v2179 = vpop.f32.mrb[0].mxu0
        %2180 = vmatprep.mubr.bf16.mxu0 %v2061
        %2181 = vmatmul.mubr.bf16.gmra.mrb[0].mxu0 %v2060
        %v2182 = vpop.f32.mrb[0].mxu0
        %v2183 = vadd.f32 0.0, %v2182
        %v2184 = vpop.f32.mrb[0].mxu0
        %v2185 = vpop.f32.mrb[0].mxu0
        %v2186 = vadd.f32 0.0, %v2185
        %v2187 = vpop.f32.mrb[0].mxu0
        %2188 = vmatprep.mubr.bf16.mxu0 %v2065
        %2189 = vmatmul.mubr.bf16.gmra.mrb[0].mxu0 %v2064
        %v2190 = vpop.f32.mrb[0].mxu0
        %v2191 = vadd.f32 0.0, %v2190
        %v2192 = vpop.f32.mrb[0].mxu0
        %v2193 = vpop.f32.mrb[0].mxu0
        %v2194 = vadd.f32 0.0, %v2193
        %v2195 = vpop.f32.mrb[0].mxu0
        %2196 = vdwg.mxu0
        %2197 = vmatprep.subr.bf16.mxu0 0
        %2198 = vmatpush1.bf16.msra.mxu0 %v1859
        %2199 = vmatprep.subr.bf16.mxu0 0
        %2200 = vmatpush1.bf16.msra.mxu0 %v1860
        %2201 = vmatprep.subr.bf16.mxu0 0
        %2202 = vmatpush1.bf16.msra.mxu0 %v1861
        %2203 = vmatprep.subr.bf16.mxu0 0
        %2204 = vmatpush1.bf16.msra.mxu0 %v1862
        %2205 = vmatprep.subr.bf16.mxu0 0
        %2206 = vmatpush1.bf16.msra.mxu0 %v1863
        %2207 = vmatprep.subr.bf16.mxu0 0
        %2208 = vmatpush1.bf16.msra.mxu0 %v1864
        %2209 = vmatprep.subr.bf16.mxu0 0
        %2210 = vmatpush1.bf16.msra.mxu0 %v1865
        %2211 = vmatprep.subr.bf16.mxu0 0
        %2212 = vmatpush1.bf16.msra.mxu0 %v1866
        %2213 = vmatprep.subr.bf16.mxu0 0
        %2214 = vmatpush1.bf16.msra.mxu0 %v1867
        %2215 = vmatprep.subr.bf16.mxu0 0
        %2216 = vmatpush1.bf16.msra.mxu0 %v1868
        %2217 = vmatprep.subr.bf16.mxu0 0
        %2218 = vmatpush1.bf16.msra.mxu0 %v1869
        %2219 = vmatprep.subr.bf16.mxu0 0
        %2220 = vmatpush1.bf16.msra.mxu0 %v1870
        %2221 = vmatprep.subr.bf16.mxu0 0
        %2222 = vmatpush1.bf16.msra.mxu0 %v1871
        %2223 = vmatprep.subr.bf16.mxu0 0
        %2224 = vmatpush1.bf16.msra.mxu0 %v1872
        %2225 = vmatprep.subr.bf16.mxu0 0
        %2226 = vmatpush1.bf16.msra.mxu0 %v1873
        %2227 = vmatprep.subr.bf16.mxu0 0
        %2228 = vmatpush1.bf16.msra.mxu0 %v1874
        %2229 = vmatprep.mubr.bf16.mxu0 %v2039
        %2230 = vmatmul.mubr.bf16.gmra.mrb[0].mxu0 %v2038
        %v2231 = vpop.f32.mrb[0].mxu0
        %v2232 = vadd.f32 %v2135, %v2231
        %v2233 = vpop.f32.mrb[0].mxu0
        %v2234 = vpop.f32.mrb[0].mxu0
        %v2235 = vadd.f32 %v2138, %v2234
        %v2236 = vpop.f32.mrb[0].mxu0
        %2237 = vmatprep.mubr.bf16.mxu0 %v2043
        %2238 = vmatmul.mubr.bf16.gmra.mrb[0].mxu0 %v2042
        %v2239 = vpop.f32.mrb[0].mxu0
        %v2240 = vadd.f32 %v2143, %v2239
        %v2241 = vpop.f32.mrb[0].mxu0
        %v2242 = vpop.f32.mrb[0].mxu0
        %v2243 = vadd.f32 %v2146, %v2242
        %v2244 = vpop.f32.mrb[0].mxu0
        %2245 = vmatprep.mubr.bf16.mxu0 %v2047
        %2246 = vmatmul.mubr.bf16.gmra.mrb[0].mxu0 %v2046
        %v2247 = vpop.f32.mrb[0].mxu0
        %v2248 = vadd.f32 %v2151, %v2247
        %v2249 = vpop.f32.mrb[0].mxu0
        %v2250 = vpop.f32.mrb[0].mxu0
        %v2251 = vadd.f32 %v2154, %v2250
        %v2252 = vpop.f32.mrb[0].mxu0
        %2253 = vmatprep.mubr.bf16.mxu0 %v2051
        %2254 = vmatmul.mubr.bf16.gmra.mrb[0].mxu0 %v2050
        %v2255 = vpop.f32.mrb[0].mxu0
        %v2256 = vadd.f32 %v2159, %v2255
        %v2257 = vpop.f32.mrb[0].mxu0
        %v2258 = vpop.f32.mrb[0].mxu0
        %v2259 = vadd.f32 %v2162, %v2258
        %v2260 = vpop.f32.mrb[0].mxu0
        %2261 = vmatprep.mubr.bf16.mxu0 %v2055
        %2262 = vmatmul.mubr.bf16.gmra.mrb[0].mxu0 %v2054
        %v2263 = vpop.f32.mrb[0].mxu0
        %v2264 = vadd.f32 %v2167, %v2263
        %v2265 = vpop.f32.mrb[0].mxu0
        %v2266 = vpop.f32.mrb[0].mxu0
        %v2267 = vadd.f32 %v2170, %v2266
        %v2268 = vpop.f32.mrb[0].mxu0
        %2269 = vmatprep.mubr.bf16.mxu0 %v2059
        %2270 = vmatmul.mubr.bf16.gmra.mrb[0].mxu0 %v2058
        %v2271 = vpop.f32.mrb[0].mxu0
        %v2272 = vadd.f32 %v2175, %v2271
        %v2273 = vpop.f32.mrb[0].mxu0
        %v2274 = vpop.f32.mrb[0].mxu0
        %v2275 = vadd.f32 %v2178, %v2274
        %v2276 = vpop.f32.mrb[0].mxu0
        %2277 = vmatprep.mubr.bf16.mxu0 %v2063
        %2278 = vmatmul.mubr.bf16.gmra.mrb[0].mxu0 %v2062
        %v2279 = vpop.f32.mrb[0].mxu0
        %v2280 = vadd.f32 %v2183, %v2279
        %v2281 = vpop.f32.mrb[0].mxu0
        %v2282 = vpop.f32.mrb[0].mxu0
        %v2283 = vadd.f32 %v2186, %v2282
        %v2284 = vpop.f32.mrb[0].mxu0
        %2285 = vmatprep.mubr.bf16.mxu0 %v2067
        %2286 = vmatmul.mubr.bf16.gmra.mrb[0].mxu0 %v2066
        %v2287 = vpop.f32.mrb[0].mxu0
        %v2288 = vadd.f32 %v2191, %v2287
        %v2289 = vpop.f32.mrb[0].mxu0
        %v2290 = vpop.f32.mrb[0].mxu0
        %v2291 = vadd.f32 %v2194, %v2290
        %v2292 = vpop.f32.mrb[0].mxu0
        %2293 = vdwg.mxu0
        %v2326 = vunpack.c.l.b16 %v1875
        %v2327 = vunpack.c.h.b16 %v1875
        %v2328 = vunpack.c.l.b16 %v1876
        %v2329 = vunpack.c.h.b16 %v1876
        %v2330 = vunpack.c.l.b16 %v1877
        %v2331 = vunpack.c.h.b16 %v1877
        %v2332 = vunpack.c.l.b16 %v1878
        %v2333 = vunpack.c.h.b16 %v1878
        %v2334 = vunpack.c.l.b16 %v1879
        %v2335 = vunpack.c.h.b16 %v1879
        %v2336 = vunpack.c.l.b16 %v1880
        %v2337 = vunpack.c.h.b16 %v1880
        %v2338 = vunpack.c.l.b16 %v1881
        %v2339 = vunpack.c.h.b16 %v1881
        %v2340 = vunpack.c.l.b16 %v1882
        %v2341 = vunpack.c.h.b16 %v1882
        %v2342 = vunpack.c.l.b16 %v1883
        %v2343 = vunpack.c.h.b16 %v1883
        %v2344 = vunpack.c.l.b16 %v1884
        %v2345 = vunpack.c.h.b16 %v1884
        %v2346 = vunpack.c.l.b16 %v1885
        %v2347 = vunpack.c.h.b16 %v1885
        %v2348 = vunpack.c.l.b16 %v1886
        %v2349 = vunpack.c.h.b16 %v1886
        %v2350 = vunpack.c.l.b16 %v1887
        %v2351 = vunpack.c.h.b16 %v1887
        %v2352 = vunpack.c.l.b16 %v1888
        %v2353 = vunpack.c.h.b16 %v1888
        %v2354 = vunpack.c.l.b16 %v1889
        %v2355 = vunpack.c.h.b16 %v1889
        %v2356 = vunpack.c.l.b16 %v1890
        %v2357 = vunpack.c.h.b16 %v1890
        %v2358 = vunpack.c.l.b16 %v1891
        %v2359 = vunpack.c.h.b16 %v1891
        %v2360 = vunpack.c.l.b16 %v1892
        %v2361 = vunpack.c.h.b16 %v1892
        %v2362 = vunpack.c.l.b16 %v1893
        %v2363 = vunpack.c.h.b16 %v1893
        %v2364 = vunpack.c.l.b16 %v1894
        %v2365 = vunpack.c.h.b16 %v1894
        %v2366 = vunpack.c.l.b16 %v1895
        %v2367 = vunpack.c.h.b16 %v1895
        %v2368 = vunpack.c.l.b16 %v1896
        %v2369 = vunpack.c.h.b16 %v1896
        %v2370 = vunpack.c.l.b16 %v1897
        %v2371 = vunpack.c.h.b16 %v1897
        %v2372 = vunpack.c.l.b16 %v1898
        %v2373 = vunpack.c.h.b16 %v1898
        %v2374 = vunpack.c.l.b16 %v1899
        %v2375 = vunpack.c.h.b16 %v1899
        %v2376 = vunpack.c.l.b16 %v1900
        %v2377 = vunpack.c.h.b16 %v1900
        %v2378 = vunpack.c.l.b16 %v1901
        %v2379 = vunpack.c.h.b16 %v1901
        %v2380 = vunpack.c.l.b16 %v1902
        %v2381 = vunpack.c.h.b16 %v1902
        %v2382 = vunpack.c.l.b16 %v1903
        %v2383 = vunpack.c.h.b16 %v1903
        %v2384 = vunpack.c.l.b16 %v1904
        %v2385 = vunpack.c.h.b16 %v1904
        %v2386 = vunpack.c.l.b16 %v1905
        %v2387 = vunpack.c.h.b16 %v1905
        %v2388 = vunpack.c.l.b16 %v1906
        %v2389 = vunpack.c.h.b16 %v1906
        %v2390 = vpack.c.b16 %v2330, %v2326
        %v2391 = vpack.c.b16 %v2331, %v2327
        %v2392 = vpack.c.b16 %v2332, %v2328
        %v2393 = vpack.c.b16 %v2333, %v2329
        %v2394 = vpack.c.b16 %v2338, %v2334
        %v2395 = vpack.c.b16 %v2339, %v2335
        %v2396 = vpack.c.b16 %v2340, %v2336
        %v2397 = vpack.c.b16 %v2341, %v2337
        %v2398 = vpack.c.b16 %v2346, %v2342
        %v2399 = vpack.c.b16 %v2347, %v2343
        %v2400 = vpack.c.b16 %v2348, %v2344
        %v2401 = vpack.c.b16 %v2349, %v2345
        %v2402 = vpack.c.b16 %v2354, %v2350
        %v2403 = vpack.c.b16 %v2355, %v2351
        %v2404 = vpack.c.b16 %v2356, %v2352
        %v2405 = vpack.c.b16 %v2357, %v2353
        %v2406 = vpack.c.b16 %v2362, %v2358
        %v2407 = vpack.c.b16 %v2363, %v2359
        %v2408 = vpack.c.b16 %v2364, %v2360
        %v2409 = vpack.c.b16 %v2365, %v2361
        %v2410 = vpack.c.b16 %v2370, %v2366
        %v2411 = vpack.c.b16 %v2371, %v2367
        %v2412 = vpack.c.b16 %v2372, %v2368
        %v2413 = vpack.c.b16 %v2373, %v2369
        %v2414 = vpack.c.b16 %v2378, %v2374
        %v2415 = vpack.c.b16 %v2379, %v2375
        %v2416 = vpack.c.b16 %v2380, %v2376
        %v2417 = vpack.c.b16 %v2381, %v2377
        %v2418 = vpack.c.b16 %v2386, %v2382
        %v2419 = vpack.c.b16 %v2387, %v2383
        %v2420 = vpack.c.b16 %v2388, %v2384
        %v2421 = vpack.c.b16 %v2389, %v2385
        %2454 = vmatprep.subr.bf16.mxu0 0
        %2455 = vmatpush1.bf16.msra.mxu0 %v1843
        %2456 = vmatprep.subr.bf16.mxu0 0
        %2457 = vmatpush1.bf16.msra.mxu0 %v1844
        %2458 = vmatprep.subr.bf16.mxu0 0
        %2459 = vmatpush1.bf16.msra.mxu0 %v1845
        %2460 = vmatprep.subr.bf16.mxu0 0
        %2461 = vmatpush1.bf16.msra.mxu0 %v1846
        %2462 = vmatprep.subr.bf16.mxu0 0
        %2463 = vmatpush1.bf16.msra.mxu0 %v1847
        %2464 = vmatprep.subr.bf16.mxu0 0
        %2465 = vmatpush1.bf16.msra.mxu0 %v1848
        %2466 = vmatprep.subr.bf16.mxu0 0
        %2467 = vmatpush1.bf16.msra.mxu0 %v1849
        %2468 = vmatprep.subr.bf16.mxu0 0
        %2469 = vmatpush1.bf16.msra.mxu0 %v1850
        %2470 = vmatprep.subr.bf16.mxu0 0
        %2471 = vmatpush1.bf16.msra.mxu0 %v1851
        %2472 = vmatprep.subr.bf16.mxu0 0
        %2473 = vmatpush1.bf16.msra.mxu0 %v1852
        %2474 = vmatprep.subr.bf16.mxu0 0
        %2475 = vmatpush1.bf16.msra.mxu0 %v1853
        %2476 = vmatprep.subr.bf16.mxu0 0
        %2477 = vmatpush1.bf16.msra.mxu0 %v1854
        %2478 = vmatprep.subr.bf16.mxu0 0
        %2479 = vmatpush1.bf16.msra.mxu0 %v1855
        %2480 = vmatprep.subr.bf16.mxu0 0
        %2481 = vmatpush1.bf16.msra.mxu0 %v1856
        %2482 = vmatprep.subr.bf16.mxu0 0
        %2483 = vmatpush1.bf16.msra.mxu0 %v1857
        %2484 = vmatprep.subr.bf16.mxu0 0
        %2485 = vmatpush1.bf16.msra.mxu0 %v1858
        %2486 = vmatprep.mubr.bf16.mxu0 %v2391
        %2487 = vmatmul.mubr.bf16.gmra.mrb[0].mxu0 %v2390
        %v2488 = vpop.f32.mrb[0].mxu0
        %v2489 = vadd.f32 %v2232, %v2488
        %v2490 = vpop.f32.mrb[0].mxu0
        %v2491 = vpop.f32.mrb[0].mxu0
        %v2492 = vadd.f32 %v2235, %v2491
        %v2493 = vpop.f32.mrb[0].mxu0
        %2494 = vmatprep.mubr.bf16.mxu0 %v2395
        %2495 = vmatmul.mubr.bf16.gmra.mrb[0].mxu0 %v2394
        %v2496 = vpop.f32.mrb[0].mxu0
        %v2497 = vadd.f32 %v2240, %v2496
        %v2498 = vpop.f32.mrb[0].mxu0
        %v2499 = vpop.f32.mrb[0].mxu0
        %v2500 = vadd.f32 %v2243, %v2499
        %v2501 = vpop.f32.mrb[0].mxu0
        %2502 = vmatprep.mubr.bf16.mxu0 %v2399
        %2503 = vmatmul.mubr.bf16.gmra.mrb[0].mxu0 %v2398
        %v2504 = vpop.f32.mrb[0].mxu0
        %v2505 = vadd.f32 %v2248, %v2504
        %v2506 = vpop.f32.mrb[0].mxu0
        %v2507 = vpop.f32.mrb[0].mxu0
        %v2508 = vadd.f32 %v2251, %v2507
        %v2509 = vpop.f32.mrb[0].mxu0
        %2510 = vmatprep.mubr.bf16.mxu0 %v2403
        %2511 = vmatmul.mubr.bf16.gmra.mrb[0].mxu0 %v2402
        %v2512 = vpop.f32.mrb[0].mxu0
        %v2513 = vadd.f32 %v2256, %v2512
        %v2514 = vpop.f32.mrb[0].mxu0
        %v2515 = vpop.f32.mrb[0].mxu0
        %v2516 = vadd.f32 %v2259, %v2515
        %v2517 = vpop.f32.mrb[0].mxu0
        %2518 = vmatprep.mubr.bf16.mxu0 %v2407
        %2519 = vmatmul.mubr.bf16.gmra.mrb[0].mxu0 %v2406
        %v2520 = vpop.f32.mrb[0].mxu0
        %v2521 = vadd.f32 %v2264, %v2520
        %v2522 = vpop.f32.mrb[0].mxu0
        %v2523 = vpop.f32.mrb[0].mxu0
        %v2524 = vadd.f32 %v2267, %v2523
        %v2525 = vpop.f32.mrb[0].mxu0
        %2526 = vmatprep.mubr.bf16.mxu0 %v2411
        %2527 = vmatmul.mubr.bf16.gmra.mrb[0].mxu0 %v2410
        %v2528 = vpop.f32.mrb[0].mxu0
        %v2529 = vadd.f32 %v2272, %v2528
        %v2530 = vpop.f32.mrb[0].mxu0
        %v2531 = vpop.f32.mrb[0].mxu0
        %v2532 = vadd.f32 %v2275, %v2531
        %v2533 = vpop.f32.mrb[0].mxu0
        %2534 = vmatprep.mubr.bf16.mxu0 %v2415
        %2535 = vmatmul.mubr.bf16.gmra.mrb[0].mxu0 %v2414
        %v2536 = vpop.f32.mrb[0].mxu0
        %v2537 = vadd.f32 %v2280, %v2536
        %v2538 = vpop.f32.mrb[0].mxu0
        %v2539 = vpop.f32.mrb[0].mxu0
        %v2540 = vadd.f32 %v2283, %v2539
        %v2541 = vpop.f32.mrb[0].mxu0
        %2542 = vmatprep.mubr.bf16.mxu0 %v2419
        %2543 = vmatmul.mubr.bf16.gmra.mrb[0].mxu0 %v2418
        %v2544 = vpop.f32.mrb[0].mxu0
        %v2545 = vadd.f32 %v2288, %v2544
        %v2546 = vpop.f32.mrb[0].mxu0
        %v2547 = vpop.f32.mrb[0].mxu0
        %v2548 = vadd.f32 %v2291, %v2547
        %v2549 = vpop.f32.mrb[0].mxu0
        %2550 = vdwg.mxu0
        %2551 = vmatprep.subr.bf16.mxu0 0
        %2552 = vmatpush1.bf16.msra.mxu0 %v1859
        %2553 = vmatprep.subr.bf16.mxu0 0
        %2554 = vmatpush1.bf16.msra.mxu0 %v1860
        %2555 = vmatprep.subr.bf16.mxu0 0
        %2556 = vmatpush1.bf16.msra.mxu0 %v1861
        %2557 = vmatprep.subr.bf16.mxu0 0
        %2558 = vmatpush1.bf16.msra.mxu0 %v1862
        %2559 = vmatprep.subr.bf16.mxu0 0
        %2560 = vmatpush1.bf16.msra.mxu0 %v1863
        %2561 = vmatprep.subr.bf16.mxu0 0
        %2562 = vmatpush1.bf16.msra.mxu0 %v1864
        %2563 = vmatprep.subr.bf16.mxu0 0
        %2564 = vmatpush1.bf16.msra.mxu0 %v1865
        %2565 = vmatprep.subr.bf16.mxu0 0
        %2566 = vmatpush1.bf16.msra.mxu0 %v1866
        %2567 = vmatprep.subr.bf16.mxu0 0
        %2568 = vmatpush1.bf16.msra.mxu0 %v1867
        %2569 = vmatprep.subr.bf16.mxu0 0
        %2570 = vmatpush1.bf16.msra.mxu0 %v1868
        %2571 = vmatprep.subr.bf16.mxu0 0
        %2572 = vmatpush1.bf16.msra.mxu0 %v1869
        %2573 = vmatprep.subr.bf16.mxu0 0
        %2574 = vmatpush1.bf16.msra.mxu0 %v1870
        %2575 = vmatprep.subr.bf16.mxu0 0
        %2576 = vmatpush1.bf16.msra.mxu0 %v1871
        %2577 = vmatprep.subr.bf16.mxu0 0
        %2578 = vmatpush1.bf16.msra.mxu0 %v1872
        %2579 = vmatprep.subr.bf16.mxu0 0
        %2580 = vmatpush1.bf16.msra.mxu0 %v1873
        %2581 = vmatprep.subr.bf16.mxu0 0
        %2582 = vmatpush1.bf16.msra.mxu0 %v1874
        %2583 = vmatprep.mubr.bf16.mxu0 %v2393
        %2584 = vmatmul.mubr.bf16.gmra.mrb[0].mxu0 %v2392
        %v2585 = vpop.f32.mrb[0].mxu0
        %v2586 = vadd.f32 %v2489, %v2585
        %v2587 = vpop.f32.mrb[0].mxu0
        %v2588 = vpop.f32.mrb[0].mxu0
        %v2589 = vadd.f32 %v2492, %v2588
        %v2590 = vpop.f32.mrb[0].mxu0
        %2591 = vmatprep.mubr.bf16.mxu0 %v2397
        %2592 = vmatmul.mubr.bf16.gmra.mrb[0].mxu0 %v2396
        %v2593 = vpop.f32.mrb[0].mxu0
        %v2594 = vadd.f32 %v2497, %v2593
        %v2595 = vpop.f32.mrb[0].mxu0
        %v2596 = vpop.f32.mrb[0].mxu0
        %v2597 = vadd.f32 %v2500, %v2596
        %v2598 = vpop.f32.mrb[0].mxu0
        %2599 = vmatprep.mubr.bf16.mxu0 %v2401
        %2600 = vmatmul.mubr.bf16.gmra.mrb[0].mxu0 %v2400
        %v2601 = vpop.f32.mrb[0].mxu0
        %v2602 = vadd.f32 %v2505, %v2601
        %v2603 = vpop.f32.mrb[0].mxu0
        %v2604 = vpop.f32.mrb[0].mxu0
        %v2605 = vadd.f32 %v2508, %v2604
        %v2606 = vpop.f32.mrb[0].mxu0
        %2607 = vmatprep.mubr.bf16.mxu0 %v2405
        %2608 = vmatmul.mubr.bf16.gmra.mrb[0].mxu0 %v2404
        %v2609 = vpop.f32.mrb[0].mxu0
        %v2610 = vadd.f32 %v2513, %v2609
        %v2611 = vpop.f32.mrb[0].mxu0
        %v2612 = vpop.f32.mrb[0].mxu0
        %v2613 = vadd.f32 %v2516, %v2612
        %v2614 = vpop.f32.mrb[0].mxu0
        %2615 = vmatprep.mubr.bf16.mxu0 %v2409
        %2616 = vmatmul.mubr.bf16.gmra.mrb[0].mxu0 %v2408
        %v2617 = vpop.f32.mrb[0].mxu0
        %v2618 = vadd.f32 %v2521, %v2617
        %v2619 = vpop.f32.mrb[0].mxu0
        %v2620 = vpop.f32.mrb[0].mxu0
        %v2621 = vadd.f32 %v2524, %v2620
        %v2622 = vpop.f32.mrb[0].mxu0
        %2623 = vmatprep.mubr.bf16.mxu0 %v2413
        %2624 = vmatmul.mubr.bf16.gmra.mrb[0].mxu0 %v2412
        %v2625 = vpop.f32.mrb[0].mxu0
        %v2626 = vadd.f32 %v2529, %v2625
        %v2627 = vpop.f32.mrb[0].mxu0
        %v2628 = vpop.f32.mrb[0].mxu0
        %v2629 = vadd.f32 %v2532, %v2628
        %v2630 = vpop.f32.mrb[0].mxu0
        %2631 = vmatprep.mubr.bf16.mxu0 %v2417
        %2632 = vmatmul.mubr.bf16.gmra.mrb[0].mxu0 %v2416
        %v2633 = vpop.f32.mrb[0].mxu0
        %v2634 = vadd.f32 %v2537, %v2633
        %v2635 = vpop.f32.mrb[0].mxu0
        %v2636 = vpop.f32.mrb[0].mxu0
        %v2637 = vadd.f32 %v2540, %v2636
        %v2638 = vpop.f32.mrb[0].mxu0
        %2639 = vmatprep.mubr.bf16.mxu0 %v2421
        %2640 = vmatmul.mubr.bf16.gmra.mrb[0].mxu0 %v2420
        %v2641 = vpop.f32.mrb[0].mxu0
        %v2642 = vadd.f32 %v2545, %v2641
        %v2643 = vpop.f32.mrb[0].mxu0
        %v2644 = vpop.f32.mrb[0].mxu0
        %v2645 = vadd.f32 %v2548, %v2644
        %v2646 = vpop.f32.mrb[0].mxu0
        %2647 = vdwg.mxu0
        %s2648 = scalar_lea.vmem [#allocation2], 512
        %v2649 = vld [vmem:[%s2648] sm:$0xff]
        %v2650 = vld [vmem:[%s2648 + $0x8] sm:$0xff]
        %v2651 = vld [vmem:[%s2648 + $0x10] sm:$0xff]
        %v2652 = vld [vmem:[%s2648 + $0x18] sm:$0xff]
        %v2653 = vld [vmem:[%s2648 + $0x20] sm:$0xff]
        %v2654 = vld [vmem:[%s2648 + $0x28] sm:$0xff]
        %v2655 = vld [vmem:[%s2648 + $0x30] sm:$0xff]
        %v2656 = vld [vmem:[%s2648 + $0x38] sm:$0xff]
        %v2657 = vld [vmem:[%s2648 + $0x40] sm:$0xff]
        %v2658 = vld [vmem:[%s2648 + $0x48] sm:$0xff]
        %v2659 = vld [vmem:[%s2648 + $0x50] sm:$0xff]
        %v2660 = vld [vmem:[%s2648 + $0x58] sm:$0xff]
        %v2661 = vld [vmem:[%s2648 + $0x60] sm:$0xff]
        %v2662 = vld [vmem:[%s2648 + $0x68] sm:$0xff]
        %v2663 = vld [vmem:[%s2648 + $0x70] sm:$0xff]
        %v2664 = vld [vmem:[%s2648 + $0x78] sm:$0xff]
        %v2665 = vld [vmem:[%s2648 + $0x80] sm:$0xff]
        %v2666 = vld [vmem:[%s2648 + $0x88] sm:$0xff]
        %v2667 = vld [vmem:[%s2648 + $0x90] sm:$0xff]
        %v2668 = vld [vmem:[%s2648 + $0x98] sm:$0xff]
        %v2669 = vld [vmem:[%s2648 + $0xa0] sm:$0xff]
        %v2670 = vld [vmem:[%s2648 + $0xa8] sm:$0xff]
        %v2671 = vld [vmem:[%s2648 + $0xb0] sm:$0xff]
        %v2672 = vld [vmem:[%s2648 + $0xb8] sm:$0xff]
        %v2673 = vld [vmem:[%s2648 + $0xc0] sm:$0xff]
        %v2674 = vld [vmem:[%s2648 + $0xc8] sm:$0xff]
        %v2675 = vld [vmem:[%s2648 + $0xd0] sm:$0xff]
        %v2676 = vld [vmem:[%s2648 + $0xd8] sm:$0xff]
        %v2677 = vld [vmem:[%s2648 + $0xe0] sm:$0xff]
        %v2678 = vld [vmem:[%s2648 + $0xe8] sm:$0xff]
        %v2679 = vld [vmem:[%s2648 + $0xf0] sm:$0xff]
        %v2680 = vld [vmem:[%s2648 + $0xf8] sm:$0xff]
        %v2713 = vunpack.c.l.b16 %v2649
        %v2714 = vunpack.c.h.b16 %v2649
        %v2715 = vunpack.c.l.b16 %v2650
        %v2716 = vunpack.c.h.b16 %v2650
        %v2717 = vunpack.c.l.b16 %v2651
        %v2718 = vunpack.c.h.b16 %v2651
        %v2719 = vunpack.c.l.b16 %v2652
        %v2720 = vunpack.c.h.b16 %v2652
        %v2721 = vunpack.c.l.b16 %v2653
        %v2722 = vunpack.c.h.b16 %v2653
        %v2723 = vunpack.c.l.b16 %v2654
        %v2724 = vunpack.c.h.b16 %v2654
        %v2725 = vunpack.c.l.b16 %v2655
        %v2726 = vunpack.c.h.b16 %v2655
        %v2727 = vunpack.c.l.b16 %v2656
        %v2728 = vunpack.c.h.b16 %v2656
        %v2729 = vunpack.c.l.b16 %v2657
        %v2730 = vunpack.c.h.b16 %v2657
        %v2731 = vunpack.c.l.b16 %v2658
        %v2732 = vunpack.c.h.b16 %v2658
        %v2733 = vunpack.c.l.b16 %v2659
        %v2734 = vunpack.c.h.b16 %v2659
        %v2735 = vunpack.c.l.b16 %v2660
        %v2736 = vunpack.c.h.b16 %v2660
        %v2737 = vunpack.c.l.b16 %v2661
        %v2738 = vunpack.c.h.b16 %v2661
        %v2739 = vunpack.c.l.b16 %v2662
        %v2740 = vunpack.c.h.b16 %v2662
        %v2741 = vunpack.c.l.b16 %v2663
        %v2742 = vunpack.c.h.b16 %v2663
        %v2743 = vunpack.c.l.b16 %v2664
        %v2744 = vunpack.c.h.b16 %v2664
        %v2745 = vunpack.c.l.b16 %v2665
        %v2746 = vunpack.c.h.b16 %v2665
        %v2747 = vunpack.c.l.b16 %v2666
        %v2748 = vunpack.c.h.b16 %v2666
        %v2749 = vunpack.c.l.b16 %v2667
        %v2750 = vunpack.c.h.b16 %v2667
        %v2751 = vunpack.c.l.b16 %v2668
        %v2752 = vunpack.c.h.b16 %v2668
        %v2753 = vunpack.c.l.b16 %v2669
        %v2754 = vunpack.c.h.b16 %v2669
        %v2755 = vunpack.c.l.b16 %v2670
        %v2756 = vunpack.c.h.b16 %v2670
        %v2757 = vunpack.c.l.b16 %v2671
        %v2758 = vunpack.c.h.b16 %v2671
        %v2759 = vunpack.c.l.b16 %v2672
        %v2760 = vunpack.c.h.b16 %v2672
        %v2761 = vunpack.c.l.b16 %v2673
        %v2762 = vunpack.c.h.b16 %v2673
        %v2763 = vunpack.c.l.b16 %v2674
        %v2764 = vunpack.c.h.b16 %v2674
        %v2765 = vunpack.c.l.b16 %v2675
        %v2766 = vunpack.c.h.b16 %v2675
        %v2767 = vunpack.c.l.b16 %v2676
        %v2768 = vunpack.c.h.b16 %v2676
        %v2769 = vunpack.c.l.b16 %v2677
        %v2770 = vunpack.c.h.b16 %v2677
        %v2771 = vunpack.c.l.b16 %v2678
        %v2772 = vunpack.c.h.b16 %v2678
        %v2773 = vunpack.c.l.b16 %v2679
        %v2774 = vunpack.c.h.b16 %v2679
        %v2775 = vunpack.c.l.b16 %v2680
        %v2776 = vunpack.c.h.b16 %v2680
        %v2777 = vpack.c.b16 %v2717, %v2713
        %v2778 = vpack.c.b16 %v2718, %v2714
        %v2779 = vpack.c.b16 %v2719, %v2715
        %v2780 = vpack.c.b16 %v2720, %v2716
        %v2781 = vpack.c.b16 %v2725, %v2721
        %v2782 = vpack.c.b16 %v2726, %v2722
        %v2783 = vpack.c.b16 %v2727, %v2723
        %v2784 = vpack.c.b16 %v2728, %v2724
        %v2785 = vpack.c.b16 %v2733, %v2729
        %v2786 = vpack.c.b16 %v2734, %v2730
        %v2787 = vpack.c.b16 %v2735, %v2731
        %v2788 = vpack.c.b16 %v2736, %v2732
        %v2789 = vpack.c.b16 %v2741, %v2737
        %v2790 = vpack.c.b16 %v2742, %v2738
        %v2791 = vpack.c.b16 %v2743, %v2739
        %v2792 = vpack.c.b16 %v2744, %v2740
        %v2793 = vpack.c.b16 %v2749, %v2745
        %v2794 = vpack.c.b16 %v2750, %v2746
        %v2795 = vpack.c.b16 %v2751, %v2747
        %v2796 = vpack.c.b16 %v2752, %v2748
        %v2797 = vpack.c.b16 %v2757, %v2753
        %v2798 = vpack.c.b16 %v2758, %v2754
        %v2799 = vpack.c.b16 %v2759, %v2755
        %v2800 = vpack.c.b16 %v2760, %v2756
        %v2801 = vpack.c.b16 %v2765, %v2761
        %v2802 = vpack.c.b16 %v2766, %v2762
        %v2803 = vpack.c.b16 %v2767, %v2763
        %v2804 = vpack.c.b16 %v2768, %v2764
        %v2805 = vpack.c.b16 %v2773, %v2769
        %v2806 = vpack.c.b16 %v2774, %v2770
        %v2807 = vpack.c.b16 %v2775, %v2771
        %v2808 = vpack.c.b16 %v2776, %v2772
        %2841 = vmatprep.subr.bf16.mxu0 0
        %2842 = vmatpush1.bf16.msra.mxu0 %v1843
        %2843 = vmatprep.subr.bf16.mxu0 0
        %2844 = vmatpush1.bf16.msra.mxu0 %v1844
        %2845 = vmatprep.subr.bf16.mxu0 0
        %2846 = vmatpush1.bf16.msra.mxu0 %v1845
        %2847 = vmatprep.subr.bf16.mxu0 0
        %2848 = vmatpush1.bf16.msra.mxu0 %v1846
        %2849 = vmatprep.subr.bf16.mxu0 0
        %2850 = vmatpush1.bf16.msra.mxu0 %v1847
        %2851 = vmatprep.subr.bf16.mxu0 0
        %2852 = vmatpush1.bf16.msra.mxu0 %v1848
        %2853 = vmatprep.subr.bf16.mxu0 0
        %2854 = vmatpush1.bf16.msra.mxu0 %v1849
        %2855 = vmatprep.subr.bf16.mxu0 0
        %2856 = vmatpush1.bf16.msra.mxu0 %v1850
        %2857 = vmatprep.subr.bf16.mxu0 0
        %2858 = vmatpush1.bf16.msra.mxu0 %v1851
        %2859 = vmatprep.subr.bf16.mxu0 0
        %2860 = vmatpush1.bf16.msra.mxu0 %v1852
        %2861 = vmatprep.subr.bf16.mxu0 0
        %2862 = vmatpush1.bf16.msra.mxu0 %v1853
        %2863 = vmatprep.subr.bf16.mxu0 0
        %2864 = vmatpush1.bf16.msra.mxu0 %v1854
        %2865 = vmatprep.subr.bf16.mxu0 0
        %2866 = vmatpush1.bf16.msra.mxu0 %v1855
        %2867 = vmatprep.subr.bf16.mxu0 0
        %2868 = vmatpush1.bf16.msra.mxu0 %v1856
        %2869 = vmatprep.subr.bf16.mxu0 0
        %2870 = vmatpush1.bf16.msra.mxu0 %v1857
        %2871 = vmatprep.subr.bf16.mxu0 0
        %2872 = vmatpush1.bf16.msra.mxu0 %v1858
        %2873 = vmatprep.mubr.bf16.mxu0 %v2778
        %2874 = vmatmul.mubr.bf16.gmra.mrb[0].mxu0 %v2777
        %v2875 = vpop.f32.mrb[0].mxu0
        %v2876 = vadd.f32 0.0, %v2875
        %v2877 = vpop.f32.mrb[0].mxu0
        %v2878 = vpop.f32.mrb[0].mxu0
        %v2879 = vadd.f32 0.0, %v2878
        %v2880 = vpop.f32.mrb[0].mxu0
        %2881 = vmatprep.mubr.bf16.mxu0 %v2782
        %2882 = vmatmul.mubr.bf16.gmra.mrb[0].mxu0 %v2781
        %v2883 = vpop.f32.mrb[0].mxu0
        %v2884 = vadd.f32 0.0, %v2883
        %v2885 = vpop.f32.mrb[0].mxu0
        %v2886 = vpop.f32.mrb[0].mxu0
        %v2887 = vadd.f32 0.0, %v2886
        %v2888 = vpop.f32.mrb[0].mxu0
        %2889 = vmatprep.mubr.bf16.mxu0 %v2786
        %2890 = vmatmul.mubr.bf16.gmra.mrb[0].mxu0 %v2785
        %v2891 = vpop.f32.mrb[0].mxu0
        %v2892 = vadd.f32 0.0, %v2891
        %v2893 = vpop.f32.mrb[0].mxu0
        %v2894 = vpop.f32.mrb[0].mxu0
        %v2895 = vadd.f32 0.0, %v2894
        %v2896 = vpop.f32.mrb[0].mxu0
        %2897 = vmatprep.mubr.bf16.mxu0 %v2790
        %2898 = vmatmul.mubr.bf16.gmra.mrb[0].mxu0 %v2789
        %v2899 = vpop.f32.mrb[0].mxu0
        %v2900 = vadd.f32 0.0, %v2899
        %v2901 = vpop.f32.mrb[0].mxu0
        %v2902 = vpop.f32.mrb[0].mxu0
        %v2903 = vadd.f32 0.0, %v2902
        %v2904 = vpop.f32.mrb[0].mxu0
        %2905 = vmatprep.mubr.bf16.mxu0 %v2794
        %2906 = vmatmul.mubr.bf16.gmra.mrb[0].mxu0 %v2793
        %v2907 = vpop.f32.mrb[0].mxu0
        %v2908 = vadd.f32 0.0, %v2907
        %v2909 = vpop.f32.mrb[0].mxu0
        %v2910 = vpop.f32.mrb[0].mxu0
        %v2911 = vadd.f32 0.0, %v2910
        %v2912 = vpop.f32.mrb[0].mxu0
        %2913 = vmatprep.mubr.bf16.mxu0 %v2798
        %2914 = vmatmul.mubr.bf16.gmra.mrb[0].mxu0 %v2797
        %v2915 = vpop.f32.mrb[0].mxu0
        %v2916 = vadd.f32 0.0, %v2915
        %v2917 = vpop.f32.mrb[0].mxu0
        %v2918 = vpop.f32.mrb[0].mxu0
        %v2919 = vadd.f32 0.0, %v2918
        %v2920 = vpop.f32.mrb[0].mxu0
        %2921 = vmatprep.mubr.bf16.mxu0 %v2802
        %2922 = vmatmul.mubr.bf16.gmra.mrb[0].mxu0 %v2801
        %v2923 = vpop.f32.mrb[0].mxu0
        %v2924 = vadd.f32 0.0, %v2923
        %v2925 = vpop.f32.mrb[0].mxu0
        %v2926 = vpop.f32.mrb[0].mxu0
        %v2927 = vadd.f32 0.0, %v2926
        %v2928 = vpop.f32.mrb[0].mxu0
        %2929 = vmatprep.mubr.bf16.mxu0 %v2806
        %2930 = vmatmul.mubr.bf16.gmra.mrb[0].mxu0 %v2805
        %v2931 = vpop.f32.mrb[0].mxu0
        %v2932 = vadd.f32 0.0, %v2931
        %v2933 = vpop.f32.mrb[0].mxu0
        %v2934 = vpop.f32.mrb[0].mxu0
        %v2935 = vadd.f32 0.0, %v2934
        %v2936 = vpop.f32.mrb[0].mxu0
        %2937 = vdwg.mxu0
        %2938 = vmatprep.subr.bf16.mxu0 0
        %2939 = vmatpush1.bf16.msra.mxu0 %v1859
        %2940 = vmatprep.subr.bf16.mxu0 0
        %2941 = vmatpush1.bf16.msra.mxu0 %v1860
        %2942 = vmatprep.subr.bf16.mxu0 0
        %2943 = vmatpush1.bf16.msra.mxu0 %v1861
        %2944 = vmatprep.subr.bf16.mxu0 0
        %2945 = vmatpush1.bf16.msra.mxu0 %v1862
        %2946 = vmatprep.subr.bf16.mxu0 0
        %2947 = vmatpush1.bf16.msra.mxu0 %v1863
        %2948 = vmatprep.subr.bf16.mxu0 0
        %2949 = vmatpush1.bf16.msra.mxu0 %v1864
        %2950 = vmatprep.subr.bf16.mxu0 0
        %2951 = vmatpush1.bf16.msra.mxu0 %v1865
        %2952 = vmatprep.subr.bf16.mxu0 0
        %2953 = vmatpush1.bf16.msra.mxu0 %v1866
        %2954 = vmatprep.subr.bf16.mxu0 0
        %2955 = vmatpush1.bf16.msra.mxu0 %v1867
        %2956 = vmatprep.subr.bf16.mxu0 0
        %2957 = vmatpush1.bf16.msra.mxu0 %v1868
        %2958 = vmatprep.subr.bf16.mxu0 0
        %2959 = vmatpush1.bf16.msra.mxu0 %v1869
        %2960 = vmatprep.subr.bf16.mxu0 0
        %2961 = vmatpush1.bf16.msra.mxu0 %v1870
        %2962 = vmatprep.subr.bf16.mxu0 0
        %2963 = vmatpush1.bf16.msra.mxu0 %v1871
        %2964 = vmatprep.subr.bf16.mxu0 0
        %2965 = vmatpush1.bf16.msra.mxu0 %v1872
        %2966 = vmatprep.subr.bf16.mxu0 0
        %2967 = vmatpush1.bf16.msra.mxu0 %v1873
        %2968 = vmatprep.subr.bf16.mxu0 0
        %2969 = vmatpush1.bf16.msra.mxu0 %v1874
        %2970 = vmatprep.mubr.bf16.mxu0 %v2780
        %2971 = vmatmul.mubr.bf16.gmra.mrb[0].mxu0 %v2779
        %v2972 = vpop.f32.mrb[0].mxu0
        %v2973 = vadd.f32 %v2876, %v2972
        %v2974 = vpop.f32.mrb[0].mxu0
        %v2975 = vpop.f32.mrb[0].mxu0
        %v2976 = vadd.f32 %v2879, %v2975
        %v2977 = vpop.f32.mrb[0].mxu0
        %2978 = vmatprep.mubr.bf16.mxu0 %v2784
        %2979 = vmatmul.mubr.bf16.gmra.mrb[0].mxu0 %v2783
        %v2980 = vpop.f32.mrb[0].mxu0
        %v2981 = vadd.f32 %v2884, %v2980
        %v2982 = vpop.f32.mrb[0].mxu0
        %v2983 = vpop.f32.mrb[0].mxu0
        %v2984 = vadd.f32 %v2887, %v2983
        %v2985 = vpop.f32.mrb[0].mxu0
        %2986 = vmatprep.mubr.bf16.mxu0 %v2788
        %2987 = vmatmul.mubr.bf16.gmra.mrb[0].mxu0 %v2787
        %v2988 = vpop.f32.mrb[0].mxu0
        %v2989 = vadd.f32 %v2892, %v2988
        %v2990 = vpop.f32.mrb[0].mxu0
        %v2991 = vpop.f32.mrb[0].mxu0
        %v2992 = vadd.f32 %v2895, %v2991
        %v2993 = vpop.f32.mrb[0].mxu0
        %2994 = vmatprep.mubr.bf16.mxu0 %v2792
        %2995 = vmatmul.mubr.bf16.gmra.mrb[0].mxu0 %v2791
        %v2996 = vpop.f32.mrb[0].mxu0
        %v2997 = vadd.f32 %v2900, %v2996
        %v2998 = vpop.f32.mrb[0].mxu0
        %v2999 = vpop.f32.mrb[0].mxu0
        %v3000 = vadd.f32 %v2903, %v2999
        %v3001 = vpop.f32.mrb[0].mxu0
        %3002 = vmatprep.mubr.bf16.mxu0 %v2796
        %3003 = vmatmul.mubr.bf16.gmra.mrb[0].mxu0 %v2795
        %v3004 = vpop.f32.mrb[0].mxu0
        %v3005 = vadd.f32 %v2908, %v3004
        %v3006 = vpop.f32.mrb[0].mxu0
        %v3007 = vpop.f32.mrb[0].mxu0
        %v3008 = vadd.f32 %v2911, %v3007
        %v3009 = vpop.f32.mrb[0].mxu0
        %3010 = vmatprep.mubr.bf16.mxu0 %v2800
        %3011 = vmatmul.mubr.bf16.gmra.mrb[0].mxu0 %v2799
        %v3012 = vpop.f32.mrb[0].mxu0
        %v3013 = vadd.f32 %v2916, %v3012
        %v3014 = vpop.f32.mrb[0].mxu0
        %v3015 = vpop.f32.mrb[0].mxu0
        %v3016 = vadd.f32 %v2919, %v3015
        %v3017 = vpop.f32.mrb[0].mxu0
        %3018 = vmatprep.mubr.bf16.mxu0 %v2804
        %3019 = vmatmul.mubr.bf16.gmra.mrb[0].mxu0 %v2803
        %v3020 = vpop.f32.mrb[0].mxu0
        %v3021 = vadd.f32 %v2924, %v3020
        %v3022 = vpop.f32.mrb[0].mxu0
        %v3023 = vpop.f32.mrb[0].mxu0
        %v3024 = vadd.f32 %v2927, %v3023
        %v3025 = vpop.f32.mrb[0].mxu0
        %3026 = vmatprep.mubr.bf16.mxu0 %v2808
        %3027 = vmatmul.mubr.bf16.gmra.mrb[0].mxu0 %v2807
        %v3028 = vpop.f32.mrb[0].mxu0
        %v3029 = vadd.f32 %v2932, %v3028
        %v3030 = vpop.f32.mrb[0].mxu0
        %v3031 = vpop.f32.mrb[0].mxu0
        %v3032 = vadd.f32 %v2935, %v3031
        %v3033 = vpop.f32.mrb[0].mxu0
        %3034 = vdwg.mxu0
        %v3035 = vadd.f32 %v2586, %v2973
        %v3036 = vadd.f32 %v2589, %v2976
        %v3037 = vadd.f32 %v2594, %v2981
        %v3038 = vadd.f32 %v2597, %v2984
        %v3039 = vadd.f32 %v2602, %v2989
        %v3040 = vadd.f32 %v2605, %v2992
        %v3041 = vadd.f32 %v2610, %v2997
        %v3042 = vadd.f32 %v2613, %v3000
        %v3043 = vadd.f32 %v2618, %v3005
        %v3044 = vadd.f32 %v2621, %v3008
        %v3045 = vadd.f32 %v2626, %v3013
        %v3046 = vadd.f32 %v2629, %v3016
        %v3047 = vadd.f32 %v2634, %v3021
        %v3048 = vadd.f32 %v2637, %v3024
        %v3049 = vadd.f32 %v2642, %v3029
        %v3050 = vadd.f32 %v2645, %v3032
        %3051 = vst [vmem:[%s227] sm:$0xff] %v3035
        %3052 = vst [vmem:[%s227 + $0x8] sm:$0xff] %v3036
        %3053 = vst [vmem:[%s227 + $0x10] sm:$0xff] %v3037
        %3054 = vst [vmem:[%s227 + $0x18] sm:$0xff] %v3038
        %3055 = vst [vmem:[%s227 + $0x20] sm:$0xff] %v3039
        %3056 = vst [vmem:[%s227 + $0x28] sm:$0xff] %v3040
        %3057 = vst [vmem:[%s227 + $0x30] sm:$0xff] %v3041
        %3058 = vst [vmem:[%s227 + $0x38] sm:$0xff] %v3042
        %3059 = vst [vmem:[%s227 + $0x40] sm:$0xff] %v3043
        %3060 = vst [vmem:[%s227 + $0x48] sm:$0xff] %v3044
        %3061 = vst [vmem:[%s227 + $0x50] sm:$0xff] %v3045
        %3062 = vst [vmem:[%s227 + $0x58] sm:$0xff] %v3046
        %3063 = vst [vmem:[%s227 + $0x60] sm:$0xff] %v3047
        %3064 = vst [vmem:[%s227 + $0x68] sm:$0xff] %v3048
        %3065 = vst [vmem:[%s227 + $0x70] sm:$0xff] %v3049
        %3066 = vst [vmem:[%s227 + $0x78] sm:$0xff] %v3050
        %s3067 = sand.u32 %s132, 1
        %s3068 = scalar_lea.sflag [#allocation4], %s3067
        %s3069 = sand.u32 %s132, 1
        %s3070 = smul.addr %s3069, 128
        %s3071 = scalar_lea.vmem [#allocation5], %s3070
        // Predicated region
        $region41: #{tpu_custom_call.1} parent=35 // pred_check
          %p3072 = pneg %p142
        $region42: #{tpu_custom_call.1} parent=35 // pred_check_branch
          %3074 = sbr.rel (%p3072) target = $region44
        $region43: #{tpu_custom_call.1} parent=35 // pred_region
          %s3076 = ssub.s32 2048, 2048
          %3077 = vsyncadd %s3068, %s3076
          %s3078 = smul.addr %s23, 16
          %s3079 = sadd.s32 %s24, %s3078
          %s3080 = smul.addr %s3079, 128
          %s3081 = scalar_lea.hbm %s4, %s3080
          %s3082 = sshll.u32 %s3071, 4
          %s3083 = int_to_ptr.vmem [resolvable:$true] %s3082
          %3088 = dma.vmem_to_hbm [thread:$0]  %s3083, 2048, %s3081, %s3068, 128, 128, 8
        $region44: #{tpu_custom_call.1} parent=35 // pred_fallthru
          _
      $region36: #{tpu_custom_call.1} parent=5 // pred_fallthru
        _
      %p3089 = scmp.le.s32.totalorder 2, %s14
      // Predicated region
      $region45: #{tpu_custom_call.1} parent=5 // pred_check
        %p3090 = pneg %p3089
      $region46: #{tpu_custom_call.1} parent=5 // pred_check_branch
        %3092 = sbr.rel (%p3090) target = $region48
      $region47: #{tpu_custom_call.1} parent=5 // pred_region
        %s3093 = ssub.s32 %s14, 2
        // Predicated region
        $region49: #{tpu_custom_call.1} parent=47 // pred_check
          %p3094 = pneg %p148
        $region50: #{tpu_custom_call.1} parent=47 // pred_check_branch
          %3096 = sbr.rel (%p3094) target = $region52
        $region51: #{tpu_custom_call.1} parent=47 // pred_region
          %s3097 = sand.u32 %s133, 1
          %s3098 = scalar_lea.sflag [#allocation4], %s3097
          %s3099 = sand.u32 %s133, 1
          %s3100 = smul.addr %s3099, 128
          %s3101 = scalar_lea.vmem [#allocation5], %s3100
          %3102 = dma.done %s3098, 2048
        $region52: #{tpu_custom_call.1} parent=47 // pred_fallthru
          _
      $region48: #{tpu_custom_call.1} parent=5 // pred_fallthru
        _
    $region6: #{tpu_custom_call.1} parent=1 // loop_footer
      %s18 = sadd.s32 1, %s14
    $region7: #{tpu_custom_call.1} parent=1 // loop_footer_branch
      %13 = sbr.rel target = $region3
    $region8: #{tpu_custom_call.1} parent=1 // loop_exit
      _
    %3103 = vsyncpa [#allocation3], 1
    %s3104 = scalar_lea.sflag [#allocation3], 1
    %3105 = vsyncpa %s3104, 1
    %3106 = vsyncpa [#allocation4], 1
    %s3107 = scalar_lea.sflag [#allocation4], 1
    %3108 = vsyncpa %s3107, 1

</llo_original>
